<compile_context>
chip_gen: v5e
topology: v5e:2x2
jax: 0.10.0
libtpu: 0.0.40
codegen_flags: <defaults>
</compile_context>

<pallas_src>
import functools
import math

import jax
import jax.numpy as jnp
from jax import lax
from jax.experimental import pallas as pl
from jax.experimental.pallas import tpu as pltpu


# ----------------------------------------------------------------------------
# Fused decoder kernel (one grid step == one batch element, all layers)
# ----------------------------------------------------------------------------

def _decoder_kernel(
    # data (per-batch blocks / resident mask)
    x_ref, mem_ref, srcm_ref, tgtm_ref,
    # self-attention params (fused QKV)
    sa_wqkv, sa_bqkv, sa_wo, sa_bo,
    # src-attention params (fused KV)
    ca_wq, ca_bq, ca_wkv, ca_bkv, ca_wo, ca_bo,
    # feed-forward params
    ff_w1, ff_b1, ff_w2, ff_b2,
    # per-layer layernorm params (shared across clones)
    ln1_g, ln1_b, ln2_g, ln2_b, ln3_g, ln3_b,
    # final layernorm params
    fin_g, fin_b,
    # output
    o_ref,
    *, n_layers, n_heads, eps, use_bf16):
    x = x_ref[0]                # (S, D)   resident in VMEM for the whole kernel
    mem = mem_ref[0]            # (Sm, D)
    src_mask = srcm_ref[0]      # (1, Sm)  float32, 0 == masked (key padding mask)
    tgt_mask = tgtm_ref[...]    # (S, S)   float32, 0 == masked (causal mask)

    S, D = x.shape
    dk = D // n_heads
    scale = 1.0 / math.sqrt(dk)
    cdt = jnp.bfloat16 if use_bf16 else jnp.float32   # MXU operand dtype

    # ---- hoist ALL parameter reads / broadcasts out of the layer loop ------
    # (JAX does not CSE broadcast_in_dim; re-reading per layer is pure filler.)
    w_qkv = sa_wqkv[...]; b_qkv = sa_bqkv[...]
    w_sao = sa_wo[...];   b_sao = sa_bo[...]
    w_caq = ca_wq[...];   b_caq = ca_bq[...]
    w_cakv = ca_wkv[...]; b_cakv = ca_bkv[...]
    w_cao = ca_wo[...];   b_cao = ca_bo[...]
    w1 = ff_w1[...]; bf1 = ff_b1[...]
    w2 = ff_w2[...]; bf2 = ff_b2[...]
    g1 = ln1_g[...]; be1 = ln1_b[...]
    g2 = ln2_g[...]; be2 = ln2_b[...]
    g3 = ln3_g[...]; be3 = ln3_b[...]
    gf = fin_g[...]; bef = fin_b[...]

    tgt_masked = (tgt_mask == 0.0)     # (S, S)  hoisted compare
    src_masked = (src_mask == 0.0)     # (1, Sm)

    def mm(a, w):
        # MXU matmul; operands optionally bf16 (weights already bf16 from host),
        # accumulation always f32.
        return jnp.dot(a.astype(cdt), w, preferred_element_type=jnp.float32)

    def layer_norm(v, g, b):
        # Matches PyTorch LayerNorm reference: mean over last dim, *unbiased*
        # std (torch.std default), eps added to the std, exact divide.
        mean = jnp.mean(v, axis=-1, keepdims=True)
        vm = v - mean
        var_unbiased = jnp.sum(vm * vm, axis=-1, keepdims=True) / (v.shape[-1] - 1)
        std = jnp.sqrt(var_unbiased)
        return g * vm / (std + eps) + b

    def attend(q, k, v, masked):
        # q: (Sq, D), k/v: (Sk, D), masked broadcastable to (Sq, Sk).
        # One reshape to a head-batched layout, one batched dot_general for
        # scores and one for context -- no per-head slices, no concat.
        Sq, Sk = q.shape[0], k.shape[0]
        q3 = q.reshape(Sq, n_heads, dk).astype(cdt)
        k3 = k.reshape(Sk, n_heads, dk).astype(cdt)
        v3 = v.reshape(Sk, n_heads, dk).astype(cdt)
        s = jnp.einsum('qhd,khd->hqk', q3, k3,
                       preferred_element_type=jnp.float32) * scale   # (h,Sq,Sk)
        s = jnp.where(masked[None], -1e9, s)
        s = s - jnp.max(s, axis=-1, keepdims=True)
        p = jnp.exp(s)
        p = p * pl.reciprocal(jnp.sum(p, axis=-1, keepdims=True), approx=True)
        ctx = jnp.einsum('hqk,khd->qhd', p.astype(cdt), v3,
                         preferred_element_type=jnp.float32)          # (Sq,h,dk)
        return ctx.reshape(Sq, D)                                     # lane-dense

    # Encoder-memory K/V projection is identical for every layer because
    # clones() deep-copies the layer (identical weights) -> compute it once.
    mem_kv = mm(mem, w_cakv) + b_cakv        # (Sm, 2D)
    mk = mem_kv[:, :D]
    mv = mem_kv[:, D:]

    def layer_body(_, xc):
        # --- sublayer 1: masked self-attention (pre-norm residual) ---
        xn = layer_norm(xc, g1, be1)
        qkv = mm(xn, w_qkv) + b_qkv                       # (S, 3D), one MXU call
        q, k, v = qkv[:, :D], qkv[:, D:2 * D], qkv[:, 2 * D:]
        a = attend(q, k, v, tgt_masked)
        xc = xc + mm(a, w_sao) + b_sao

        # --- sublayer 2: source attention over encoder memory ---
        xn = layer_norm(xc, g2, be2)
        q = mm(xn, w_caq) + b_caq
        a = attend(q, mk, mv, src_masked)
        xc = xc + mm(a, w_cao) + b_cao

        # --- sublayer 3: position-wise feed-forward ---
        xn = layer_norm(xc, g3, be3)
        hdn = jnp.maximum(mm(xn, w1) + bf1, 0.0)
        xc = xc + mm(hdn, w2) + bf2
        return xc

    x = lax.fori_loop(0, n_layers, layer_body, x)

    # Final LayerNorm fused into the same kernel.
    o_ref[0] = layer_norm(x, gf, bef).astype(o_ref.dtype)


# ----------------------------------------------------------------------------
# Host wrapper: one pallas_call for the whole decoder forward
# ----------------------------------------------------------------------------

def decoder_forward(params, x, memory, src_mask, tgt_mask, n_layers, n_heads,
                    eps=1e-6, use_bf16=False):
    B, S, D = x.shape
    Sm = memory.shape[1]
    lp = params["layer"]
    sa = lp["self_attn"]
    ca = lp["src_attn"]
    d_ff = lp["ff_w1"].shape[1]

    # Masks: per-batch key padding mask (B,1,Sm); batch-invariant causal (S,S).
    # No (B,S,S)/(B,S,Sm) materialization in HBM.
    src_m = jnp.broadcast_to(jnp.asarray(src_mask, jnp.float32), (B, 1, Sm))
    # TODO(synk): per-batch tgt masks would need a batch-indexed BlockSpec; the
    #             reference harness uses one causal mask shared by all batches.
    tgt_m = jnp.asarray(tgt_mask, jnp.float32).reshape(-1, S, S)[0]

    wdt = jnp.bfloat16 if use_bf16 else jnp.float32

    def w(a):  # weight matrices: bf16 on host when requested (halves DMA/VMEM)
        return a.astype(wdt)

    def b(a):  # biases / LN params: keep f32, add leading broadcast dim
        return a[None, :].astype(jnp.float32)

    # Fuse Q/K/V projection weights -> one matmul; fuse src-attn K/V.
    sa_wqkv = w(jnp.concatenate([sa["wq"], sa["wk"], sa["wv"]], axis=1))  # (D,3D)
    sa_bqkv = jnp.concatenate([sa["bq"], sa["bk"], sa["bv"]])[None, :]    # (1,3D)
    ca_wkv = w(jnp.concatenate([ca["wk"], ca["wv"]], axis=1))             # (D,2D)
    ca_bkv = jnp.concatenate([ca["bk"], ca["bv"]])[None, :]               # (1,2D)

    param_arrays = [
        sa_wqkv, sa_bqkv, w(sa["wo"]), b(sa["bo"]),
        w(ca["wq"]), b(ca["bq"]), ca_wkv, ca_bkv, w(ca["wo"]), b(ca["bo"]),
        w(lp["ff_w1"]), b(lp["ff_b1"]), w(lp["ff_w2"]), b(lp["ff_b2"]),
        b(lp["ln1_g"]), b(lp["ln1_b"]),
        b(lp["ln2_g"]), b(lp["ln2_b"]),
        b(lp["ln3_g"]), b(lp["ln3_b"]),
        b(params["norm_g"]), b(params["norm_b"]),
    ]

    def batch_spec(shape):
        nd = len(shape)
        return pl.BlockSpec((1,) + tuple(shape[1:]),
                            lambda i, nd=nd: (i,) + (0,) * (nd - 1))

    def resident_spec(arr):
        # Full-array block, constant index_map, single-buffered: DMA'd once,
        # VMEM-resident across all grid steps with no duplicate buffer.
        nd = arr.ndim
        return pl.BlockSpec(arr.shape, lambda i, nd=nd: (0,) * nd,
                            pipeline_mode=pl.Buffered(1))

    in_specs = [batch_spec(x.shape), batch_spec(memory.shape),
                batch_spec(src_m.shape), resident_spec(tgt_m)]
    in_specs += [resident_spec(a) for a in param_arrays]

    # Explicit VMEM budget: single-buffered weights + double-buffered per-batch
    # blocks + in-kernel intermediate headroom.
    nbytes = lambda a: int(a.size) * a.dtype.itemsize
    weight_bytes = sum(nbytes(a) for a in param_arrays) + nbytes(tgt_m)
    block_bytes = 2 * 4 * (S * D + Sm * D + Sm + S * D)           # x, mem, mask, out
    act_bytes = 4 * (3 * n_heads * S * max(S, Sm)                 # scores / probs
                     + 4 * S * D + S * 3 * D + S * d_ff + 2 * Sm * D)
    vmem_limit = int(weight_bytes + block_bytes + act_bytes) + (4 << 20)
    vmem_limit = max(min(vmem_limit, 100 << 20), 16 << 20)

    kernel = functools.partial(_decoder_kernel, n_layers=n_layers,
                               n_heads=n_heads, eps=eps, use_bf16=use_bf16)

    return pl.pallas_call(
        kernel,
        out_shape=jax.ShapeDtypeStruct((B, S, D), jnp.float32),
        grid=(B,),
        in_specs=in_specs,
        out_specs=pl.BlockSpec((1, S, D), lambda i: (i, 0, 0)),
        compiler_params=pltpu.CompilerParams(
            dimension_semantics=("parallel",),
            vmem_limit_bytes=vmem_limit),
    )(x, memory, src_m, tgt_m, *param_arrays)


# ----------------------------------------------------------------------------
# Deterministic parameter init (clones() -> identical params for every layer)
# ----------------------------------------------------------------------------

def init_params(key, d_model, d_ff):
    def lin(k, din, dout):
        kw, _ = jax.random.split(k)
        wm = jax.random.normal(kw, (din, dout), jnp.float32) * (1.0 / math.sqrt(din))
        bv = jnp.zeros((dout,), jnp.float32)
        return wm, bv

    keys = jax.random.split(key, 16)

    def attn_params(ks):
        wq, bq = lin(ks[0], d_model, d_model)
        wk, bk = lin(ks[1], d_model, d_model)
        wv, bv = lin(ks[2], d_model, d_model)
        wo, bo = lin(ks[3], d_model, d_model)
        return dict(wq=wq, bq=bq, wk=wk, bk=bk, wv=wv, bv=bv, wo=wo, bo=bo)

    ff_w1, ff_b1 = lin(keys[8], d_model, d_ff)
    ff_w2, ff_b2 = lin(keys[9], d_ff, d_model)

    layer = dict(
        self_attn=attn_params(keys[0:4]),
        src_attn=attn_params(keys[4:8]),
        ff_w1=ff_w1, ff_b1=ff_b1, ff_w2=ff_w2, ff_b2=ff_b2,
        ln1_g=jnp.ones((d_model,), jnp.float32), ln1_b=jnp.zeros((d_model,), jnp.float32),
        ln2_g=jnp.ones((d_model,), jnp.float32), ln2_b=jnp.zeros((d_model,), jnp.float32),
        ln3_g=jnp.ones((d_model,), jnp.float32), ln3_b=jnp.zeros((d_model,), jnp.float32),
    )
    return dict(
        layer=layer,
        norm_g=jnp.ones((d_model,), jnp.float32),
        norm_b=jnp.zeros((d_model,), jnp.float32),
    )


# ----------------------------------------------------------------------------
# Main
# ----------------------------------------------------------------------------

if __name__ == "__main__":
    B, S, Sm = 2, 8, 8
    d_model, h, d_ff, N = 32, 4, 64, 2

    key = jax.random.PRNGKey(0)
    kx, km, kp = jax.random.split(key, 3)

    x = jax.random.normal(kx, (B, S, d_model), jnp.float32)
    memory = jax.random.normal(km, (B, Sm, d_model), jnp.float32)
    src_mask = jnp.ones((B, 1, Sm), jnp.float32)                      # attend to all memory
    tgt_mask = jnp.tril(jnp.ones((S, S), jnp.float32))[None, :, :]    # causal mask

    params = init_params(kp, d_model, d_ff)

    # use_bf16=False keeps exact f32 matmul semantics for this smoke test;
    # set True on v5e/v6e/v7x deployments for bf16 MXU operands + halved
    # weight DMA/VMEM (accumulation stays f32).
    out = decoder_forward(params, x, memory, src_mask, tgt_mask, N, h,
                          use_bf16=False)
    out = jax.block_until_ready(out)

    assert out.shape == (B, S, d_model)
    assert jnp.all(jnp.isfinite(out))
    print("KERNEL_OK")
</pallas_src>

<mosaic_0001>
module attributes {stable_mosaic.version = 11 : i64} {
  func.func @_decoder_kernel(%arg0: i32, %arg1: memref<1x8x32xf32, #tpu.memory_space<vmem>>, %arg2: memref<1x8x32xf32, #tpu.memory_space<vmem>>, %arg3: memref<1x1x8xf32, #tpu.memory_space<vmem>>, %arg4: memref<8x8xf32, #tpu.memory_space<vmem>>, %arg5: memref<32x96xf32, #tpu.memory_space<vmem>>, %arg6: memref<1x96xf32, #tpu.memory_space<vmem>>, %arg7: memref<32x32xf32, #tpu.memory_space<vmem>>, %arg8: memref<1x32xf32, #tpu.memory_space<vmem>>, %arg9: memref<32x32xf32, #tpu.memory_space<vmem>>, %arg10: memref<1x32xf32, #tpu.memory_space<vmem>>, %arg11: memref<32x64xf32, #tpu.memory_space<vmem>>, %arg12: memref<1x64xf32, #tpu.memory_space<vmem>>, %arg13: memref<32x32xf32, #tpu.memory_space<vmem>>, %arg14: memref<1x32xf32, #tpu.memory_space<vmem>>, %arg15: memref<32x64xf32, #tpu.memory_space<vmem>>, %arg16: memref<1x64xf32, #tpu.memory_space<vmem>>, %arg17: memref<64x32xf32, #tpu.memory_space<vmem>>, %arg18: memref<1x32xf32, #tpu.memory_space<vmem>>, %arg19: memref<1x32xf32, #tpu.memory_space<vmem>>, %arg20: memref<1x32xf32, #tpu.memory_space<vmem>>, %arg21: memref<1x32xf32, #tpu.memory_space<vmem>>, %arg22: memref<1x32xf32, #tpu.memory_space<vmem>>, %arg23: memref<1x32xf32, #tpu.memory_space<vmem>>, %arg24: memref<1x32xf32, #tpu.memory_space<vmem>>, %arg25: memref<1x32xf32, #tpu.memory_space<vmem>>, %arg26: memref<1x32xf32, #tpu.memory_space<vmem>>, %arg27: memref<1x8x32xf32, #tpu.memory_space<vmem>>) attributes {dimension_semantics = [#tpu.dimension_semantics<parallel>], iteration_bounds = array<i64: 2>, scalar_prefetch = 0 : i64, scratch_operands = 0 : i64, tpu.core_type = #tpu.core_type<tc>, window_params = [{transform_indices = @transform_0, window_bounds = array<i64: 1, 8, 32>}, {transform_indices = @transform_1, window_bounds = array<i64: 1, 8, 32>}, {transform_indices = @transform_2, window_bounds = array<i64: 1, 1, 8>}, {pipeline_mode = #tpu.pipeline_mode<synchronous>, transform_indices = @transform_3, window_bounds = array<i64: 8, 8>}, {pipeline_mode = #tpu.pipeline_mode<synchronous>, transform_indices = @transform_4, window_bounds = array<i64: 32, 96>}, {pipeline_mode = #tpu.pipeline_mode<synchronous>, transform_indices = @transform_5, window_bounds = array<i64: 1, 96>}, {pipeline_mode = #tpu.pipeline_mode<synchronous>, transform_indices = @transform_6, window_bounds = array<i64: 32, 32>}, {pipeline_mode = #tpu.pipeline_mode<synchronous>, transform_indices = @transform_7, window_bounds = array<i64: 1, 32>}, {pipeline_mode = #tpu.pipeline_mode<synchronous>, transform_indices = @transform_8, window_bounds = array<i64: 32, 32>}, {pipeline_mode = #tpu.pipeline_mode<synchronous>, transform_indices = @transform_9, window_bounds = array<i64: 1, 32>}, {pipeline_mode = #tpu.pipeline_mode<synchronous>, transform_indices = @transform_10, window_bounds = array<i64: 32, 64>}, {pipeline_mode = #tpu.pipeline_mode<synchronous>, transform_indices = @transform_11, window_bounds = array<i64: 1, 64>}, {pipeline_mode = #tpu.pipeline_mode<synchronous>, transform_indices = @transform_12, window_bounds = array<i64: 32, 32>}, {pipeline_mode = #tpu.pipeline_mode<synchronous>, transform_indices = @transform_13, window_bounds = array<i64: 1, 32>}, {pipeline_mode = #tpu.pipeline_mode<synchronous>, transform_indices = @transform_14, window_bounds = array<i64: 32, 64>}, {pipeline_mode = #tpu.pipeline_mode<synchronous>, transform_indices = @transform_15, window_bounds = array<i64: 1, 64>}, {pipeline_mode = #tpu.pipeline_mode<synchronous>, transform_indices = @transform_16, window_bounds = array<i64: 64, 32>}, {pipeline_mode = #tpu.pipeline_mode<synchronous>, transform_indices = @transform_17, window_bounds = array<i64: 1, 32>}, {pipeline_mode = #tpu.pipeline_mode<synchronous>, transform_indices = @transform_18, window_bounds = array<i64: 1, 32>}, {pipeline_mode = #tpu.pipeline_mode<synchronous>, transform_indices = @transform_19, window_bounds = array<i64: 1, 32>}, {pipeline_mode = #tpu.pipeline_mode<synchronous>, transform_indices = @transform_20, window_bounds = array<i64: 1, 32>}, {pipeline_mode = #tpu.pipeline_mode<synchronous>, transform_indices = @transform_21, window_bounds = array<i64: 1, 32>}, {pipeline_mode = #tpu.pipeline_mode<synchronous>, transform_indices = @transform_22, window_bounds = array<i64: 1, 32>}, {pipeline_mode = #tpu.pipeline_mode<synchronous>, transform_indices = @transform_23, window_bounds = array<i64: 1, 32>}, {pipeline_mode = #tpu.pipeline_mode<synchronous>, transform_indices = @transform_24, window_bounds = array<i64: 1, 32>}, {pipeline_mode = #tpu.pipeline_mode<synchronous>, transform_indices = @transform_25, window_bounds = array<i64: 1, 32>}, {transform_indices = @transform_26, window_bounds = array<i64: 1, 8, 32>}]} {
    %c0 = arith.constant 0 : index
    %c0_0 = arith.constant 0 : index
    %c0_1 = arith.constant 0 : index
    %0 = vector.load %arg1[%c0, %c0_0, %c0_1] : memref<1x8x32xf32, #tpu.memory_space<vmem>>, vector<1x8x32xf32>
    %1 = vector.shape_cast %0 : vector<1x8x32xf32> to vector<8x32xf32>
    %c0_2 = arith.constant 0 : index
    %c0_3 = arith.constant 0 : index
    %c0_4 = arith.constant 0 : index
    %2 = vector.load %arg2[%c0_2, %c0_3, %c0_4] : memref<1x8x32xf32, #tpu.memory_space<vmem>>, vector<1x8x32xf32>
    %3 = vector.shape_cast %2 : vector<1x8x32xf32> to vector<8x32xf32>
    %c0_5 = arith.constant 0 : index
    %c0_6 = arith.constant 0 : index
    %c0_7 = arith.constant 0 : index
    %4 = vector.load %arg3[%c0_5, %c0_6, %c0_7] : memref<1x1x8xf32, #tpu.memory_space<vmem>>, vector<1x1x8xf32>
    %5 = vector.shape_cast %4 : vector<1x1x8xf32> to vector<1x8xf32>
    %c0_8 = arith.constant 0 : index
    %c0_9 = arith.constant 0 : index
    %6 = vector.load %arg4[%c0_8, %c0_9] : memref<8x8xf32, #tpu.memory_space<vmem>>, vector<8x8xf32>
    %c0_10 = arith.constant 0 : index
    %c0_11 = arith.constant 0 : index
    %7 = vector.load %arg5[%c0_10, %c0_11] : memref<32x96xf32, #tpu.memory_space<vmem>>, vector<32x96xf32>
    %c0_12 = arith.constant 0 : index
    %c0_13 = arith.constant 0 : index
    %8 = vector.load %arg6[%c0_12, %c0_13] : memref<1x96xf32, #tpu.memory_space<vmem>>, vector<1x96xf32>
    %c0_14 = arith.constant 0 : index
    %c0_15 = arith.constant 0 : index
    %9 = vector.load %arg7[%c0_14, %c0_15] : memref<32x32xf32, #tpu.memory_space<vmem>>, vector<32x32xf32>
    %c0_16 = arith.constant 0 : index
    %c0_17 = arith.constant 0 : index
    %10 = vector.load %arg8[%c0_16, %c0_17] : memref<1x32xf32, #tpu.memory_space<vmem>>, vector<1x32xf32>
    %c0_18 = arith.constant 0 : index
    %c0_19 = arith.constant 0 : index
    %11 = vector.load %arg9[%c0_18, %c0_19] : memref<32x32xf32, #tpu.memory_space<vmem>>, vector<32x32xf32>
    %c0_20 = arith.constant 0 : index
    %c0_21 = arith.constant 0 : index
    %12 = vector.load %arg10[%c0_20, %c0_21] : memref<1x32xf32, #tpu.memory_space<vmem>>, vector<1x32xf32>
    %c0_22 = arith.constant 0 : index
    %c0_23 = arith.constant 0 : index
    %13 = vector.load %arg11[%c0_22, %c0_23] : memref<32x64xf32, #tpu.memory_space<vmem>>, vector<32x64xf32>
    %c0_24 = arith.constant 0 : index
    %c0_25 = arith.constant 0 : index
    %14 = vector.load %arg12[%c0_24, %c0_25] : memref<1x64xf32, #tpu.memory_space<vmem>>, vector<1x64xf32>
    %c0_26 = arith.constant 0 : index
    %c0_27 = arith.constant 0 : index
    %15 = vector.load %arg13[%c0_26, %c0_27] : memref<32x32xf32, #tpu.memory_space<vmem>>, vector<32x32xf32>
    %c0_28 = arith.constant 0 : index
    %c0_29 = arith.constant 0 : index
    %16 = vector.load %arg14[%c0_28, %c0_29] : memref<1x32xf32, #tpu.memory_space<vmem>>, vector<1x32xf32>
    %c0_30 = arith.constant 0 : index
    %c0_31 = arith.constant 0 : index
    %17 = vector.load %arg15[%c0_30, %c0_31] : memref<32x64xf32, #tpu.memory_space<vmem>>, vector<32x64xf32>
    %c0_32 = arith.constant 0 : index
    %c0_33 = arith.constant 0 : index
    %18 = vector.load %arg16[%c0_32, %c0_33] : memref<1x64xf32, #tpu.memory_space<vmem>>, vector<1x64xf32>
    %c0_34 = arith.constant 0 : index
    %c0_35 = arith.constant 0 : index
    %19 = vector.load %arg17[%c0_34, %c0_35] : memref<64x32xf32, #tpu.memory_space<vmem>>, vector<64x32xf32>
    %c0_36 = arith.constant 0 : index
    %c0_37 = arith.constant 0 : index
    %20 = vector.load %arg18[%c0_36, %c0_37] : memref<1x32xf32, #tpu.memory_space<vmem>>, vector<1x32xf32>
    %c0_38 = arith.constant 0 : index
    %c0_39 = arith.constant 0 : index
    %21 = vector.load %arg19[%c0_38, %c0_39] : memref<1x32xf32, #tpu.memory_space<vmem>>, vector<1x32xf32>
    %c0_40 = arith.constant 0 : index
    %c0_41 = arith.constant 0 : index
    %22 = vector.load %arg20[%c0_40, %c0_41] : memref<1x32xf32, #tpu.memory_space<vmem>>, vector<1x32xf32>
    %c0_42 = arith.constant 0 : index
    %c0_43 = arith.constant 0 : index
    %23 = vector.load %arg21[%c0_42, %c0_43] : memref<1x32xf32, #tpu.memory_space<vmem>>, vector<1x32xf32>
    %c0_44 = arith.constant 0 : index
    %c0_45 = arith.constant 0 : index
    %24 = vector.load %arg22[%c0_44, %c0_45] : memref<1x32xf32, #tpu.memory_space<vmem>>, vector<1x32xf32>
    %c0_46 = arith.constant 0 : index
    %c0_47 = arith.constant 0 : index
    %25 = vector.load %arg23[%c0_46, %c0_47] : memref<1x32xf32, #tpu.memory_space<vmem>>, vector<1x32xf32>
    %c0_48 = arith.constant 0 : index
    %c0_49 = arith.constant 0 : index
    %26 = vector.load %arg24[%c0_48, %c0_49] : memref<1x32xf32, #tpu.memory_space<vmem>>, vector<1x32xf32>
    %c0_50 = arith.constant 0 : index
    %c0_51 = arith.constant 0 : index
    %27 = vector.load %arg25[%c0_50, %c0_51] : memref<1x32xf32, #tpu.memory_space<vmem>>, vector<1x32xf32>
    %c0_52 = arith.constant 0 : index
    %c0_53 = arith.constant 0 : index
    %28 = vector.load %arg26[%c0_52, %c0_53] : memref<1x32xf32, #tpu.memory_space<vmem>>, vector<1x32xf32>
    %cst = arith.constant 0.000000e+00 : f32
    %29 = vector.broadcast %cst : f32 to vector<8x8xf32>
    %30 = arith.cmpf oeq, %6, %29 : vector<8x8xf32>
    %cst_54 = arith.constant 0.000000e+00 : f32
    %31 = vector.broadcast %cst_54 : f32 to vector<1x8xf32>
    %32 = arith.cmpf oeq, %5, %31 : vector<1x8xf32>
    %cst_55 = arith.constant dense<0.000000e+00> : vector<8x64xf32>
    %33 = tpu.matmul %3, %13, %cst_55 {dimension_numbers = #tpu.dot_dimension_numbers<[1], [0], [0], [1], [0, 0, 1, 1], [], []>} : vector<8x32xf32>, vector<32x64xf32>, vector<8x64xf32> -> vector<8x64xf32>
    %34 = vector.broadcast %14 : vector<1x64xf32> to vector<8x64xf32>
    %35 = arith.addf %33, %34 : vector<8x64xf32>
    %36 = vector.extract_strided_slice %35 {offsets = [0, 0], sizes = [8, 32], strides = [1, 1]} : vector<8x64xf32> to vector<8x32xf32>
    %37 = vector.extract_strided_slice %35 {offsets = [0, 32], sizes = [8, 32], strides = [1, 1]} : vector<8x64xf32> to vector<8x32xf32>
    %c0_i32 = arith.constant 0 : i32
    %c2_i32 = arith.constant 2 : i32
    %38 = arith.addi %c0_i32, %c2_i32 : i32
    %c1_i32 = arith.constant 1 : i32
    %39 = scf.for %arg28 = %c0_i32 to %38 step %c1_i32 iter_args(%arg29 = %1) -> (vector<8x32xf32>)  : i32 {
      %cst_64 = arith.constant dense<0.000000e+00> : vector<8xf32>
      %63 = vector.multi_reduction <add>, %arg29, %cst_64 [1] : vector<8x32xf32> to vector<8xf32>
      %64 = vector.shape_cast %63 : vector<8xf32> to vector<8x1xf32>
      %cst_65 = arith.constant 3.200000e+01 : f32
      %65 = vector.broadcast %cst_65 : f32 to vector<8x1xf32>
      %66 = arith.divf %64, %65 : vector<8x1xf32>
      %67 = vector.broadcast %66 : vector<8x1xf32> to vector<8x32xf32>
      %68 = arith.subf %arg29, %67 : vector<8x32xf32>
      %69 = arith.mulf %68, %68 : vector<8x32xf32>
      %cst_66 = arith.constant dense<0.000000e+00> : vector<8xf32>
      %70 = vector.multi_reduction <add>, %69, %cst_66 [1] : vector<8x32xf32> to vector<8xf32>
      %71 = vector.shape_cast %70 : vector<8xf32> to vector<8x1xf32>
      %cst_67 = arith.constant 3.100000e+01 : f32
      %72 = vector.broadcast %cst_67 : f32 to vector<8x1xf32>
      %73 = arith.divf %71, %72 : vector<8x1xf32>
      %74 = math.sqrt %73 : vector<8x1xf32>
      %75 = vector.broadcast %21 : vector<1x32xf32> to vector<8x32xf32>
      %76 = arith.mulf %75, %68 : vector<8x32xf32>
      %cst_68 = arith.constant 9.99999997E-7 : f32
      %77 = vector.broadcast %cst_68 : f32 to vector<8x1xf32>
      %78 = arith.addf %74, %77 : vector<8x1xf32>
      %79 = vector.broadcast %78 : vector<8x1xf32> to vector<8x32xf32>
      %80 = arith.divf %76, %79 : vector<8x32xf32>
      %81 = vector.broadcast %22 : vector<1x32xf32> to vector<8x32xf32>
      %82 = arith.addf %80, %81 : vector<8x32xf32>
      %cst_69 = arith.constant dense<0.000000e+00> : vector<8x96xf32>
      %83 = tpu.matmul %82, %7, %cst_69 {dimension_numbers = #tpu.dot_dimension_numbers<[1], [0], [0], [1], [0, 0, 1, 1], [], []>} : vector<8x32xf32>, vector<32x96xf32>, vector<8x96xf32> -> vector<8x96xf32>
      %84 = vector.broadcast %8 : vector<1x96xf32> to vector<8x96xf32>
      %85 = arith.addf %83, %84 : vector<8x96xf32>
      %86 = vector.extract_strided_slice %85 {offsets = [0, 0], sizes = [8, 32], strides = [1, 1]} : vector<8x96xf32> to vector<8x32xf32>
      %87 = vector.extract_strided_slice %85 {offsets = [0, 32], sizes = [8, 32], strides = [1, 1]} : vector<8x96xf32> to vector<8x32xf32>
      %88 = vector.extract_strided_slice %85 {offsets = [0, 64], sizes = [8, 32], strides = [1, 1]} : vector<8x96xf32> to vector<8x32xf32>
      %89 = vector.shape_cast %86 : vector<8x32xf32> to vector<8x4x8xf32>
      %90 = vector.shape_cast %87 : vector<8x32xf32> to vector<8x4x8xf32>
      %91 = vector.shape_cast %88 : vector<8x32xf32> to vector<8x4x8xf32>
      "tpu.trace_start"() <{level = 10 : i32, message = "qhd,khd->hqk"}> : () -> ()
      %cst_70 = arith.constant dense<0.000000e+00> : vector<4x8x8xf32>
      %92 = tpu.matmul %89, %90, %cst_70 {dimension_numbers = #tpu.dot_dimension_numbers<[2], [2], [0], [0], [0, 1, 0, 0, 1, 0], [1], [1]>} : vector<8x4x8xf32>, vector<8x4x8xf32>, vector<4x8x8xf32> -> vector<4x8x8xf32>
      "tpu.trace_stop"() : () -> ()
      %cst_71 = arith.constant 0.353553385 : f32
      %93 = vector.broadcast %cst_71 : f32 to vector<4x8x8xf32>
      %94 = arith.mulf %92, %93 : vector<4x8x8xf32>
      %95 = vector.shape_cast %30 : vector<8x8xi1> to vector<1x8x8xi1>
      %cst_72 = arith.constant -1.000000e+09 : f32
      %96 = vector.shape_cast %95 : vector<1x8x8xi1> to vector<1x8x8xi1>
      %97 = vector.broadcast %96 : vector<1x8x8xi1> to vector<4x8x8xi1>
      %98 = vector.broadcast %cst_72 : f32 to vector<4x8x8xf32>
      %99 = arith.select %97, %98, %94 : vector<4x8x8xi1>, vector<4x8x8xf32>
      %cst_73 = arith.constant dense<0xFF800000> : vector<4x8xf32>
      %100 = vector.multi_reduction <maximumf>, %99, %cst_73 [2] : vector<4x8x8xf32> to vector<4x8xf32>
      %101 = vector.shape_cast %100 : vector<4x8xf32> to vector<4x8x1xf32>
      %102 = vector.broadcast %101 : vector<4x8x1xf32> to vector<4x8x8xf32>
      %103 = arith.subf %99, %102 : vector<4x8x8xf32>
      %104 = math.exp %103 : vector<4x8x8xf32>
      %cst_74 = arith.constant dense<0.000000e+00> : vector<4x8xf32>
      %105 = vector.multi_reduction <add>, %104, %cst_74 [2] : vector<4x8x8xf32> to vector<4x8xf32>
      %106 = vector.shape_cast %105 : vector<4x8xf32> to vector<4x8x1xf32>
      %107 = tpu.reciprocal %106 {approx = true} : vector<4x8x1xf32> -> vector<4x8x1xf32>
      %108 = vector.broadcast %107 : vector<4x8x1xf32> to vector<4x8x8xf32>
      %109 = arith.mulf %104, %108 : vector<4x8x8xf32>
      "tpu.trace_start"() <{level = 10 : i32, message = "hqk,khd->qhd"}> : () -> ()
      %cst_75 = arith.constant dense<0.000000e+00> : vector<4x8x8xf32>
      %110 = tpu.matmul %91, %109, %cst_75 {dimension_numbers = #tpu.dot_dimension_numbers<[0], [2], [2], [1], [0, 1, 0, 2, 1, 1], [1], [0]>} : vector<8x4x8xf32>, vector<4x8x8xf32>, vector<4x8x8xf32> -> vector<4x8x8xf32>
      %111 = tpu.transpose %110, [2, 0, 1] : vector<4x8x8xf32> -> vector<8x4x8xf32>
      "tpu.trace_stop"() : () -> ()
      %112 = vector.shape_cast %111 : vector<8x4x8xf32> to vector<8x32xf32>
      %cst_76 = arith.constant dense<0.000000e+00> : vector<8x32xf32>
      %113 = tpu.matmul %112, %9, %cst_76 {dimension_numbers = #tpu.dot_dimension_numbers<[1], [0], [0], [1], [0, 0, 1, 1], [], []>} : vector<8x32xf32>, vector<32x32xf32>, vector<8x32xf32> -> vector<8x32xf32>
      %114 = arith.addf %arg29, %113 : vector<8x32xf32>
      %115 = vector.broadcast %10 : vector<1x32xf32> to vector<8x32xf32>
      %116 = arith.addf %114, %115 : vector<8x32xf32>
      %cst_77 = arith.constant dense<0.000000e+00> : vector<8xf32>
      %117 = vector.multi_reduction <add>, %116, %cst_77 [1] : vector<8x32xf32> to vector<8xf32>
      %118 = vector.shape_cast %117 : vector<8xf32> to vector<8x1xf32>
      %cst_78 = arith.constant 3.200000e+01 : f32
      %119 = vector.broadcast %cst_78 : f32 to vector<8x1xf32>
      %120 = arith.divf %118, %119 : vector<8x1xf32>
      %121 = vector.broadcast %120 : vector<8x1xf32> to vector<8x32xf32>
      %122 = arith.subf %116, %121 : vector<8x32xf32>
      %123 = arith.mulf %122, %122 : vector<8x32xf32>
      %cst_79 = arith.constant dense<0.000000e+00> : vector<8xf32>
      %124 = vector.multi_reduction <add>, %123, %cst_79 [1] : vector<8x32xf32> to vector<8xf32>
      %125 = vector.shape_cast %124 : vector<8xf32> to vector<8x1xf32>
      %cst_80 = arith.constant 3.100000e+01 : f32
      %126 = vector.broadcast %cst_80 : f32 to vector<8x1xf32>
      %127 = arith.divf %125, %126 : vector<8x1xf32>
      %128 = math.sqrt %127 : vector<8x1xf32>
      %129 = vector.broadcast %23 : vector<1x32xf32> to vector<8x32xf32>
      %130 = arith.mulf %129, %122 : vector<8x32xf32>
      %cst_81 = arith.constant 9.99999997E-7 : f32
      %131 = vector.broadcast %cst_81 : f32 to vector<8x1xf32>
      %132 = arith.addf %128, %131 : vector<8x1xf32>
      %133 = vector.broadcast %132 : vector<8x1xf32> to vector<8x32xf32>
      %134 = arith.divf %130, %133 : vector<8x32xf32>
      %135 = vector.broadcast %24 : vector<1x32xf32> to vector<8x32xf32>
      %136 = arith.addf %134, %135 : vector<8x32xf32>
      %cst_82 = arith.constant dense<0.000000e+00> : vector<8x32xf32>
      %137 = tpu.matmul %136, %11, %cst_82 {dimension_numbers = #tpu.dot_dimension_numbers<[1], [0], [0], [1], [0, 0, 1, 1], [], []>} : vector<8x32xf32>, vector<32x32xf32>, vector<8x32xf32> -> vector<8x32xf32>
      %138 = vector.broadcast %12 : vector<1x32xf32> to vector<8x32xf32>
      %139 = arith.addf %137, %138 : vector<8x32xf32>
      %140 = vector.shape_cast %139 : vector<8x32xf32> to vector<8x4x8xf32>
      %141 = vector.shape_cast %36 : vector<8x32xf32> to vector<8x4x8xf32>
      %142 = vector.shape_cast %37 : vector<8x32xf32> to vector<8x4x8xf32>
      "tpu.trace_start"() <{level = 10 : i32, message = "qhd,khd->hqk"}> : () -> ()
      %cst_83 = arith.constant dense<0.000000e+00> : vector<4x8x8xf32>
      %143 = tpu.matmul %140, %141, %cst_83 {dimension_numbers = #tpu.dot_dimension_numbers<[2], [2], [0], [0], [0, 1, 0, 0, 1, 0], [1], [1]>} : vector<8x4x8xf32>, vector<8x4x8xf32>, vector<4x8x8xf32> -> vector<4x8x8xf32>
      "tpu.trace_stop"() : () -> ()
      %cst_84 = arith.constant 0.353553385 : f32
      %144 = vector.broadcast %cst_84 : f32 to vector<4x8x8xf32>
      %145 = arith.mulf %143, %144 : vector<4x8x8xf32>
      %146 = vector.shape_cast %32 : vector<1x8xi1> to vector<1x1x8xi1>
      %cst_85 = arith.constant -1.000000e+09 : f32
      %147 = vector.shape_cast %146 : vector<1x1x8xi1> to vector<1x1x8xi1>
      %148 = vector.broadcast %147 : vector<1x1x8xi1> to vector<4x8x8xi1>
      %149 = vector.broadcast %cst_85 : f32 to vector<4x8x8xf32>
      %150 = arith.select %148, %149, %145 : vector<4x8x8xi1>, vector<4x8x8xf32>
      %cst_86 = arith.constant dense<0xFF800000> : vector<4x8xf32>
      %151 = vector.multi_reduction <maximumf>, %150, %cst_86 [2] : vector<4x8x8xf32> to vector<4x8xf32>
      %152 = vector.shape_cast %151 : vector<4x8xf32> to vector<4x8x1xf32>
      %153 = vector.broadcast %152 : vector<4x8x1xf32> to vector<4x8x8xf32>
      %154 = arith.subf %150, %153 : vector<4x8x8xf32>
      %155 = math.exp %154 : vector<4x8x8xf32>
      %cst_87 = arith.constant dense<0.000000e+00> : vector<4x8xf32>
      %156 = vector.multi_reduction <add>, %155, %cst_87 [2] : vector<4x8x8xf32> to vector<4x8xf32>
      %157 = vector.shape_cast %156 : vector<4x8xf32> to vector<4x8x1xf32>
      %158 = tpu.reciprocal %157 {approx = true} : vector<4x8x1xf32> -> vector<4x8x1xf32>
      %159 = vector.broadcast %158 : vector<4x8x1xf32> to vector<4x8x8xf32>
      %160 = arith.mulf %155, %159 : vector<4x8x8xf32>
      "tpu.trace_start"() <{level = 10 : i32, message = "hqk,khd->qhd"}> : () -> ()
      %cst_88 = arith.constant dense<0.000000e+00> : vector<4x8x8xf32>
      %161 = tpu.matmul %142, %160, %cst_88 {dimension_numbers = #tpu.dot_dimension_numbers<[0], [2], [2], [1], [0, 1, 0, 2, 1, 1], [1], [0]>} : vector<8x4x8xf32>, vector<4x8x8xf32>, vector<4x8x8xf32> -> vector<4x8x8xf32>
      %162 = tpu.transpose %161, [2, 0, 1] : vector<4x8x8xf32> -> vector<8x4x8xf32>
      "tpu.trace_stop"() : () -> ()
      %163 = vector.shape_cast %162 : vector<8x4x8xf32> to vector<8x32xf32>
      %cst_89 = arith.constant dense<0.000000e+00> : vector<8x32xf32>
      %164 = tpu.matmul %163, %15, %cst_89 {dimension_numbers = #tpu.dot_dimension_numbers<[1], [0], [0], [1], [0, 0, 1, 1], [], []>} : vector<8x32xf32>, vector<32x32xf32>, vector<8x32xf32> -> vector<8x32xf32>
      %165 = arith.addf %116, %164 : vector<8x32xf32>
      %166 = vector.broadcast %16 : vector<1x32xf32> to vector<8x32xf32>
      %167 = arith.addf %165, %166 : vector<8x32xf32>
      %cst_90 = arith.constant dense<0.000000e+00> : vector<8xf32>
      %168 = vector.multi_reduction <add>, %167, %cst_90 [1] : vector<8x32xf32> to vector<8xf32>
      %169 = vector.shape_cast %168 : vector<8xf32> to vector<8x1xf32>
      %cst_91 = arith.constant 3.200000e+01 : f32
      %170 = vector.broadcast %cst_91 : f32 to vector<8x1xf32>
      %171 = arith.divf %169, %170 : vector<8x1xf32>
      %172 = vector.broadcast %171 : vector<8x1xf32> to vector<8x32xf32>
      %173 = arith.subf %167, %172 : vector<8x32xf32>
      %174 = arith.mulf %173, %173 : vector<8x32xf32>
      %cst_92 = arith.constant dense<0.000000e+00> : vector<8xf32>
      %175 = vector.multi_reduction <add>, %174, %cst_92 [1] : vector<8x32xf32> to vector<8xf32>
      %176 = vector.shape_cast %175 : vector<8xf32> to vector<8x1xf32>
      %cst_93 = arith.constant 3.100000e+01 : f32
      %177 = vector.broadcast %cst_93 : f32 to vector<8x1xf32>
      %178 = arith.divf %176, %177 : vector<8x1xf32>
      %179 = math.sqrt %178 : vector<8x1xf32>
      %180 = vector.broadcast %25 : vector<1x32xf32> to vector<8x32xf32>
      %181 = arith.mulf %180, %173 : vector<8x32xf32>
      %cst_94 = arith.constant 9.99999997E-7 : f32
      %182 = vector.broadcast %cst_94 : f32 to vector<8x1xf32>
      %183 = arith.addf %179, %182 : vector<8x1xf32>
      %184 = vector.broadcast %183 : vector<8x1xf32> to vector<8x32xf32>
      %185 = arith.divf %181, %184 : vector<8x32xf32>
      %186 = vector.broadcast %26 : vector<1x32xf32> to vector<8x32xf32>
      %187 = arith.addf %185, %186 : vector<8x32xf32>
      %cst_95 = arith.constant dense<0.000000e+00> : vector<8x64xf32>
      %188 = tpu.matmul %187, %17, %cst_95 {dimension_numbers = #tpu.dot_dimension_numbers<[1], [0], [0], [1], [0, 0, 1, 1], [], []>} : vector<8x32xf32>, vector<32x64xf32>, vector<8x64xf32> -> vector<8x64xf32>
      %189 = vector.broadcast %18 : vector<1x64xf32> to vector<8x64xf32>
      %190 = arith.addf %188, %189 : vector<8x64xf32>
      %cst_96 = arith.constant 0.000000e+00 : f32
      %191 = vector.broadcast %cst_96 : f32 to vector<8x64xf32>
      %192 = arith.maximumf %190, %191 : vector<8x64xf32>
      %cst_97 = arith.constant dense<0.000000e+00> : vector<8x32xf32>
      %193 = tpu.matmul %192, %19, %cst_97 {dimension_numbers = #tpu.dot_dimension_numbers<[1], [0], [0], [1], [0, 0, 1, 1], [], []>} : vector<8x64xf32>, vector<64x32xf32>, vector<8x32xf32> -> vector<8x32xf32>
      %194 = arith.addf %167, %193 : vector<8x32xf32>
      %195 = vector.broadcast %20 : vector<1x32xf32> to vector<8x32xf32>
      %196 = arith.addf %194, %195 : vector<8x32xf32>
      scf.yield %196 : vector<8x32xf32>
    }
    %cst_56 = arith.constant dense<0.000000e+00> : vector<8xf32>
    %40 = vector.multi_reduction <add>, %39, %cst_56 [1] : vector<8x32xf32> to vector<8xf32>
    %41 = vector.shape_cast %40 : vector<8xf32> to vector<8x1xf32>
    %cst_57 = arith.constant 3.200000e+01 : f32
    %42 = vector.broadcast %cst_57 : f32 to vector<8x1xf32>
    %43 = arith.divf %41, %42 : vector<8x1xf32>
    %44 = vector.broadcast %43 : vector<8x1xf32> to vector<8x32xf32>
    %45 = arith.subf %39, %44 : vector<8x32xf32>
    %46 = arith.mulf %45, %45 : vector<8x32xf32>
    %cst_58 = arith.constant dense<0.000000e+00> : vector<8xf32>
    %47 = vector.multi_reduction <add>, %46, %cst_58 [1] : vector<8x32xf32> to vector<8xf32>
    %48 = vector.shape_cast %47 : vector<8xf32> to vector<8x1xf32>
    %cst_59 = arith.constant 3.100000e+01 : f32
    %49 = vector.broadcast %cst_59 : f32 to vector<8x1xf32>
    %50 = arith.divf %48, %49 : vector<8x1xf32>
    %51 = math.sqrt %50 : vector<8x1xf32>
    %52 = vector.broadcast %27 : vector<1x32xf32> to vector<8x32xf32>
    %53 = arith.mulf %52, %45 : vector<8x32xf32>
    %cst_60 = arith.constant 9.99999997E-7 : f32
    %54 = vector.broadcast %cst_60 : f32 to vector<8x1xf32>
    %55 = arith.addf %51, %54 : vector<8x1xf32>
    %56 = vector.broadcast %55 : vector<8x1xf32> to vector<8x32xf32>
    %57 = arith.divf %53, %56 : vector<8x32xf32>
    %58 = vector.broadcast %28 : vector<1x32xf32> to vector<8x32xf32>
    %59 = arith.addf %57, %58 : vector<8x32xf32>
    %c0_61 = arith.constant 0 : index
    %c0_62 = arith.constant 0 : index
    %c0_63 = arith.constant 0 : index
    %60 = vector.load %arg27[%c0_61, %c0_62, %c0_63] : memref<1x8x32xf32, #tpu.memory_space<vmem>>, vector<1x8x32xf32>
    %61 = vector.shape_cast %60 : vector<1x8x32xf32> to vector<8x32xf32>
    %62 = vector.shape_cast %59 : vector<8x32xf32> to vector<1x8x32xf32>
    tpu.vector_store %arg27[%c0_61, %c0_62, %c0_63], %62 {strides = array<i32>} : memref<1x8x32xf32, #tpu.memory_space<vmem>>, vector<1x8x32xf32>,
    return
  }
  func.func @transform_0(%arg0: i32) -> (i32, i32, i32) {
    %c0_i32 = arith.constant 0 : i32
    %c0_i32_0 = arith.constant 0 : i32
    %c0_i32_1 = arith.constant 0 : i32
    return %arg0, %c0_i32, %c0_i32_0 : i32, i32, i32
  }
  func.func @transform_1(%arg0: i32) -> (i32, i32, i32) {
    %c0_i32 = arith.constant 0 : i32
    %c0_i32_0 = arith.constant 0 : i32
    %c0_i32_1 = arith.constant 0 : i32
    return %arg0, %c0_i32, %c0_i32_0 : i32, i32, i32
  }
  func.func @transform_2(%arg0: i32) -> (i32, i32, i32) {
    %c0_i32 = arith.constant 0 : i32
    %c0_i32_0 = arith.constant 0 : i32
    %c0_i32_1 = arith.constant 0 : i32
    return %arg0, %c0_i32, %c0_i32_0 : i32, i32, i32
  }
  func.func @transform_3(%arg0: i32) -> (i32, i32) {
    %c0_i32 = arith.constant 0 : i32
    %c0_i32_0 = arith.constant 0 : i32
    %c0_i32_1 = arith.constant 0 : i32
    return %c0_i32, %c0_i32_0 : i32, i32
  }
  func.func @transform_4(%arg0: i32) -> (i32, i32) {
    %c0_i32 = arith.constant 0 : i32
    %c0_i32_0 = arith.constant 0 : i32
    %c0_i32_1 = arith.constant 0 : i32
    return %c0_i32, %c0_i32_0 : i32, i32
  }
  func.func @transform_5(%arg0: i32) -> (i32, i32) {
    %c0_i32 = arith.constant 0 : i32
    %c0_i32_0 = arith.constant 0 : i32
    %c0_i32_1 = arith.constant 0 : i32
    return %c0_i32, %c0_i32_0 : i32, i32
  }
  func.func @transform_6(%arg0: i32) -> (i32, i32) {
    %c0_i32 = arith.constant 0 : i32
    %c0_i32_0 = arith.constant 0 : i32
    %c0_i32_1 = arith.constant 0 : i32
    return %c0_i32, %c0_i32_0 : i32, i32
  }
  func.func @transform_7(%arg0: i32) -> (i32, i32) {
    %c0_i32 = arith.constant 0 : i32
    %c0_i32_0 = arith.constant 0 : i32
    %c0_i32_1 = arith.constant 0 : i32
    return %c0_i32, %c0_i32_0 : i32, i32
  }
  func.func @transform_8(%arg0: i32) -> (i32, i32) {
    %c0_i32 = arith.constant 0 : i32
    %c0_i32_0 = arith.constant 0 : i32
    %c0_i32_1 = arith.constant 0 : i32
    return %c0_i32, %c0_i32_0 : i32, i32
  }
  func.func @transform_9(%arg0: i32) -> (i32, i32) {
    %c0_i32 = arith.constant 0 : i32
    %c0_i32_0 = arith.constant 0 : i32
    %c0_i32_1 = arith.constant 0 : i32
    return %c0_i32, %c0_i32_0 : i32, i32
  }
  func.func @transform_10(%arg0: i32) -> (i32, i32) {
    %c0_i32 = arith.constant 0 : i32
    %c0_i32_0 = arith.constant 0 : i32
    %c0_i32_1 = arith.constant 0 : i32
    return %c0_i32, %c0_i32_0 : i32, i32
  }
  func.func @transform_11(%arg0: i32) -> (i32, i32) {
    %c0_i32 = arith.constant 0 : i32
    %c0_i32_0 = arith.constant 0 : i32
    %c0_i32_1 = arith.constant 0 : i32
    return %c0_i32, %c0_i32_0 : i32, i32
  }
  func.func @transform_12(%arg0: i32) -> (i32, i32) {
    %c0_i32 = arith.constant 0 : i32
    %c0_i32_0 = arith.constant 0 : i32
    %c0_i32_1 = arith.constant 0 : i32
    return %c0_i32, %c0_i32_0 : i32, i32
  }
  func.func @transform_13(%arg0: i32) -> (i32, i32) {
    %c0_i32 = arith.constant 0 : i32
    %c0_i32_0 = arith.constant 0 : i32
    %c0_i32_1 = arith.constant 0 : i32
    return %c0_i32, %c0_i32_0 : i32, i32
  }
  func.func @transform_14(%arg0: i32) -> (i32, i32) {
    %c0_i32 = arith.constant 0 : i32
    %c0_i32_0 = arith.constant 0 : i32
    %c0_i32_1 = arith.constant 0 : i32
    return %c0_i32, %c0_i32_0 : i32, i32
  }
  func.func @transform_15(%arg0: i32) -> (i32, i32) {
    %c0_i32 = arith.constant 0 : i32
    %c0_i32_0 = arith.constant 0 : i32
    %c0_i32_1 = arith.constant 0 : i32
    return %c0_i32, %c0_i32_0 : i32, i32
  }
  func.func @transform_16(%arg0: i32) -> (i32, i32) {
    %c0_i32 = arith.constant 0 : i32
    %c0_i32_0 = arith.constant 0 : i32
    %c0_i32_1 = arith.constant 0 : i32
    return %c0_i32, %c0_i32_0 : i32, i32
  }
  func.func @transform_17(%arg0: i32) -> (i32, i32) {
    %c0_i32 = arith.constant 0 : i32
    %c0_i32_0 = arith.constant 0 : i32
    %c0_i32_1 = arith.constant 0 : i32
    return %c0_i32, %c0_i32_0 : i32, i32
  }
  func.func @transform_18(%arg0: i32) -> (i32, i32) {
    %c0_i32 = arith.constant 0 : i32
    %c0_i32_0 = arith.constant 0 : i32
    %c0_i32_1 = arith.constant 0 : i32
    return %c0_i32, %c0_i32_0 : i32, i32
  }
  func.func @transform_19(%arg0: i32) -> (i32, i32) {
    %c0_i32 = arith.constant 0 : i32
    %c0_i32_0 = arith.constant 0 : i32
    %c0_i32_1 = arith.constant 0 : i32
    return %c0_i32, %c0_i32_0 : i32, i32
  }
  func.func @transform_20(%arg0: i32) -> (i32, i32) {
    %c0_i32 = arith.constant 0 : i32
    %c0_i32_0 = arith.constant 0 : i32
    %c0_i32_1 = arith.constant 0 : i32
    return %c0_i32, %c0_i32_0 : i32, i32
  }
  func.func @transform_21(%arg0: i32) -> (i32, i32) {
    %c0_i32 = arith.constant 0 : i32
    %c0_i32_0 = arith.constant 0 : i32
    %c0_i32_1 = arith.constant 0 : i32
    return %c0_i32, %c0_i32_0 : i32, i32
  }
  func.func @transform_22(%arg0: i32) -> (i32, i32) {
    %c0_i32 = arith.constant 0 : i32
    %c0_i32_0 = arith.constant 0 : i32
    %c0_i32_1 = arith.constant 0 : i32
    return %c0_i32, %c0_i32_0 : i32, i32
  }
  func.func @transform_23(%arg0: i32) -> (i32, i32) {
    %c0_i32 = arith.constant 0 : i32
    %c0_i32_0 = arith.constant 0 : i32
    %c0_i32_1 = arith.constant 0 : i32
    return %c0_i32, %c0_i32_0 : i32, i32
  }
  func.func @transform_24(%arg0: i32) -> (i32, i32) {
    %c0_i32 = arith.constant 0 : i32
    %c0_i32_0 = arith.constant 0 : i32
    %c0_i32_1 = arith.constant 0 : i32
    return %c0_i32, %c0_i32_0 : i32, i32
  }
  func.func @transform_25(%arg0: i32) -> (i32, i32) {
    %c0_i32 = arith.constant 0 : i32
    %c0_i32_0 = arith.constant 0 : i32
    %c0_i32_1 = arith.constant 0 : i32
    return %c0_i32, %c0_i32_0 : i32, i32
  }
  func.func @transform_26(%arg0: i32) -> (i32, i32, i32) {
    %c0_i32 = arith.constant 0 : i32
    %c0_i32_0 = arith.constant 0 : i32
    %c0_i32_1 = arith.constant 0 : i32
    return %arg0, %c0_i32, %c0_i32_0 : i32, i32, i32
  }
}

</mosaic_0001>

<llo_original>
// kernel: tpu_custom_call.1
$region0: #{tpu_custom_call.1}
  #allocation0 [shape = 'u32[]', space=smem, size = 0x4, offset = 0x4, fixed_abs, tag = 'smem constant byte address 0x4 - core index']
  #allocation1 [shape = 'u32[72,128]{1,0:T(1,128)}', space=vmem, size = 0x9000, scoped, tag = 'internal scratch']
  %s0 = inlined_call_operand.hbm [shape: f32[2,8,32], index: 0, kind: input, shape index: {}]
  %s1 = inlined_call_operand.hbm [shape: f32[2,8,32], index: 1, kind: input, shape index: {}]
  %s2 = inlined_call_operand.hbm [shape: f32[2,1,8], index: 2, kind: input, shape index: {}]
  %s3 = inlined_call_operand.hbm [shape: f32[8,8], index: 3, kind: input, shape index: {}]
  %s4 = inlined_call_operand.vmem [shape: f32[32,96], index: 4, kind: input, shape index: {}]
  %s5 = inlined_call_operand.vmem [shape: f32[1,96], index: 5, kind: input, shape index: {}]
  %s6 = inlined_call_operand.vmem [shape: f32[32,32], index: 6, kind: input, shape index: {}]
  %s7 = inlined_call_operand.vmem [shape: f32[1,32], index: 7, kind: input, shape index: {}]
  %s8 = inlined_call_operand.vmem [shape: f32[32,32], index: 8, kind: input, shape index: {}]
  %s9 = inlined_call_operand.vmem [shape: f32[1,32], index: 9, kind: input, shape index: {}]
  %s10 = inlined_call_operand.hbm [shape: f32[32,64], index: 10, kind: input, shape index: {}]
  %s11 = inlined_call_operand.vmem [shape: f32[1,64], index: 11, kind: input, shape index: {}]
  %s12 = inlined_call_operand.hbm [shape: f32[32,32], index: 12, kind: input, shape index: {}]
  %s13 = inlined_call_operand.vmem [shape: f32[1,32], index: 13, kind: input, shape index: {}]
  %s14 = inlined_call_operand.hbm [shape: f32[32,64], index: 14, kind: input, shape index: {}]
  %s15 = inlined_call_operand.vmem [shape: f32[1,64], index: 15, kind: input, shape index: {}]
  %s16 = inlined_call_operand.vmem [shape: f32[64,32], index: 16, kind: input, shape index: {}]
  %s17 = inlined_call_operand.vmem [shape: f32[1,32], index: 17, kind: input, shape index: {}]
  %s18 = inlined_call_operand.vmem [shape: f32[1,32], index: 18, kind: input, shape index: {}]
  %s19 = inlined_call_operand.vmem [shape: f32[1,32], index: 19, kind: input, shape index: {}]
  %s20 = inlined_call_operand.vmem [shape: f32[1,32], index: 20, kind: input, shape index: {}]
  %s21 = inlined_call_operand.vmem [shape: f32[1,32], index: 21, kind: input, shape index: {}]
  %s22 = inlined_call_operand.vmem [shape: f32[1,32], index: 22, kind: input, shape index: {}]
  %s23 = inlined_call_operand.vmem [shape: f32[1,32], index: 23, kind: input, shape index: {}]
  %s24 = inlined_call_operand.vmem [shape: f32[1,32], index: 24, kind: input, shape index: {}]
  %s25 = inlined_call_operand.vmem [shape: f32[1,32], index: 25, kind: input, shape index: {}]
  %s26 = inlined_call_operand.hbm [shape: f32[2,8,32], index: 26, kind: output, shape index: {}]
  %s27 = sld [smem:[#allocation0]]
  $region172: #{tpu_custom_call.1} parent=0
    _
  %s29 = ssub.s32 1, %s27
  %s30 = scalar_select 0, %s29, %s27
  $region1: #{tpu_custom_call.1} parent=0
    #allocation2 [shape = 'u8[8192]{0}', space=vmem, size = 0x2000, scoped, tag = 'input window, operand 0']
    #allocation3 [shape = 's32[2]{0}', space=sflag, size = 0x8, scoped, tag = 'scoped memory for tpu_custom_call.1']
    #allocation4 [shape = 's32[2]{0}', space=sflag, size = 0x8, scoped, tag = 'scoped memory for tpu_custom_call.1']
    #allocation5 [shape = 'u8[8192]{0}', space=vmem, size = 0x2000, scoped, tag = 'input window, operand 1']
    #allocation6 [shape = 's32[2]{0}', space=sflag, size = 0x8, scoped, tag = 'scoped memory for tpu_custom_call.1']
    #allocation7 [shape = 'u8[1024]{0}', space=vmem, size = 0x400, scoped, tag = 'input window, operand 2']
    #allocation8 [shape = 'u8[4096]{0}', space=vmem, size = 0x1000, scoped, tag = 'input window, operand 3, single buffered']
    #allocation9 [shape = 's32[1]{0}', space=sflag, size = 0x4, scoped, tag = 'scoped memory for tpu_custom_call.1']
    #allocation10 [shape = 'u8[16384]{0}', space=vmem, size = 0x4000, scoped, tag = 'input window, operand 10, single buffered']
    #allocation11 [shape = 'u8[16384]{0}', space=vmem, size = 0x4000, scoped, tag = 'input window, operand 12, single buffered']
    #allocation12 [shape = 's32[1]{0}', space=sflag, size = 0x4, scoped, tag = 'scoped memory for tpu_custom_call.1']
    #allocation13 [shape = 'u8[16384]{0}', space=vmem, size = 0x4000, scoped, tag = 'input window, operand 14, single buffered']
    #allocation14 [shape = 'u8[8192]{0}', space=vmem, size = 0x2000, scoped, tag = 'output window, operand 0']
    %31 = vsyncpa [#allocation3], 0
    %s32 = scalar_lea.sflag [#allocation3], 1
    %33 = vsyncpa %s32, 0
    %34 = vsyncpa [#allocation6], 0
    %s35 = scalar_lea.sflag [#allocation6], 1
    %36 = vsyncpa %s35, 0
    %37 = vsyncpa [#allocation9], 0
    %38 = vsyncpa [#allocation12], 0
    %39 = vsyncpa [#allocation4], 0
    %s40 = scalar_lea.sflag [#allocation4], 1
    %41 = vsyncpa %s40, 0
    loop: start=0, step=1, limit=4
    $region2: #{tpu_custom_call.1} parent=1 // loop_pre_header
      _
    $region3: #{tpu_custom_call.1} parent=1 // loop_header
      %s43 = sphi 0, %s47
      %p44 = scmp.ge.s32.totalorder %s43, 4
      %s53 = sphi 0, %s55
      %s56 = sphi 0, %s53
      %s57 = sphi 0, %s56
      %s73 = sphi 0, %s57
      %s79 = sphi 0, %s81
      %s82 = sphi 0, %s79
      %s83 = sphi 0, %s82
      %s99 = sphi 0, %s83
      %s105 = sphi 0, %s107
      %s108 = sphi 0, %s105
      %s109 = sphi 0, %s108
      %s125 = sphi 0, %s109
      %s129 = sphi 0, %s129
      %s131 = sphi 0, %s129
      %s132 = sphi 0, %s131
      %s146 = sphi 0, %s132
      %s150 = sphi 0, %s150
      %s152 = sphi 0, %s150
      %s153 = sphi 0, %s152
      %s167 = sphi 0, %s153
      %s171 = sphi 0, %s171
      %s173 = sphi 0, %s171
      %s174 = sphi 0, %s173
      %s188 = sphi 0, %s174
      %s192 = sphi 0, %s192
      %s194 = sphi 0, %s192
      %s195 = sphi 0, %s194
      %s209 = sphi 0, %s195
      %s213 = sphi 0, %s213
      %s215 = sphi 0, %s213
      %s216 = sphi 0, %s215
      %s230 = sphi 0, %s216
      %s234 = sphi 0, %s234
      %s236 = sphi 0, %s234
      %s237 = sphi 0, %s236
      %s251 = sphi 0, %s237
      %s255 = sphi 0, %s255
      %s257 = sphi 0, %s255
      %s258 = sphi 0, %s257
      %s272 = sphi 0, %s258
      %s276 = sphi 0, %s276
      %s278 = sphi 0, %s276
      %s279 = sphi 0, %s278
      %s293 = sphi 0, %s279
      %s297 = sphi 0, %s297
      %s299 = sphi 0, %s297
      %s300 = sphi 0, %s299
      %s314 = sphi 0, %s300
      %s318 = sphi 0, %s318
      %s320 = sphi 0, %s318
      %s321 = sphi 0, %s320
      %s335 = sphi 0, %s321
      %s339 = sphi 0, %s339
      %s341 = sphi 0, %s339
      %s342 = sphi 0, %s341
      %s356 = sphi 0, %s342
      %s360 = sphi 0, %s360
      %s362 = sphi 0, %s360
      %s363 = sphi 0, %s362
      %s377 = sphi 0, %s363
      %s381 = sphi 0, %s381
      %s383 = sphi 0, %s381
      %s384 = sphi 0, %s383
      %s398 = sphi 0, %s384
      %s402 = sphi 0, %s402
      %s404 = sphi 0, %s402
      %s405 = sphi 0, %s404
      %s419 = sphi 0, %s405
      %s423 = sphi 0, %s423
      %s425 = sphi 0, %s423
      %s426 = sphi 0, %s425
      %s440 = sphi 0, %s426
      %s444 = sphi 0, %s444
      %s446 = sphi 0, %s444
      %s447 = sphi 0, %s446
      %s461 = sphi 0, %s447
      %s465 = sphi 0, %s465
      %s467 = sphi 0, %s465
      %s468 = sphi 0, %s467
      %s482 = sphi 0, %s468
      %s486 = sphi 0, %s486
      %s488 = sphi 0, %s486
      %s489 = sphi 0, %s488
      %s503 = sphi 0, %s489
      %s507 = sphi 0, %s507
      %s509 = sphi 0, %s507
      %s510 = sphi 0, %s509
      %s524 = sphi 0, %s510
      %s528 = sphi 0, %s528
      %s530 = sphi 0, %s528
      %s531 = sphi 0, %s530
      %s545 = sphi 0, %s531
      %s549 = sphi 0, %s549
      %s551 = sphi 0, %s549
      %s552 = sphi 0, %s551
      %s566 = sphi 0, %s552
      %s570 = sphi 0, %s570
      %s572 = sphi 0, %s570
      %s573 = sphi 0, %s572
      %s587 = sphi 0, %s573
      %s591 = sphi 0, %s591
      %s593 = sphi 0, %s591
      %s594 = sphi 0, %s593
      %s608 = sphi 0, %s594
      %s614 = sphi 0, %s616
      %s617 = sphi 0, %s614
      %s618 = sphi 0, %s617
      %s634 = sphi 0, %s618
    $region4: #{tpu_custom_call.1} parent=1 // loop_header_branch
      %46 = sbr.rel (%p44) target = $region8
    $region5: #{tpu_custom_call.1} parent=1 // loop_body
      %s48 = ssub.s32 %s43, 1
      %s49 = ssub.s32 %s43, 2
      %s50 = sadd.s32 %s43, 1
      %s51 = ssub.s32 %s43, %s50
      %p52 = scmp.eq.s32.totalorder %s51, 0
      %s54 = sadd.s32 %s53, 1
      %s55 = scalar_select %p52, %s53, %s54
      %p58 = pneg %p52
      %p59 = scmp.eq.s32.totalorder %s43, 1
      %p60 = por %p58, %p59
      %p61 = scmp.ne.s32.totalorder %s53, %s56
      %p62 = scmp.eq.s32.totalorder %s43, 0
      %p63 = por %p61, %p62
      %p64 = scmp.ne.s32.totalorder %s53, %s56
      %p65 = scmp.eq.s32.totalorder %s48, 1
      %p66 = por %p64, %p65
      %p67 = scmp.ne.s32.totalorder %s56, %s57
      %p68 = scmp.eq.s32.totalorder %s48, 0
      %p69 = por %p67, %p68
      %p70 = scmp.ne.s32.totalorder %s56, %s57
      %p71 = scmp.eq.s32.totalorder %s49, 1
      %p72 = por %p70, %p71
      %p74 = scmp.ne.s32.totalorder %s57, %s73
      %p75 = scmp.eq.s32.totalorder %s49, 0
      %p76 = por %p74, %p75
      %s77 = ssub.s32 %s43, %s50
      %p78 = scmp.eq.s32.totalorder %s77, 0
      %s80 = sadd.s32 %s79, 1
      %s81 = scalar_select %p78, %s79, %s80
      %p84 = pneg %p78
      %p85 = scmp.eq.s32.totalorder %s43, 1
      %p86 = por %p84, %p85
      %p87 = scmp.ne.s32.totalorder %s79, %s82
      %p88 = scmp.eq.s32.totalorder %s43, 0
      %p89 = por %p87, %p88
      %p90 = scmp.ne.s32.totalorder %s79, %s82
      %p91 = scmp.eq.s32.totalorder %s48, 1
      %p92 = por %p90, %p91
      %p93 = scmp.ne.s32.totalorder %s82, %s83
      %p94 = scmp.eq.s32.totalorder %s48, 0
      %p95 = por %p93, %p94
      %p96 = scmp.ne.s32.totalorder %s82, %s83
      %p97 = scmp.eq.s32.totalorder %s49, 1
      %p98 = por %p96, %p97
      %p100 = scmp.ne.s32.totalorder %s83, %s99
      %p101 = scmp.eq.s32.totalorder %s49, 0
      %p102 = por %p100, %p101
      %s103 = ssub.s32 %s43, %s50
      %p104 = scmp.eq.s32.totalorder %s103, 0
      %s106 = sadd.s32 %s105, 1
      %s107 = scalar_select %p104, %s105, %s106
      %p110 = pneg %p104
      %p111 = scmp.eq.s32.totalorder %s43, 1
      %p112 = por %p110, %p111
      %p113 = scmp.ne.s32.totalorder %s105, %s108
      %p114 = scmp.eq.s32.totalorder %s43, 0
      %p115 = por %p113, %p114
      %p116 = scmp.ne.s32.totalorder %s105, %s108
      %p117 = scmp.eq.s32.totalorder %s48, 1
      %p118 = por %p116, %p117
      %p119 = scmp.ne.s32.totalorder %s108, %s109
      %p120 = scmp.eq.s32.totalorder %s48, 0
      %p121 = por %p119, %p120
      %p122 = scmp.ne.s32.totalorder %s108, %s109
      %p123 = scmp.eq.s32.totalorder %s49, 1
      %p124 = por %p122, %p123
      %p126 = scmp.ne.s32.totalorder %s109, %s125
      %p127 = scmp.eq.s32.totalorder %s49, 0
      %p128 = por %p126, %p127
      %s130 = sadd.s32 %s129, 1
      %p133 = scmp.eq.s32.totalorder %s43, 1
      %p134 = scmp.ne.s32.totalorder %s129, %s131
      %p135 = scmp.eq.s32.totalorder %s43, 0
      %p136 = por %p134, %p135
      %p137 = scmp.ne.s32.totalorder %s129, %s131
      %p138 = scmp.eq.s32.totalorder %s48, 1
      %p139 = por %p137, %p138
      %p140 = scmp.ne.s32.totalorder %s131, %s132
      %p141 = scmp.eq.s32.totalorder %s48, 0
      %p142 = por %p140, %p141
      %p143 = scmp.ne.s32.totalorder %s131, %s132
      %p144 = scmp.eq.s32.totalorder %s49, 1
      %p145 = por %p143, %p144
      %p147 = scmp.ne.s32.totalorder %s132, %s146
      %p148 = scmp.eq.s32.totalorder %s49, 0
      %p149 = por %p147, %p148
      %s151 = sadd.s32 %s150, 1
      %p154 = scmp.eq.s32.totalorder %s43, 1
      %p155 = scmp.ne.s32.totalorder %s150, %s152
      %p156 = scmp.eq.s32.totalorder %s43, 0
      %p157 = por %p155, %p156
      %p158 = scmp.ne.s32.totalorder %s150, %s152
      %p159 = scmp.eq.s32.totalorder %s48, 1
      %p160 = por %p158, %p159
      %p161 = scmp.ne.s32.totalorder %s152, %s153
      %p162 = scmp.eq.s32.totalorder %s48, 0
      %p163 = por %p161, %p162
      %p164 = scmp.ne.s32.totalorder %s152, %s153
      %p165 = scmp.eq.s32.totalorder %s49, 1
      %p166 = por %p164, %p165
      %p168 = scmp.ne.s32.totalorder %s153, %s167
      %p169 = scmp.eq.s32.totalorder %s49, 0
      %p170 = por %p168, %p169
      %s172 = sadd.s32 %s171, 1
      %p175 = scmp.eq.s32.totalorder %s43, 1
      %p176 = scmp.ne.s32.totalorder %s171, %s173
      %p177 = scmp.eq.s32.totalorder %s43, 0
      %p178 = por %p176, %p177
      %p179 = scmp.ne.s32.totalorder %s171, %s173
      %p180 = scmp.eq.s32.totalorder %s48, 1
      %p181 = por %p179, %p180
      %p182 = scmp.ne.s32.totalorder %s173, %s174
      %p183 = scmp.eq.s32.totalorder %s48, 0
      %p184 = por %p182, %p183
      %p185 = scmp.ne.s32.totalorder %s173, %s174
      %p186 = scmp.eq.s32.totalorder %s49, 1
      %p187 = por %p185, %p186
      %p189 = scmp.ne.s32.totalorder %s174, %s188
      %p190 = scmp.eq.s32.totalorder %s49, 0
      %p191 = por %p189, %p190
      %s193 = sadd.s32 %s192, 1
      %p196 = scmp.eq.s32.totalorder %s43, 1
      %p197 = scmp.ne.s32.totalorder %s192, %s194
      %p198 = scmp.eq.s32.totalorder %s43, 0
      %p199 = por %p197, %p198
      %p200 = scmp.ne.s32.totalorder %s192, %s194
      %p201 = scmp.eq.s32.totalorder %s48, 1
      %p202 = por %p200, %p201
      %p203 = scmp.ne.s32.totalorder %s194, %s195
      %p204 = scmp.eq.s32.totalorder %s48, 0
      %p205 = por %p203, %p204
      %p206 = scmp.ne.s32.totalorder %s194, %s195
      %p207 = scmp.eq.s32.totalorder %s49, 1
      %p208 = por %p206, %p207
      %p210 = scmp.ne.s32.totalorder %s195, %s209
      %p211 = scmp.eq.s32.totalorder %s49, 0
      %p212 = por %p210, %p211
      %s214 = sadd.s32 %s213, 1
      %p217 = scmp.eq.s32.totalorder %s43, 1
      %p218 = scmp.ne.s32.totalorder %s213, %s215
      %p219 = scmp.eq.s32.totalorder %s43, 0
      %p220 = por %p218, %p219
      %p221 = scmp.ne.s32.totalorder %s213, %s215
      %p222 = scmp.eq.s32.totalorder %s48, 1
      %p223 = por %p221, %p222
      %p224 = scmp.ne.s32.totalorder %s215, %s216
      %p225 = scmp.eq.s32.totalorder %s48, 0
      %p226 = por %p224, %p225
      %p227 = scmp.ne.s32.totalorder %s215, %s216
      %p228 = scmp.eq.s32.totalorder %s49, 1
      %p229 = por %p227, %p228
      %p231 = scmp.ne.s32.totalorder %s216, %s230
      %p232 = scmp.eq.s32.totalorder %s49, 0
      %p233 = por %p231, %p232
      %s235 = sadd.s32 %s234, 1
      %p238 = scmp.eq.s32.totalorder %s43, 1
      %p239 = scmp.ne.s32.totalorder %s234, %s236
      %p240 = scmp.eq.s32.totalorder %s43, 0
      %p241 = por %p239, %p240
      %p242 = scmp.ne.s32.totalorder %s234, %s236
      %p243 = scmp.eq.s32.totalorder %s48, 1
      %p244 = por %p242, %p243
      %p245 = scmp.ne.s32.totalorder %s236, %s237
      %p246 = scmp.eq.s32.totalorder %s48, 0
      %p247 = por %p245, %p246
      %p248 = scmp.ne.s32.totalorder %s236, %s237
      %p249 = scmp.eq.s32.totalorder %s49, 1
      %p250 = por %p248, %p249
      %p252 = scmp.ne.s32.totalorder %s237, %s251
      %p253 = scmp.eq.s32.totalorder %s49, 0
      %p254 = por %p252, %p253
      %s256 = sadd.s32 %s255, 1
      %p259 = scmp.eq.s32.totalorder %s43, 1
      %p260 = scmp.ne.s32.totalorder %s255, %s257
      %p261 = scmp.eq.s32.totalorder %s43, 0
      %p262 = por %p260, %p261
      %p263 = scmp.ne.s32.totalorder %s255, %s257
      %p264 = scmp.eq.s32.totalorder %s48, 1
      %p265 = por %p263, %p264
      %p266 = scmp.ne.s32.totalorder %s257, %s258
      %p267 = scmp.eq.s32.totalorder %s48, 0
      %p268 = por %p266, %p267
      %p269 = scmp.ne.s32.totalorder %s257, %s258
      %p270 = scmp.eq.s32.totalorder %s49, 1
      %p271 = por %p269, %p270
      %p273 = scmp.ne.s32.totalorder %s258, %s272
      %p274 = scmp.eq.s32.totalorder %s49, 0
      %p275 = por %p273, %p274
      %s277 = sadd.s32 %s276, 1
      %p280 = scmp.eq.s32.totalorder %s43, 1
      %p281 = scmp.ne.s32.totalorder %s276, %s278
      %p282 = scmp.eq.s32.totalorder %s43, 0
      %p283 = por %p281, %p282
      %p284 = scmp.ne.s32.totalorder %s276, %s278
      %p285 = scmp.eq.s32.totalorder %s48, 1
      %p286 = por %p284, %p285
      %p287 = scmp.ne.s32.totalorder %s278, %s279
      %p288 = scmp.eq.s32.totalorder %s48, 0
      %p289 = por %p287, %p288
      %p290 = scmp.ne.s32.totalorder %s278, %s279
      %p291 = scmp.eq.s32.totalorder %s49, 1
      %p292 = por %p290, %p291
      %p294 = scmp.ne.s32.totalorder %s279, %s293
      %p295 = scmp.eq.s32.totalorder %s49, 0
      %p296 = por %p294, %p295
      %s298 = sadd.s32 %s297, 1
      %p301 = scmp.eq.s32.totalorder %s43, 1
      %p302 = scmp.ne.s32.totalorder %s297, %s299
      %p303 = scmp.eq.s32.totalorder %s43, 0
      %p304 = por %p302, %p303
      %p305 = scmp.ne.s32.totalorder %s297, %s299
      %p306 = scmp.eq.s32.totalorder %s48, 1
      %p307 = por %p305, %p306
      %p308 = scmp.ne.s32.totalorder %s299, %s300
      %p309 = scmp.eq.s32.totalorder %s48, 0
      %p310 = por %p308, %p309
      %p311 = scmp.ne.s32.totalorder %s299, %s300
      %p312 = scmp.eq.s32.totalorder %s49, 1
      %p313 = por %p311, %p312
      %p315 = scmp.ne.s32.totalorder %s300, %s314
      %p316 = scmp.eq.s32.totalorder %s49, 0
      %p317 = por %p315, %p316
      %s319 = sadd.s32 %s318, 1
      %p322 = scmp.eq.s32.totalorder %s43, 1
      %p323 = scmp.ne.s32.totalorder %s318, %s320
      %p324 = scmp.eq.s32.totalorder %s43, 0
      %p325 = por %p323, %p324
      %p326 = scmp.ne.s32.totalorder %s318, %s320
      %p327 = scmp.eq.s32.totalorder %s48, 1
      %p328 = por %p326, %p327
      %p329 = scmp.ne.s32.totalorder %s320, %s321
      %p330 = scmp.eq.s32.totalorder %s48, 0
      %p331 = por %p329, %p330
      %p332 = scmp.ne.s32.totalorder %s320, %s321
      %p333 = scmp.eq.s32.totalorder %s49, 1
      %p334 = por %p332, %p333
      %p336 = scmp.ne.s32.totalorder %s321, %s335
      %p337 = scmp.eq.s32.totalorder %s49, 0
      %p338 = por %p336, %p337
      %s340 = sadd.s32 %s339, 1
      %p343 = scmp.eq.s32.totalorder %s43, 1
      %p344 = scmp.ne.s32.totalorder %s339, %s341
      %p345 = scmp.eq.s32.totalorder %s43, 0
      %p346 = por %p344, %p345
      %p347 = scmp.ne.s32.totalorder %s339, %s341
      %p348 = scmp.eq.s32.totalorder %s48, 1
      %p349 = por %p347, %p348
      %p350 = scmp.ne.s32.totalorder %s341, %s342
      %p351 = scmp.eq.s32.totalorder %s48, 0
      %p352 = por %p350, %p351
      %p353 = scmp.ne.s32.totalorder %s341, %s342
      %p354 = scmp.eq.s32.totalorder %s49, 1
      %p355 = por %p353, %p354
      %p357 = scmp.ne.s32.totalorder %s342, %s356
      %p358 = scmp.eq.s32.totalorder %s49, 0
      %p359 = por %p357, %p358
      %s361 = sadd.s32 %s360, 1
      %p364 = scmp.eq.s32.totalorder %s43, 1
      %p365 = scmp.ne.s32.totalorder %s360, %s362
      %p366 = scmp.eq.s32.totalorder %s43, 0
      %p367 = por %p365, %p366
      %p368 = scmp.ne.s32.totalorder %s360, %s362
      %p369 = scmp.eq.s32.totalorder %s48, 1
      %p370 = por %p368, %p369
      %p371 = scmp.ne.s32.totalorder %s362, %s363
      %p372 = scmp.eq.s32.totalorder %s48, 0
      %p373 = por %p371, %p372
      %p374 = scmp.ne.s32.totalorder %s362, %s363
      %p375 = scmp.eq.s32.totalorder %s49, 1
      %p376 = por %p374, %p375
      %p378 = scmp.ne.s32.totalorder %s363, %s377
      %p379 = scmp.eq.s32.totalorder %s49, 0
      %p380 = por %p378, %p379
      %s382 = sadd.s32 %s381, 1
      %p385 = scmp.eq.s32.totalorder %s43, 1
      %p386 = scmp.ne.s32.totalorder %s381, %s383
      %p387 = scmp.eq.s32.totalorder %s43, 0
      %p388 = por %p386, %p387
      %p389 = scmp.ne.s32.totalorder %s381, %s383
      %p390 = scmp.eq.s32.totalorder %s48, 1
      %p391 = por %p389, %p390
      %p392 = scmp.ne.s32.totalorder %s383, %s384
      %p393 = scmp.eq.s32.totalorder %s48, 0
      %p394 = por %p392, %p393
      %p395 = scmp.ne.s32.totalorder %s383, %s384
      %p396 = scmp.eq.s32.totalorder %s49, 1
      %p397 = por %p395, %p396
      %p399 = scmp.ne.s32.totalorder %s384, %s398
      %p400 = scmp.eq.s32.totalorder %s49, 0
      %p401 = por %p399, %p400
      %s403 = sadd.s32 %s402, 1
      %p406 = scmp.eq.s32.totalorder %s43, 1
      %p407 = scmp.ne.s32.totalorder %s402, %s404
      %p408 = scmp.eq.s32.totalorder %s43, 0
      %p409 = por %p407, %p408
      %p410 = scmp.ne.s32.totalorder %s402, %s404
      %p411 = scmp.eq.s32.totalorder %s48, 1
      %p412 = por %p410, %p411
      %p413 = scmp.ne.s32.totalorder %s404, %s405
      %p414 = scmp.eq.s32.totalorder %s48, 0
      %p415 = por %p413, %p414
      %p416 = scmp.ne.s32.totalorder %s404, %s405
      %p417 = scmp.eq.s32.totalorder %s49, 1
      %p418 = por %p416, %p417
      %p420 = scmp.ne.s32.totalorder %s405, %s419
      %p421 = scmp.eq.s32.totalorder %s49, 0
      %p422 = por %p420, %p421
      %s424 = sadd.s32 %s423, 1
      %p427 = scmp.eq.s32.totalorder %s43, 1
      %p428 = scmp.ne.s32.totalorder %s423, %s425
      %p429 = scmp.eq.s32.totalorder %s43, 0
      %p430 = por %p428, %p429
      %p431 = scmp.ne.s32.totalorder %s423, %s425
      %p432 = scmp.eq.s32.totalorder %s48, 1
      %p433 = por %p431, %p432
      %p434 = scmp.ne.s32.totalorder %s425, %s426
      %p435 = scmp.eq.s32.totalorder %s48, 0
      %p436 = por %p434, %p435
      %p437 = scmp.ne.s32.totalorder %s425, %s426
      %p438 = scmp.eq.s32.totalorder %s49, 1
      %p439 = por %p437, %p438
      %p441 = scmp.ne.s32.totalorder %s426, %s440
      %p442 = scmp.eq.s32.totalorder %s49, 0
      %p443 = por %p441, %p442
      %s445 = sadd.s32 %s444, 1
      %p448 = scmp.eq.s32.totalorder %s43, 1
      %p449 = scmp.ne.s32.totalorder %s444, %s446
      %p450 = scmp.eq.s32.totalorder %s43, 0
      %p451 = por %p449, %p450
      %p452 = scmp.ne.s32.totalorder %s444, %s446
      %p453 = scmp.eq.s32.totalorder %s48, 1
      %p454 = por %p452, %p453
      %p455 = scmp.ne.s32.totalorder %s446, %s447
      %p456 = scmp.eq.s32.totalorder %s48, 0
      %p457 = por %p455, %p456
      %p458 = scmp.ne.s32.totalorder %s446, %s447
      %p459 = scmp.eq.s32.totalorder %s49, 1
      %p460 = por %p458, %p459
      %p462 = scmp.ne.s32.totalorder %s447, %s461
      %p463 = scmp.eq.s32.totalorder %s49, 0
      %p464 = por %p462, %p463
      %s466 = sadd.s32 %s465, 1
      %p469 = scmp.eq.s32.totalorder %s43, 1
      %p470 = scmp.ne.s32.totalorder %s465, %s467
      %p471 = scmp.eq.s32.totalorder %s43, 0
      %p472 = por %p470, %p471
      %p473 = scmp.ne.s32.totalorder %s465, %s467
      %p474 = scmp.eq.s32.totalorder %s48, 1
      %p475 = por %p473, %p474
      %p476 = scmp.ne.s32.totalorder %s467, %s468
      %p477 = scmp.eq.s32.totalorder %s48, 0
      %p478 = por %p476, %p477
      %p479 = scmp.ne.s32.totalorder %s467, %s468
      %p480 = scmp.eq.s32.totalorder %s49, 1
      %p481 = por %p479, %p480
      %p483 = scmp.ne.s32.totalorder %s468, %s482
      %p484 = scmp.eq.s32.totalorder %s49, 0
      %p485 = por %p483, %p484
      %s487 = sadd.s32 %s486, 1
      %p490 = scmp.eq.s32.totalorder %s43, 1
      %p491 = scmp.ne.s32.totalorder %s486, %s488
      %p492 = scmp.eq.s32.totalorder %s43, 0
      %p493 = por %p491, %p492
      %p494 = scmp.ne.s32.totalorder %s486, %s488
      %p495 = scmp.eq.s32.totalorder %s48, 1
      %p496 = por %p494, %p495
      %p497 = scmp.ne.s32.totalorder %s488, %s489
      %p498 = scmp.eq.s32.totalorder %s48, 0
      %p499 = por %p497, %p498
      %p500 = scmp.ne.s32.totalorder %s488, %s489
      %p501 = scmp.eq.s32.totalorder %s49, 1
      %p502 = por %p500, %p501
      %p504 = scmp.ne.s32.totalorder %s489, %s503
      %p505 = scmp.eq.s32.totalorder %s49, 0
      %p506 = por %p504, %p505
      %s508 = sadd.s32 %s507, 1
      %p511 = scmp.eq.s32.totalorder %s43, 1
      %p512 = scmp.ne.s32.totalorder %s507, %s509
      %p513 = scmp.eq.s32.totalorder %s43, 0
      %p514 = por %p512, %p513
      %p515 = scmp.ne.s32.totalorder %s507, %s509
      %p516 = scmp.eq.s32.totalorder %s48, 1
      %p517 = por %p515, %p516
      %p518 = scmp.ne.s32.totalorder %s509, %s510
      %p519 = scmp.eq.s32.totalorder %s48, 0
      %p520 = por %p518, %p519
      %p521 = scmp.ne.s32.totalorder %s509, %s510
      %p522 = scmp.eq.s32.totalorder %s49, 1
      %p523 = por %p521, %p522
      %p525 = scmp.ne.s32.totalorder %s510, %s524
      %p526 = scmp.eq.s32.totalorder %s49, 0
      %p527 = por %p525, %p526
      %s529 = sadd.s32 %s528, 1
      %p532 = scmp.eq.s32.totalorder %s43, 1
      %p533 = scmp.ne.s32.totalorder %s528, %s530
      %p534 = scmp.eq.s32.totalorder %s43, 0
      %p535 = por %p533, %p534
      %p536 = scmp.ne.s32.totalorder %s528, %s530
      %p537 = scmp.eq.s32.totalorder %s48, 1
      %p538 = por %p536, %p537
      %p539 = scmp.ne.s32.totalorder %s530, %s531
      %p540 = scmp.eq.s32.totalorder %s48, 0
      %p541 = por %p539, %p540
      %p542 = scmp.ne.s32.totalorder %s530, %s531
      %p543 = scmp.eq.s32.totalorder %s49, 1
      %p544 = por %p542, %p543
      %p546 = scmp.ne.s32.totalorder %s531, %s545
      %p547 = scmp.eq.s32.totalorder %s49, 0
      %p548 = por %p546, %p547
      %s550 = sadd.s32 %s549, 1
      %p553 = scmp.eq.s32.totalorder %s43, 1
      %p554 = scmp.ne.s32.totalorder %s549, %s551
      %p555 = scmp.eq.s32.totalorder %s43, 0
      %p556 = por %p554, %p555
      %p557 = scmp.ne.s32.totalorder %s549, %s551
      %p558 = scmp.eq.s32.totalorder %s48, 1
      %p559 = por %p557, %p558
      %p560 = scmp.ne.s32.totalorder %s551, %s552
      %p561 = scmp.eq.s32.totalorder %s48, 0
      %p562 = por %p560, %p561
      %p563 = scmp.ne.s32.totalorder %s551, %s552
      %p564 = scmp.eq.s32.totalorder %s49, 1
      %p565 = por %p563, %p564
      %p567 = scmp.ne.s32.totalorder %s552, %s566
      %p568 = scmp.eq.s32.totalorder %s49, 0
      %p569 = por %p567, %p568
      %s571 = sadd.s32 %s570, 1
      %p574 = scmp.eq.s32.totalorder %s43, 1
      %p575 = scmp.ne.s32.totalorder %s570, %s572
      %p576 = scmp.eq.s32.totalorder %s43, 0
      %p577 = por %p575, %p576
      %p578 = scmp.ne.s32.totalorder %s570, %s572
      %p579 = scmp.eq.s32.totalorder %s48, 1
      %p580 = por %p578, %p579
      %p581 = scmp.ne.s32.totalorder %s572, %s573
      %p582 = scmp.eq.s32.totalorder %s48, 0
      %p583 = por %p581, %p582
      %p584 = scmp.ne.s32.totalorder %s572, %s573
      %p585 = scmp.eq.s32.totalorder %s49, 1
      %p586 = por %p584, %p585
      %p588 = scmp.ne.s32.totalorder %s573, %s587
      %p589 = scmp.eq.s32.totalorder %s49, 0
      %p590 = por %p588, %p589
      %s592 = sadd.s32 %s591, 1
      %p595 = scmp.eq.s32.totalorder %s43, 1
      %p596 = scmp.ne.s32.totalorder %s591, %s593
      %p597 = scmp.eq.s32.totalorder %s43, 0
      %p598 = por %p596, %p597
      %p599 = scmp.ne.s32.totalorder %s591, %s593
      %p600 = scmp.eq.s32.totalorder %s48, 1
      %p601 = por %p599, %p600
      %p602 = scmp.ne.s32.totalorder %s593, %s594
      %p603 = scmp.eq.s32.totalorder %s48, 0
      %p604 = por %p602, %p603
      %p605 = scmp.ne.s32.totalorder %s593, %s594
      %p606 = scmp.eq.s32.totalorder %s49, 1
      %p607 = por %p605, %p606
      %p609 = scmp.ne.s32.totalorder %s594, %s608
      %p610 = scmp.eq.s32.totalorder %s49, 0
      %p611 = por %p609, %p610
      %s612 = ssub.s32 %s43, %s50
      %p613 = scmp.eq.s32.totalorder %s612, 0
      %s615 = sadd.s32 %s614, 1
      %s616 = scalar_select %p613, %s614, %s615
      %p619 = pneg %p613
      %p620 = scmp.eq.s32.totalorder %s43, 1
      %p621 = por %p619, %p620
      %p622 = scmp.ne.s32.totalorder %s614, %s617
      %p623 = scmp.eq.s32.totalorder %s43, 0
      %p624 = por %p622, %p623
      %p625 = scmp.ne.s32.totalorder %s614, %s617
      %p626 = scmp.eq.s32.totalorder %s48, 1
      %p627 = por %p625, %p626
      %p628 = scmp.ne.s32.totalorder %s617, %s618
      %p629 = scmp.eq.s32.totalorder %s48, 0
      %p630 = por %p628, %p629
      %p631 = scmp.ne.s32.totalorder %s617, %s618
      %p632 = scmp.eq.s32.totalorder %s49, 1
      %p633 = por %p631, %p632
      %p635 = scmp.ne.s32.totalorder %s618, %s634
      %p636 = scmp.eq.s32.totalorder %s49, 0
      %p637 = por %p635, %p636
      %p638 = scmp.le.s32.totalorder 1, %s43
      %p639 = scmp.lt.s32.totalorder %s43, 3
      %p640 = pnand %p638, %p639
      %p641 = pneg %p640
      // Predicated region
      $region9: #{tpu_custom_call.1} parent=5 // pred_check
        _
      $region10: #{tpu_custom_call.1} parent=5 // pred_check_branch
        %643 = sbr.rel (%p640) target = $region12
      $region11: #{tpu_custom_call.1} parent=5 // pred_region
        %s644 = ssub.s32 %s43, 1
        // Predicated region
        $region13: #{tpu_custom_call.1} parent=11 // pred_check
          %p645 = pneg %p142
        $region14: #{tpu_custom_call.1} parent=11 // pred_check_branch
          %647 = sbr.rel (%p645) target = $region16
        $region15: #{tpu_custom_call.1} parent=11 // pred_region
          %649 = vsyncadd [#allocation9], 0
          %s651 = sshll.u32 %s3, 4
          %s652 = int_to_ptr.hbm [resolvable:$true] %s651
          %s653 = sshll.u32 [#allocation8], 4
          %s654 = int_to_ptr.vmem [resolvable:$true] %s653
          %656 = dma.hbm_to_vmem [thread:$0]  %s652, 128, %s654, [#allocation9]
        $region16: #{tpu_custom_call.1} parent=11 // pred_fallthru
          _
        // Predicated region
        $region17: #{tpu_custom_call.1} parent=11 // pred_check
          %p657 = pneg %p163
        $region18: #{tpu_custom_call.1} parent=11 // pred_check_branch
          %659 = sbr.rel (%p657) target = $region20
        $region19: #{tpu_custom_call.1} parent=11 // pred_region
          _
        $region20: #{tpu_custom_call.1} parent=11 // pred_fallthru
          _
        // Predicated region
        $region21: #{tpu_custom_call.1} parent=11 // pred_check
          %p660 = pneg %p184
        $region22: #{tpu_custom_call.1} parent=11 // pred_check_branch
          %662 = sbr.rel (%p660) target = $region24
        $region23: #{tpu_custom_call.1} parent=11 // pred_region
          _
        $region24: #{tpu_custom_call.1} parent=11 // pred_fallthru
          _
        // Predicated region
        $region25: #{tpu_custom_call.1} parent=11 // pred_check
          %p663 = pneg %p205
        $region26: #{tpu_custom_call.1} parent=11 // pred_check_branch
          %665 = sbr.rel (%p663) target = $region28
        $region27: #{tpu_custom_call.1} parent=11 // pred_region
          _
        $region28: #{tpu_custom_call.1} parent=11 // pred_fallthru
          _
        // Predicated region
        $region29: #{tpu_custom_call.1} parent=11 // pred_check
          %p666 = pneg %p226
        $region30: #{tpu_custom_call.1} parent=11 // pred_check_branch
          %668 = sbr.rel (%p666) target = $region32
        $region31: #{tpu_custom_call.1} parent=11 // pred_region
          _
        $region32: #{tpu_custom_call.1} parent=11 // pred_fallthru
          _
        // Predicated region
        $region33: #{tpu_custom_call.1} parent=11 // pred_check
          %p669 = pneg %p247
        $region34: #{tpu_custom_call.1} parent=11 // pred_check_branch
          %671 = sbr.rel (%p669) target = $region36
        $region35: #{tpu_custom_call.1} parent=11 // pred_region
          _
        $region36: #{tpu_custom_call.1} parent=11 // pred_fallthru
          _
        // Predicated region
        $region37: #{tpu_custom_call.1} parent=11 // pred_check
          %p672 = pneg %p268
        $region38: #{tpu_custom_call.1} parent=11 // pred_check_branch
          %674 = sbr.rel (%p672) target = $region40
        $region39: #{tpu_custom_call.1} parent=11 // pred_region
          _
        $region40: #{tpu_custom_call.1} parent=11 // pred_fallthru
          _
        // Predicated region
        $region41: #{tpu_custom_call.1} parent=11 // pred_check
          %p675 = pneg %p289
        $region42: #{tpu_custom_call.1} parent=11 // pred_check_branch
          %677 = sbr.rel (%p675) target = $region44
        $region43: #{tpu_custom_call.1} parent=11 // pred_region
          %679 = vsyncadd [#allocation9], 0
          %s680 = sshll.u32 %s10, 4
          %s681 = int_to_ptr.hbm [resolvable:$true] %s680
          %s682 = sshll.u32 [#allocation10], 4
          %s683 = int_to_ptr.vmem [resolvable:$true] %s682
          %688 = dma.hbm_to_vmem [thread:$0]  %s681, 512, %s683, [#allocation9], 128, 128, 8
        $region44: #{tpu_custom_call.1} parent=11 // pred_fallthru
          _
        // Predicated region
        $region45: #{tpu_custom_call.1} parent=11 // pred_check
          %p689 = pneg %p310
        $region46: #{tpu_custom_call.1} parent=11 // pred_check_branch
          %691 = sbr.rel (%p689) target = $region48
        $region47: #{tpu_custom_call.1} parent=11 // pred_region
          _
        $region48: #{tpu_custom_call.1} parent=11 // pred_fallthru
          _
        // Predicated region
        $region49: #{tpu_custom_call.1} parent=11 // pred_check
          %p692 = pneg %p331
        $region50: #{tpu_custom_call.1} parent=11 // pred_check_branch
          %694 = sbr.rel (%p692) target = $region52
        $region51: #{tpu_custom_call.1} parent=11 // pred_region
          %696 = vsyncadd [#allocation12], 0
          %s697 = sshll.u32 %s12, 4
          %s698 = int_to_ptr.hbm [resolvable:$true] %s697
          %s699 = sshll.u32 [#allocation11], 4
          %s700 = int_to_ptr.vmem [resolvable:$true] %s699
          %705 = dma.hbm_to_vmem [thread:$0]  %s698, 512, %s700, [#allocation12], 128, 128, 8
        $region52: #{tpu_custom_call.1} parent=11 // pred_fallthru
          _
        // Predicated region
        $region53: #{tpu_custom_call.1} parent=11 // pred_check
          %p706 = pneg %p352
        $region54: #{tpu_custom_call.1} parent=11 // pred_check_branch
          %708 = sbr.rel (%p706) target = $region56
        $region55: #{tpu_custom_call.1} parent=11 // pred_region
          _
        $region56: #{tpu_custom_call.1} parent=11 // pred_fallthru
          _
        // Predicated region
        $region57: #{tpu_custom_call.1} parent=11 // pred_check
          %p709 = pneg %p373
        $region58: #{tpu_custom_call.1} parent=11 // pred_check_branch
          %711 = sbr.rel (%p709) target = $region60
        $region59: #{tpu_custom_call.1} parent=11 // pred_region
          %713 = vsyncadd [#allocation12], 0
          %s714 = sshll.u32 %s14, 4
          %s715 = int_to_ptr.hbm [resolvable:$true] %s714
          %s716 = sshll.u32 [#allocation13], 4
          %s717 = int_to_ptr.vmem [resolvable:$true] %s716
          %722 = dma.hbm_to_vmem [thread:$0]  %s715, 512, %s717, [#allocation12], 128, 128, 8
        $region60: #{tpu_custom_call.1} parent=11 // pred_fallthru
          _
        // Predicated region
        $region61: #{tpu_custom_call.1} parent=11 // pred_check
          %p723 = pneg %p394
        $region62: #{tpu_custom_call.1} parent=11 // pred_check_branch
          %725 = sbr.rel (%p723) target = $region64
        $region63: #{tpu_custom_call.1} parent=11 // pred_region
          _
        $region64: #{tpu_custom_call.1} parent=11 // pred_fallthru
          _
        // Predicated region
        $region65: #{tpu_custom_call.1} parent=11 // pred_check
          %p726 = pneg %p415
        $region66: #{tpu_custom_call.1} parent=11 // pred_check_branch
          %728 = sbr.rel (%p726) target = $region68
        $region67: #{tpu_custom_call.1} parent=11 // pred_region
          _
        $region68: #{tpu_custom_call.1} parent=11 // pred_fallthru
          _
        // Predicated region
        $region69: #{tpu_custom_call.1} parent=11 // pred_check
          %p729 = pneg %p436
        $region70: #{tpu_custom_call.1} parent=11 // pred_check_branch
          %731 = sbr.rel (%p729) target = $region72
        $region71: #{tpu_custom_call.1} parent=11 // pred_region
          _
        $region72: #{tpu_custom_call.1} parent=11 // pred_fallthru
          _
        // Predicated region
        $region73: #{tpu_custom_call.1} parent=11 // pred_check
          %p732 = pneg %p457
        $region74: #{tpu_custom_call.1} parent=11 // pred_check_branch
          %734 = sbr.rel (%p732) target = $region76
        $region75: #{tpu_custom_call.1} parent=11 // pred_region
          _
        $region76: #{tpu_custom_call.1} parent=11 // pred_fallthru
          _
        // Predicated region
        $region77: #{tpu_custom_call.1} parent=11 // pred_check
          %p735 = pneg %p478
        $region78: #{tpu_custom_call.1} parent=11 // pred_check_branch
          %737 = sbr.rel (%p735) target = $region80
        $region79: #{tpu_custom_call.1} parent=11 // pred_region
          _
        $region80: #{tpu_custom_call.1} parent=11 // pred_fallthru
          _
        // Predicated region
        $region81: #{tpu_custom_call.1} parent=11 // pred_check
          %p738 = pneg %p499
        $region82: #{tpu_custom_call.1} parent=11 // pred_check_branch
          %740 = sbr.rel (%p738) target = $region84
        $region83: #{tpu_custom_call.1} parent=11 // pred_region
          _
        $region84: #{tpu_custom_call.1} parent=11 // pred_fallthru
          _
        // Predicated region
        $region85: #{tpu_custom_call.1} parent=11 // pred_check
          %p741 = pneg %p520
        $region86: #{tpu_custom_call.1} parent=11 // pred_check_branch
          %743 = sbr.rel (%p741) target = $region88
        $region87: #{tpu_custom_call.1} parent=11 // pred_region
          _
        $region88: #{tpu_custom_call.1} parent=11 // pred_fallthru
          _
        // Predicated region
        $region89: #{tpu_custom_call.1} parent=11 // pred_check
          %p744 = pneg %p541
        $region90: #{tpu_custom_call.1} parent=11 // pred_check_branch
          %746 = sbr.rel (%p744) target = $region92
        $region91: #{tpu_custom_call.1} parent=11 // pred_region
          _
        $region92: #{tpu_custom_call.1} parent=11 // pred_fallthru
          _
        // Predicated region
        $region93: #{tpu_custom_call.1} parent=11 // pred_check
          %p747 = pneg %p562
        $region94: #{tpu_custom_call.1} parent=11 // pred_check_branch
          %749 = sbr.rel (%p747) target = $region96
        $region95: #{tpu_custom_call.1} parent=11 // pred_region
          _
        $region96: #{tpu_custom_call.1} parent=11 // pred_fallthru
          _
        // Predicated region
        $region97: #{tpu_custom_call.1} parent=11 // pred_check
          %p750 = pneg %p583
        $region98: #{tpu_custom_call.1} parent=11 // pred_check_branch
          %752 = sbr.rel (%p750) target = $region100
        $region99: #{tpu_custom_call.1} parent=11 // pred_region
          _
        $region100: #{tpu_custom_call.1} parent=11 // pred_fallthru
          _
        // Predicated region
        $region101: #{tpu_custom_call.1} parent=11 // pred_check
          %p753 = pneg %p604
        $region102: #{tpu_custom_call.1} parent=11 // pred_check_branch
          %755 = sbr.rel (%p753) target = $region104
        $region103: #{tpu_custom_call.1} parent=11 // pred_region
          _
        $region104: #{tpu_custom_call.1} parent=11 // pred_fallthru
          _
      $region12: #{tpu_custom_call.1} parent=5 // pred_fallthru
        _
      %p756 = scmp.lt.s32.totalorder %s43, 2
      // Predicated region
      $region105: #{tpu_custom_call.1} parent=5 // pred_check
        %p757 = pneg %p756
      $region106: #{tpu_custom_call.1} parent=5 // pred_check_branch
        %759 = sbr.rel (%p757) target = $region108
      $region107: #{tpu_custom_call.1} parent=5 // pred_region
        // Predicated region
        $region109: #{tpu_custom_call.1} parent=107 // pred_check
          %p760 = pneg %p63
        $region110: #{tpu_custom_call.1} parent=107 // pred_check_branch
          %762 = sbr.rel (%p760) target = $region112
        $region111: #{tpu_custom_call.1} parent=107 // pred_region
          %s763 = sand.u32 %s53, 1
          %s764 = scalar_lea.sflag [#allocation3], %s763
          %s765 = sand.u32 %s53, 1
          %s766 = smul.addr %s765, 8
          %s767 = scalar_lea.vmem [#allocation2], %s766
          %769 = vsyncadd %s764, 0
          %s770 = smul.addr %s43, 8
          %s771 = scalar_lea.hbm %s0, %s770
          %s773 = sshll.u32 %s771, 4
          %s774 = int_to_ptr.hbm [resolvable:$true] %s773
          %s775 = sshll.u32 %s767, 4
          %s776 = int_to_ptr.vmem [resolvable:$true] %s775
          %778 = dma.hbm_to_vmem [thread:$0]  %s774, 128, %s776, %s764
        $region112: #{tpu_custom_call.1} parent=107 // pred_fallthru
          _
        // Predicated region
        $region113: #{tpu_custom_call.1} parent=107 // pred_check
          %p779 = pneg %p89
        $region114: #{tpu_custom_call.1} parent=107 // pred_check_branch
          %781 = sbr.rel (%p779) target = $region116
        $region115: #{tpu_custom_call.1} parent=107 // pred_region
          %s782 = sand.u32 %s43, 1
          %s783 = scalar_lea.sflag [#allocation6], %s782
          %s784 = sand.u32 %s79, 1
          %s785 = smul.addr %s784, 8
          %s786 = scalar_lea.vmem [#allocation5], %s785
          %788 = vsyncadd %s783, 0
          %s789 = smul.addr %s43, 8
          %s790 = scalar_lea.hbm %s1, %s789
          %s792 = sshll.u32 %s790, 4
          %s793 = int_to_ptr.hbm [resolvable:$true] %s792
          %s794 = sshll.u32 %s786, 4
          %s795 = int_to_ptr.vmem [resolvable:$true] %s794
          %797 = dma.hbm_to_vmem [thread:$0]  %s793, 128, %s795, %s783
        $region116: #{tpu_custom_call.1} parent=107 // pred_fallthru
          _
        // Predicated region
        $region117: #{tpu_custom_call.1} parent=107 // pred_check
          %p798 = pneg %p115
        $region118: #{tpu_custom_call.1} parent=107 // pred_check_branch
          %800 = sbr.rel (%p798) target = $region120
        $region119: #{tpu_custom_call.1} parent=107 // pred_region
          %s801 = sand.u32 %s43, 1
          %s802 = scalar_lea.sflag [#allocation6], %s801
          %s803 = sand.u32 %s105, 1
          %s804 = scalar_lea.vmem [#allocation7], %s803
          %806 = vsyncadd %s802, 0
          %s807 = scalar_lea.hbm %s2, %s43
          %s809 = sshll.u32 %s807, 4
          %s810 = int_to_ptr.hbm [resolvable:$true] %s809
          %s811 = sshll.u32 %s804, 4
          %s812 = int_to_ptr.vmem [resolvable:$true] %s811
          %814 = dma.hbm_to_vmem [thread:$0]  %s810, 16, %s812, %s802
        $region120: #{tpu_custom_call.1} parent=107 // pred_fallthru
          _
      $region108: #{tpu_custom_call.1} parent=5 // pred_fallthru
        _
      %p815 = scmp.le.s32.totalorder 1, %s43
      %p816 = scmp.lt.s32.totalorder %s43, 3
      %p817 = pnand %p815, %p816
      %p818 = pneg %p817
      // Predicated region
      $region121: #{tpu_custom_call.1} parent=5 // pred_check
        _
      $region122: #{tpu_custom_call.1} parent=5 // pred_check_branch
        %820 = sbr.rel (%p817) target = $region124
      $region123: #{tpu_custom_call.1} parent=5 // pred_region
        %s821 = ssub.s32 %s43, 1
        %s822 = sand.u32 %s56, 1
        %s823 = scalar_lea.sflag [#allocation3], %s822
        %s824 = sand.u32 %s56, 1
        %s825 = smul.addr %s824, 8
        %s826 = scalar_lea.vmem [#allocation2], %s825
        // Predicated region
        $region125: #{tpu_custom_call.1} parent=123 // pred_check
          %p827 = pneg %p69
        $region126: #{tpu_custom_call.1} parent=123 // pred_check_branch
          %829 = sbr.rel (%p827) target = $region128
        $region127: #{tpu_custom_call.1} parent=123 // pred_region
          %831 = dma.done %s823, 128
        $region128: #{tpu_custom_call.1} parent=123 // pred_fallthru
          _
        %s832 = sand.u32 %s48, 1
        %s833 = scalar_lea.sflag [#allocation6], %s832
        %s834 = sand.u32 %s82, 1
        %s835 = smul.addr %s834, 8
        %s836 = scalar_lea.vmem [#allocation5], %s835
        // Predicated region
        $region129: #{tpu_custom_call.1} parent=123 // pred_check
          %p837 = pneg %p95
        $region130: #{tpu_custom_call.1} parent=123 // pred_check_branch
          %839 = sbr.rel (%p837) target = $region132
        $region131: #{tpu_custom_call.1} parent=123 // pred_region
          %841 = dma.done %s833, 128
        $region132: #{tpu_custom_call.1} parent=123 // pred_fallthru
          _
        %s842 = sand.u32 %s48, 1
        %s843 = scalar_lea.sflag [#allocation6], %s842
        %s844 = sand.u32 %s108, 1
        %s845 = scalar_lea.vmem [#allocation7], %s844
        // Predicated region
        $region133: #{tpu_custom_call.1} parent=123 // pred_check
          %p846 = pneg %p121
        $region134: #{tpu_custom_call.1} parent=123 // pred_check_branch
          %848 = sbr.rel (%p846) target = $region136
        $region135: #{tpu_custom_call.1} parent=123 // pred_region
          %850 = dma.done %s843, 16
        $region136: #{tpu_custom_call.1} parent=123 // pred_fallthru
          _
        // Predicated region
        $region137: #{tpu_custom_call.1} parent=123 // pred_check
          %p851 = pneg %p142
        $region138: #{tpu_custom_call.1} parent=123 // pred_check_branch
          %853 = sbr.rel (%p851) target = $region140
        $region139: #{tpu_custom_call.1} parent=123 // pred_region
          %855 = dma.done [#allocation9], 128
        $region140: #{tpu_custom_call.1} parent=123 // pred_fallthru
          _
        // Predicated region
        $region141: #{tpu_custom_call.1} parent=123 // pred_check
          %p856 = pneg %p289
        $region142: #{tpu_custom_call.1} parent=123 // pred_check_branch
          %858 = sbr.rel (%p856) target = $region144
        $region143: #{tpu_custom_call.1} parent=123 // pred_region
          %860 = dma.done [#allocation9], 512
        $region144: #{tpu_custom_call.1} parent=123 // pred_fallthru
          _
        // Predicated region
        $region145: #{tpu_custom_call.1} parent=123 // pred_check
          %p861 = pneg %p331
        $region146: #{tpu_custom_call.1} parent=123 // pred_check_branch
          %863 = sbr.rel (%p861) target = $region148
        $region147: #{tpu_custom_call.1} parent=123 // pred_region
          %865 = dma.done [#allocation12], 512
        $region148: #{tpu_custom_call.1} parent=123 // pred_fallthru
          _
        // Predicated region
        $region149: #{tpu_custom_call.1} parent=123 // pred_check
          %p866 = pneg %p373
        $region150: #{tpu_custom_call.1} parent=123 // pred_check_branch
          %868 = sbr.rel (%p866) target = $region152
        $region151: #{tpu_custom_call.1} parent=123 // pred_region
          %870 = dma.done [#allocation12], 512
        $region152: #{tpu_custom_call.1} parent=123 // pred_fallthru
          _
        %s871 = sand.u32 %s56, 1
        %s872 = scalar_lea.sflag [#allocation3], %s871
        %s873 = sand.u32 %s56, 1
        %s874 = smul.addr %s873, 8
        %s875 = scalar_lea.vmem [#allocation2], %s874
        %p876 = pneg %p69
        %p877 = pneg %p66
        %s878 = sand.u32 %s48, 1
        %s879 = scalar_lea.sflag [#allocation6], %s878
        %s880 = sand.u32 %s82, 1
        %s881 = smul.addr %s880, 8
        %s882 = scalar_lea.vmem [#allocation5], %s881
        %p883 = pneg %p95
        %p884 = pneg %p92
        %s885 = sand.u32 %s48, 1
        %s886 = scalar_lea.sflag [#allocation6], %s885
        %s887 = sand.u32 %s108, 1
        %s888 = scalar_lea.vmem [#allocation7], %s887
        %p889 = pneg %p121
        %p890 = pneg %p118
        %p891 = pneg %p142
        %p892 = pneg %p139
        %p893 = pneg %p163
        %p894 = pneg %p160
        %p895 = pneg %p184
        %p896 = pneg %p181
        %p897 = pneg %p205
        %p898 = pneg %p202
        %p899 = pneg %p226
        %p900 = pneg %p223
        %p901 = pneg %p247
        %p902 = pneg %p244
        %p903 = pneg %p268
        %p904 = pneg %p265
        %p905 = pneg %p289
        %p906 = pneg %p286
        %p907 = pneg %p310
        %p908 = pneg %p307
        %p909 = pneg %p331
        %p910 = pneg %p328
        %p911 = pneg %p352
        %p912 = pneg %p349
        %p913 = pneg %p373
        %p914 = pneg %p370
        %p915 = pneg %p394
        %p916 = pneg %p391
        %p917 = pneg %p415
        %p918 = pneg %p412
        %p919 = pneg %p436
        %p920 = pneg %p433
        %p921 = pneg %p457
        %p922 = pneg %p454
        %p923 = pneg %p478
        %p924 = pneg %p475
        %p925 = pneg %p499
        %p926 = pneg %p496
        %p927 = pneg %p520
        %p928 = pneg %p517
        %p929 = pneg %p541
        %p930 = pneg %p538
        %p931 = pneg %p562
        %p932 = pneg %p559
        %p933 = pneg %p583
        %p934 = pneg %p580
        %p935 = pneg %p604
        %p936 = pneg %p601
        %p937 = pneg %p630
        %p938 = pneg %p627
        %s939 = sand.u32 %s617, 1
        %s940 = scalar_lea.sflag [#allocation4], %s939
        %s941 = sand.u32 %s617, 1
        %s942 = smul.addr %s941, 8
        %s943 = scalar_lea.vmem [#allocation14], %s942
        %v944 = vld [vmem:[%s826] sm:$0xff]
        %v945 = vld [vmem:[%s836] sm:$0xff]
        %v946 = vld [vmem:[%s845] sm:$0x1]
        %v947 = vld [vmem:[#allocation8] sm:$0xff]
        %v948 = vld [vmem:[%s4] sm:$0xff]
        %v949 = vld [vmem:[%s4 + $0x8] sm:$0xff]
        %v950 = vld [vmem:[%s4 + $0x10] sm:$0xff]
        %v951 = vld [vmem:[%s4 + $0x18] sm:$0xff]
        %v952 = vld [vmem:[%s5] sm:$0x1]
        %v953 = vld [vmem:[%s6] sm:$0xff]
        %v954 = vld [vmem:[%s6 + $0x8] sm:$0xff]
        %v955 = vld [vmem:[%s6 + $0x10] sm:$0xff]
        %v956 = vld [vmem:[%s6 + $0x18] sm:$0xff]
        %v957 = vld [vmem:[%s7] sm:$0x1]
        %v958 = vld [vmem:[%s8] sm:$0xff]
        %v959 = vld [vmem:[%s8 + $0x8] sm:$0xff]
        %v960 = vld [vmem:[%s8 + $0x10] sm:$0xff]
        %v961 = vld [vmem:[%s8 + $0x18] sm:$0xff]
        %v962 = vld [vmem:[%s9] sm:$0x1]
        %v963 = vld [vmem:[#allocation10] sm:$0xff]
        %v964 = vld [vmem:[#allocation10 + $0x8] sm:$0xff]
        %v965 = vld [vmem:[#allocation10 + $0x10] sm:$0xff]
        %v966 = vld [vmem:[#allocation10 + $0x18] sm:$0xff]
        %v967 = vld [vmem:[%s11] sm:$0x1]
        %v968 = vld [vmem:[#allocation11] sm:$0xff]
        %v969 = vld [vmem:[#allocation11 + $0x8] sm:$0xff]
        %v970 = vld [vmem:[#allocation11 + $0x10] sm:$0xff]
        %v971 = vld [vmem:[#allocation11 + $0x18] sm:$0xff]
        %v972 = vld [vmem:[%s13] sm:$0x1]
        %v973 = vld [vmem:[#allocation13] sm:$0xff]
        %v974 = vld [vmem:[#allocation13 + $0x8] sm:$0xff]
        %v975 = vld [vmem:[#allocation13 + $0x10] sm:$0xff]
        %v976 = vld [vmem:[#allocation13 + $0x18] sm:$0xff]
        %v977 = vld [vmem:[%s15] sm:$0x1]
        %v978 = vld [vmem:[%s16] sm:$0xff]
        %v979 = vld [vmem:[%s16 + $0x8] sm:$0xff]
        %v980 = vld [vmem:[%s16 + $0x10] sm:$0xff]
        %v981 = vld [vmem:[%s16 + $0x18] sm:$0xff]
        %v982 = vld [vmem:[%s16 + $0x20] sm:$0xff]
        %v983 = vld [vmem:[%s16 + $0x28] sm:$0xff]
        %v984 = vld [vmem:[%s16 + $0x30] sm:$0xff]
        %v985 = vld [vmem:[%s16 + $0x38] sm:$0xff]
        %v986 = vld [vmem:[%s17] sm:$0x1]
        %v987 = vld [vmem:[%s18] sm:$0x1]
        %v988 = vld [vmem:[%s19] sm:$0x1]
        %v989 = vld [vmem:[%s20] sm:$0x1]
        %v990 = vld [vmem:[%s21] sm:$0x1]
        %v991 = vld [vmem:[%s22] sm:$0x1]
        %v992 = vld [vmem:[%s23] sm:$0x1]
        %v993 = vld [vmem:[%s24] sm:$0x1]
        %v994 = vld [vmem:[%s25] sm:$0x1]
        %vm995 = vcmp.eq.f32.partialorder %v947, 0.0
        %vm996 = vcmp.eq.f32.partialorder %v946, 0.0
        %v998 = vperm.slane %v967, 0
        %vm1000 = vcmask 261120
        %v1002 = vsel %vm1000, %v945, 0
        %1004 = vmatpush.msra.mxu0 0.0
        %1005 = vmatpush.msra.mxu0 0.0
        %1006 = vmatpush.msra.mxu0 0.0
        %1007 = vmatpush.msra.mxu0 0.0
        %1008 = vmatpush.msra.mxu0 0.0
        %1009 = vmatpush.msra.mxu0 0.0
        %1010 = vmatpush.msra.mxu0 0.0
        %1011 = vmatpush.msra.mxu0 0.0
        %1012 = vmatpush.msra.mxu0 0.0
        %1013 = vmatpush.msra.mxu0 0.0
        %1014 = vmatpush.msra.mxu0 0.0
        %1015 = vmatpush.msra.mxu0 0.0
        %1016 = vmatpush.msra.mxu0 %v966
        %1017 = vmatpush.msra.mxu0 %v965
        %1018 = vmatpush.msra.mxu0 %v964
        %1019 = vmatpush.msra.mxu0 %v963
        %1020 = vmatmul.f32.gmra.mxu0 %v1002
        %v1021 = vpop.f32.mrf.mxu0
        %v1022 = vadd.f32 %v998, %v1021
        %1023 = vdwg.mxu0
        loop: start=0, step=1, limit=2
        $region153: #{tpu_custom_call.1} parent=123 // loop_pre_header
          _
        $region154: #{tpu_custom_call.1} parent=123 // loop_header
          %s1025 = sphi 0, %s1029
          %p1026 = scmp.ge.s32.totalorder %s1025, 2
          %v1030 = vphi %v944, %v2921
        $region155: #{tpu_custom_call.1} parent=123 // loop_header_branch
          %1028 = sbr.rel (%p1026) target = $region159
        $region156: #{tpu_custom_call.1} parent=123 // loop_body
          %v1031 = vsel %vm1000, %v1030, 0.0
          %1032 = vadd.xlane.f32.xlu0 %v1031
          %v1033 = vpop.xlane.xlu0 %1032
          %v1034 = vrcp.pop 32.0
          %v1035 = vmul.f32 32.0, %v1034
          %v1036 = vsub.f32 1.0, %v1035
          %v1037 = vmul.f32 %v1034, %v1036
          %v1038 = vadd.f32 %v1034, %v1037
          %vm1039 = vweird.f32 %v1034
          %v1040 = vsel %vm1039, %v1034, %v1038
          %v1041 = vmul.f32 %v1033, %v1040
          %v1042 = vsub.f32 %v1030, %v1041
          %v1043 = vmul.f32 %v1042, %v1042
          %v1044 = vsel %vm1000, %v1043, 0.0
          %1045 = vadd.xlane.f32.xlu0 %v1044
          %v1046 = vpop.xlane.xlu0 %1045
          %v1047 = vrcp.pop 31.0
          %v1048 = vmul.f32 31.0, %v1047
          %v1049 = vsub.f32 1.0, %v1048
          %v1050 = vmul.f32 %v1047, %v1049
          %v1051 = vadd.f32 %v1047, %v1050
          %vm1052 = vweird.f32 %v1047
          %v1053 = vsel %vm1052, %v1047, %v1051
          %v1054 = vmul.f32 %v1046, %v1053
          %v1055 = vrsqrt.pop %v1054
          %v1056 = vmul.f32 %v1055, %v1054
          %v1057 = vmul.f32 %v1056, %v1055
          %v1058 = vmul.f32 0.5, %v1057
          %v1059 = vsub.f32 1.5, %v1058
          %v1060 = vmul.f32 %v1055, %v1059
          %v1061 = vmul.f32 %v1054, %v1060
          %vm1062 = vcmp.eq.f32.partialorder %v1054, inf
          %v1063 = vsel %vm1062, %v1054, %v1061
          %vm1064 = vcmp.eq.f32.partialorder %v1054, 0.0
          %v1065 = vand.u32 %v1054, 2147483648
          %v1066 = vsel %vm1064, %v1065, %v1063
          %v1068 = vperm.slane %v987, 0
          %v1070 = vmul.f32 %v1068, %v1042
          %v1071 = vadd.f32 %v1066, 1e-06
          %v1072 = vrcp.pop %v1071
          %v1073 = vmul.f32 %v1071, %v1072
          %v1074 = vsub.f32 1.0, %v1073
          %v1075 = vmul.f32 %v1072, %v1074
          %v1076 = vadd.f32 %v1072, %v1075
          %vm1077 = vweird.f32 %v1071
          %vm1078 = vweird.f32 %v1072
          %vm1079 = vmor %vm1077, %vm1078
          %v1080 = vsel %vm1079, %v1072, %v1076
          %v1081 = vand.u32 2147483647, %v1071
          %vm1082 = vcmp.eq.f32.partialorder %v1081, 8.507059e+37
          %v1083 = vand.u32 %v1071, 2147483648
          %v1084 = vor.u32 1.1754944e-38, %v1083
          %v1085 = vsel %vm1082, %v1084, %v1080
          %v1086 = vmul.f32 %v1070, %v1085
          %v1088 = vperm.slane %v988, 0
          %v1090 = vadd.f32 %v1086, %v1088
          %v1092 = vperm.slane %v952, 0
          %v1095 = vsel %vm1000, %v1090, 0
          %1097 = vmatpush.msra.mxu0 0.0
          %1098 = vmatpush.msra.mxu0 0.0
          %1099 = vmatpush.msra.mxu0 0.0
          %1100 = vmatpush.msra.mxu0 0.0
          %1101 = vmatpush.msra.mxu0 0.0
          %1102 = vmatpush.msra.mxu0 0.0
          %1103 = vmatpush.msra.mxu0 0.0
          %1104 = vmatpush.msra.mxu0 0.0
          %1105 = vmatpush.msra.mxu0 0.0
          %1106 = vmatpush.msra.mxu0 0.0
          %1107 = vmatpush.msra.mxu0 0.0
          %1108 = vmatpush.msra.mxu0 0.0
          %1109 = vmatpush.msra.mxu0 %v951
          %1110 = vmatpush.msra.mxu0 %v950
          %1111 = vmatpush.msra.mxu0 %v949
          %1112 = vmatpush.msra.mxu0 %v948
          %1113 = vmatmul.f32.gmra.mxu0 %v1095
          %v1114 = vpop.f32.mrf.mxu0
          %v1115 = vadd.f32 %v1092, %v1114
          %1116 = vdwg.mxu0
          %1118 = vrot.lane.b32.xlu0 %v1115, 120
          %v1119 = vpop.permute.xlu0 %1118
          %1120 = vrot.lane.b32.xlu0 %v1115, 112
          %v1121 = vpop.permute.xlu0 %1120
          %1122 = vrot.lane.b32.xlu0 %v1115, 104
          %v1123 = vpop.permute.xlu0 %1122
          %1124 = vrot.lane.b32.xlu0 %v1115, 96
          %v1125 = vpop.permute.xlu0 %1124
          %1126 = vrot.lane.b32.xlu0 %v1119, 96
          %v1127 = vpop.permute.xlu0 %1126
          %1128 = vrot.lane.b32.xlu0 %v1121, 96
          %v1129 = vpop.permute.xlu0 %1128
          %1130 = vrot.lane.b32.xlu0 %v1123, 96
          %v1131 = vpop.permute.xlu0 %1130
          %1136 = vxpose.xlu0.b32.start [1/16] %v1125, 128
          %1137 = vxpose.xlu0.b32.cont [2/16] 0.0, 128
          %1138 = vxpose.xlu0.b32.cont [3/16] 0.0, 128
          %1139 = vxpose.xlu0.b32.cont [4/16] 0.0, 128
          %1140 = vxpose.xlu0.b32.cont [5/16] 0.0, 128
          %1141 = vxpose.xlu0.b32.cont [6/16] 0.0, 128
          %1142 = vxpose.xlu0.b32.cont [7/16] 0.0, 128
          %1143 = vxpose.xlu0.b32.cont [8/16] 0.0, 128
          %1144 = vxpose.xlu0.b32.cont [9/16] 0.0, 128
          %1145 = vxpose.xlu0.b32.cont [10/16] 0.0, 128
          %1146 = vxpose.xlu0.b32.cont [11/16] 0.0, 128
          %1147 = vxpose.xlu0.b32.cont [12/16] 0.0, 128
          %1148 = vxpose.xlu0.b32.cont [13/16] 0.0, 128
          %1149 = vxpose.xlu0.b32.cont [14/16] 0.0, 128
          %1150 = vxpose.xlu0.b32.cont [15/16] 0.0, 128
          %1151 = vxpose.xlu0.b32.end [16/16] 0.0, 128
          %v1152 = vpop.trf.xlu0
          %v1153 = vpop.trf.xlu0
          %v1154 = vpop.trf.xlu0
          %v1155 = vpop.trf.xlu0
          %v1156 = vpop.trf.xlu0
          %v1157 = vpop.trf.xlu0
          %v1158 = vpop.trf.xlu0
          %v1159 = vpop.trf.xlu0
          %v1160 = vpop.trf.xlu0
          %v1161 = vpop.trf.xlu0
          %v1162 = vpop.trf.xlu0
          %v1163 = vpop.trf.xlu0
          %v1164 = vpop.trf.xlu0
          %v1165 = vpop.trf.xlu0
          %v1166 = vpop.trf.xlu0
          %v1167 = vpop.trf.xlu0
          %1168 = vxpose.xlu0.b32.start [1/16] %v1127, 128
          %1169 = vxpose.xlu0.b32.cont [2/16] 0.0, 128
          %1170 = vxpose.xlu0.b32.cont [3/16] 0.0, 128
          %1171 = vxpose.xlu0.b32.cont [4/16] 0.0, 128
          %1172 = vxpose.xlu0.b32.cont [5/16] 0.0, 128
          %1173 = vxpose.xlu0.b32.cont [6/16] 0.0, 128
          %1174 = vxpose.xlu0.b32.cont [7/16] 0.0, 128
          %1175 = vxpose.xlu0.b32.cont [8/16] 0.0, 128
          %1176 = vxpose.xlu0.b32.cont [9/16] 0.0, 128
          %1177 = vxpose.xlu0.b32.cont [10/16] 0.0, 128
          %1178 = vxpose.xlu0.b32.cont [11/16] 0.0, 128
          %1179 = vxpose.xlu0.b32.cont [12/16] 0.0, 128
          %1180 = vxpose.xlu0.b32.cont [13/16] 0.0, 128
          %1181 = vxpose.xlu0.b32.cont [14/16] 0.0, 128
          %1182 = vxpose.xlu0.b32.cont [15/16] 0.0, 128
          %1183 = vxpose.xlu0.b32.end [16/16] 0.0, 128
          %v1184 = vpop.trf.xlu0
          %v1185 = vpop.trf.xlu0
          %v1186 = vpop.trf.xlu0
          %v1187 = vpop.trf.xlu0
          %v1188 = vpop.trf.xlu0
          %v1189 = vpop.trf.xlu0
          %v1190 = vpop.trf.xlu0
          %v1191 = vpop.trf.xlu0
          %v1192 = vpop.trf.xlu0
          %v1193 = vpop.trf.xlu0
          %v1194 = vpop.trf.xlu0
          %v1195 = vpop.trf.xlu0
          %v1196 = vpop.trf.xlu0
          %v1197 = vpop.trf.xlu0
          %v1198 = vpop.trf.xlu0
          %v1199 = vpop.trf.xlu0
          %1200 = vxpose.xlu0.b32.start [1/16] %v1129, 128
          %1201 = vxpose.xlu0.b32.cont [2/16] 0.0, 128
          %1202 = vxpose.xlu0.b32.cont [3/16] 0.0, 128
          %1203 = vxpose.xlu0.b32.cont [4/16] 0.0, 128
          %1204 = vxpose.xlu0.b32.cont [5/16] 0.0, 128
          %1205 = vxpose.xlu0.b32.cont [6/16] 0.0, 128
          %1206 = vxpose.xlu0.b32.cont [7/16] 0.0, 128
          %1207 = vxpose.xlu0.b32.cont [8/16] 0.0, 128
          %1208 = vxpose.xlu0.b32.cont [9/16] 0.0, 128
          %1209 = vxpose.xlu0.b32.cont [10/16] 0.0, 128
          %1210 = vxpose.xlu0.b32.cont [11/16] 0.0, 128
          %1211 = vxpose.xlu0.b32.cont [12/16] 0.0, 128
          %1212 = vxpose.xlu0.b32.cont [13/16] 0.0, 128
          %1213 = vxpose.xlu0.b32.cont [14/16] 0.0, 128
          %1214 = vxpose.xlu0.b32.cont [15/16] 0.0, 128
          %1215 = vxpose.xlu0.b32.end [16/16] 0.0, 128
          %v1216 = vpop.trf.xlu0
          %v1217 = vpop.trf.xlu0
          %v1218 = vpop.trf.xlu0
          %v1219 = vpop.trf.xlu0
          %v1220 = vpop.trf.xlu0
          %v1221 = vpop.trf.xlu0
          %v1222 = vpop.trf.xlu0
          %v1223 = vpop.trf.xlu0
          %v1224 = vpop.trf.xlu0
          %v1225 = vpop.trf.xlu0
          %v1226 = vpop.trf.xlu0
          %v1227 = vpop.trf.xlu0
          %v1228 = vpop.trf.xlu0
          %v1229 = vpop.trf.xlu0
          %v1230 = vpop.trf.xlu0
          %v1231 = vpop.trf.xlu0
          %1232 = vxpose.xlu0.b32.start [1/16] %v1131, 128
          %1233 = vxpose.xlu0.b32.cont [2/16] 0.0, 128
          %1234 = vxpose.xlu0.b32.cont [3/16] 0.0, 128
          %1235 = vxpose.xlu0.b32.cont [4/16] 0.0, 128
          %1236 = vxpose.xlu0.b32.cont [5/16] 0.0, 128
          %1237 = vxpose.xlu0.b32.cont [6/16] 0.0, 128
          %1238 = vxpose.xlu0.b32.cont [7/16] 0.0, 128
          %1239 = vxpose.xlu0.b32.cont [8/16] 0.0, 128
          %1240 = vxpose.xlu0.b32.cont [9/16] 0.0, 128
          %1241 = vxpose.xlu0.b32.cont [10/16] 0.0, 128
          %1242 = vxpose.xlu0.b32.cont [11/16] 0.0, 128
          %1243 = vxpose.xlu0.b32.cont [12/16] 0.0, 128
          %1244 = vxpose.xlu0.b32.cont [13/16] 0.0, 128
          %1245 = vxpose.xlu0.b32.cont [14/16] 0.0, 128
          %1246 = vxpose.xlu0.b32.cont [15/16] 0.0, 128
          %1247 = vxpose.xlu0.b32.end [16/16] 0.0, 128
          %v1248 = vpop.trf.xlu0
          %v1249 = vpop.trf.xlu0
          %v1250 = vpop.trf.xlu0
          %v1251 = vpop.trf.xlu0
          %v1252 = vpop.trf.xlu0
          %v1253 = vpop.trf.xlu0
          %v1254 = vpop.trf.xlu0
          %v1255 = vpop.trf.xlu0
          %v1256 = vpop.trf.xlu0
          %v1257 = vpop.trf.xlu0
          %v1258 = vpop.trf.xlu0
          %v1259 = vpop.trf.xlu0
          %v1260 = vpop.trf.xlu0
          %v1261 = vpop.trf.xlu0
          %v1262 = vpop.trf.xlu0
          %v1263 = vpop.trf.xlu0
          %vm1264 = vcmask 64512
          %v1265 = vsel %vm1264, %v1115, 0
          %1267 = vmatpush.msra.mxu0 0.0
          %1268 = vmatpush.msra.mxu0 0.0
          %1269 = vmatpush.msra.mxu0 0.0
          %1270 = vmatpush.msra.mxu0 0.0
          %1271 = vmatpush.msra.mxu0 0.0
          %1272 = vmatpush.msra.mxu0 0.0
          %1273 = vmatpush.msra.mxu0 0.0
          %1274 = vmatpush.msra.mxu0 0.0
          %1275 = vmatpush.msra.mxu0 0.0
          %1276 = vmatpush.msra.mxu0 0.0
          %1277 = vmatpush.msra.mxu0 0.0
          %1278 = vmatpush.msra.mxu0 0.0
          %1279 = vmatpush.msra.mxu0 0.0
          %1280 = vmatpush.msra.mxu0 0.0
          %1281 = vmatpush.msra.mxu0 0.0
          %1282 = vmatpush.msra.mxu0 %v1152
          %1283 = vmatmul.f32.gmra.mxu0 %v1265
          %v1284 = vpop.f32.mrf.mxu0
          %v1285 = vadd.f32 0.0, %v1284
          %1286 = vdwg.mxu0
          %v1287 = vsel %vm1264, %v1119, 0
          %1289 = vmatpush.msra.mxu0 0.0
          %1290 = vmatpush.msra.mxu0 0.0
          %1291 = vmatpush.msra.mxu0 0.0
          %1292 = vmatpush.msra.mxu0 0.0
          %1293 = vmatpush.msra.mxu0 0.0
          %1294 = vmatpush.msra.mxu0 0.0
          %1295 = vmatpush.msra.mxu0 0.0
          %1296 = vmatpush.msra.mxu0 0.0
          %1297 = vmatpush.msra.mxu0 0.0
          %1298 = vmatpush.msra.mxu0 0.0
          %1299 = vmatpush.msra.mxu0 0.0
          %1300 = vmatpush.msra.mxu0 0.0
          %1301 = vmatpush.msra.mxu0 0.0
          %1302 = vmatpush.msra.mxu0 0.0
          %1303 = vmatpush.msra.mxu0 0.0
          %1304 = vmatpush.msra.mxu0 %v1184
          %1305 = vmatmul.f32.gmra.mxu0 %v1287
          %v1306 = vpop.f32.mrf.mxu0
          %v1307 = vadd.f32 0.0, %v1306
          %1308 = vdwg.mxu0
          %v1309 = vsel %vm1264, %v1121, 0
          %1311 = vmatpush.msra.mxu0 0.0
          %1312 = vmatpush.msra.mxu0 0.0
          %1313 = vmatpush.msra.mxu0 0.0
          %1314 = vmatpush.msra.mxu0 0.0
          %1315 = vmatpush.msra.mxu0 0.0
          %1316 = vmatpush.msra.mxu0 0.0
          %1317 = vmatpush.msra.mxu0 0.0
          %1318 = vmatpush.msra.mxu0 0.0
          %1319 = vmatpush.msra.mxu0 0.0
          %1320 = vmatpush.msra.mxu0 0.0
          %1321 = vmatpush.msra.mxu0 0.0
          %1322 = vmatpush.msra.mxu0 0.0
          %1323 = vmatpush.msra.mxu0 0.0
          %1324 = vmatpush.msra.mxu0 0.0
          %1325 = vmatpush.msra.mxu0 0.0
          %1326 = vmatpush.msra.mxu0 %v1216
          %1327 = vmatmul.f32.gmra.mxu0 %v1309
          %v1328 = vpop.f32.mrf.mxu0
          %v1329 = vadd.f32 0.0, %v1328
          %1330 = vdwg.mxu0
          %v1331 = vsel %vm1264, %v1123, 0
          %1333 = vmatpush.msra.mxu0 0.0
          %1334 = vmatpush.msra.mxu0 0.0
          %1335 = vmatpush.msra.mxu0 0.0
          %1336 = vmatpush.msra.mxu0 0.0
          %1337 = vmatpush.msra.mxu0 0.0
          %1338 = vmatpush.msra.mxu0 0.0
          %1339 = vmatpush.msra.mxu0 0.0
          %1340 = vmatpush.msra.mxu0 0.0
          %1341 = vmatpush.msra.mxu0 0.0
          %1342 = vmatpush.msra.mxu0 0.0
          %1343 = vmatpush.msra.mxu0 0.0
          %1344 = vmatpush.msra.mxu0 0.0
          %1345 = vmatpush.msra.mxu0 0.0
          %1346 = vmatpush.msra.mxu0 0.0
          %1347 = vmatpush.msra.mxu0 0.0
          %1348 = vmatpush.msra.mxu0 %v1248
          %1349 = vmatmul.f32.gmra.mxu0 %v1331
          %v1350 = vpop.f32.mrf.mxu0
          %v1351 = vadd.f32 0.0, %v1350
          %1352 = vdwg.mxu0
          %v1353 = vmul.f32 %v1285, 0.35355338
          %v1354 = vmul.f32 %v1307, 0.35355338
          %v1355 = vmul.f32 %v1329, 0.35355338
          %v1356 = vmul.f32 %v1351, 0.35355338
          %v1357 = vsel %vm995, 1, 0
          %vm1358 = vcmp.eq.s32.totalorder %v1357, 1
          %v1359 = vsel %vm1358, -1e+09, %v1353
          %v1360 = vsel %vm1358, -1e+09, %v1354
          %v1361 = vsel %vm1358, -1e+09, %v1355
          %v1362 = vsel %vm1358, -1e+09, %v1356
          %v1363 = vsel %vm1264, %v1359, -inf
          %1364 = vmax.xlane.f32.xlu0 %v1363
          %v1365 = vpop.xlane.xlu0 %1364
          %v1366 = vsel %vm1264, %v1360, -inf
          %1367 = vmax.xlane.f32.xlu0 %v1366
          %v1368 = vpop.xlane.xlu0 %1367
          %v1369 = vsel %vm1264, %v1361, -inf
          %1370 = vmax.xlane.f32.xlu0 %v1369
          %v1371 = vpop.xlane.xlu0 %1370
          %v1372 = vsel %vm1264, %v1362, -inf
          %1373 = vmax.xlane.f32.xlu0 %v1372
          %v1374 = vpop.xlane.xlu0 %1373
          %v1375 = vsub.f32 %v1359, %v1365
          %v1376 = vsub.f32 %v1360, %v1368
          %v1377 = vsub.f32 %v1361, %v1371
          %v1378 = vsub.f32 %v1362, %v1374
          %v1379 = vmul.f32 %v1375, 1.442695
          %v1380 = vpow.pop %v1379
          %v1381 = vmul.f32 %v1376, 1.442695
          %v1382 = vpow.pop %v1381
          %v1383 = vmul.f32 %v1377, 1.442695
          %v1384 = vpow.pop %v1383
          %v1385 = vmul.f32 %v1378, 1.442695
          %v1386 = vpow.pop %v1385
          %v1387 = vsel %vm1264, %v1380, 0.0
          %1388 = vadd.xlane.f32.xlu0 %v1387
          %v1389 = vpop.xlane.xlu0 %1388
          %v1390 = vsel %vm1264, %v1382, 0.0
          %1391 = vadd.xlane.f32.xlu0 %v1390
          %v1392 = vpop.xlane.xlu0 %1391
          %v1393 = vsel %vm1264, %v1384, 0.0
          %1394 = vadd.xlane.f32.xlu0 %v1393
          %v1395 = vpop.xlane.xlu0 %1394
          %v1396 = vsel %vm1264, %v1386, 0.0
          %1397 = vadd.xlane.f32.xlu0 %v1396
          %v1398 = vpop.xlane.xlu0 %1397
          %v1399 = vrcp.pop %v1389
          %v1400 = vrcp.pop %v1392
          %v1401 = vrcp.pop %v1395
          %v1402 = vrcp.pop %v1398
          %v1403 = vmul.f32 %v1380, %v1399
          %v1404 = vmul.f32 %v1382, %v1400
          %v1405 = vmul.f32 %v1384, %v1401
          %v1406 = vmul.f32 %v1386, %v1402
          %1407 = vrot.lane.b32.xlu0 %v1115, 64
          %v1408 = vpop.permute.xlu0 %1407
          %1409 = vrot.lane.b32.xlu0 %v1119, 64
          %v1410 = vpop.permute.xlu0 %1409
          %1411 = vrot.lane.b32.xlu0 %v1121, 64
          %v1412 = vpop.permute.xlu0 %1411
          %1413 = vrot.lane.b32.xlu0 %v1123, 64
          %v1414 = vpop.permute.xlu0 %1413
          %1419 = vxpose.xlu0.b32.start [1/16] %v1408, 128
          %1420 = vxpose.xlu0.b32.cont [2/16] 0.0, 128
          %1421 = vxpose.xlu0.b32.cont [3/16] 0.0, 128
          %1422 = vxpose.xlu0.b32.cont [4/16] 0.0, 128
          %1423 = vxpose.xlu0.b32.cont [5/16] 0.0, 128
          %1424 = vxpose.xlu0.b32.cont [6/16] 0.0, 128
          %1425 = vxpose.xlu0.b32.cont [7/16] 0.0, 128
          %1426 = vxpose.xlu0.b32.cont [8/16] 0.0, 128
          %1427 = vxpose.xlu0.b32.cont [9/16] 0.0, 128
          %1428 = vxpose.xlu0.b32.cont [10/16] 0.0, 128
          %1429 = vxpose.xlu0.b32.cont [11/16] 0.0, 128
          %1430 = vxpose.xlu0.b32.cont [12/16] 0.0, 128
          %1431 = vxpose.xlu0.b32.cont [13/16] 0.0, 128
          %1432 = vxpose.xlu0.b32.cont [14/16] 0.0, 128
          %1433 = vxpose.xlu0.b32.cont [15/16] 0.0, 128
          %1434 = vxpose.xlu0.b32.end [16/16] 0.0, 128
          %v1435 = vpop.trf.xlu0
          %v1436 = vpop.trf.xlu0
          %v1437 = vpop.trf.xlu0
          %v1438 = vpop.trf.xlu0
          %v1439 = vpop.trf.xlu0
          %v1440 = vpop.trf.xlu0
          %v1441 = vpop.trf.xlu0
          %v1442 = vpop.trf.xlu0
          %v1443 = vpop.trf.xlu0
          %v1444 = vpop.trf.xlu0
          %v1445 = vpop.trf.xlu0
          %v1446 = vpop.trf.xlu0
          %v1447 = vpop.trf.xlu0
          %v1448 = vpop.trf.xlu0
          %v1449 = vpop.trf.xlu0
          %v1450 = vpop.trf.xlu0
          %1451 = vxpose.xlu0.b32.start [1/16] %v1410, 128
          %1452 = vxpose.xlu0.b32.cont [2/16] 0.0, 128
          %1453 = vxpose.xlu0.b32.cont [3/16] 0.0, 128
          %1454 = vxpose.xlu0.b32.cont [4/16] 0.0, 128
          %1455 = vxpose.xlu0.b32.cont [5/16] 0.0, 128
          %1456 = vxpose.xlu0.b32.cont [6/16] 0.0, 128
          %1457 = vxpose.xlu0.b32.cont [7/16] 0.0, 128
          %1458 = vxpose.xlu0.b32.cont [8/16] 0.0, 128
          %1459 = vxpose.xlu0.b32.cont [9/16] 0.0, 128
          %1460 = vxpose.xlu0.b32.cont [10/16] 0.0, 128
          %1461 = vxpose.xlu0.b32.cont [11/16] 0.0, 128
          %1462 = vxpose.xlu0.b32.cont [12/16] 0.0, 128
          %1463 = vxpose.xlu0.b32.cont [13/16] 0.0, 128
          %1464 = vxpose.xlu0.b32.cont [14/16] 0.0, 128
          %1465 = vxpose.xlu0.b32.cont [15/16] 0.0, 128
          %1466 = vxpose.xlu0.b32.end [16/16] 0.0, 128
          %v1467 = vpop.trf.xlu0
          %v1468 = vpop.trf.xlu0
          %v1469 = vpop.trf.xlu0
          %v1470 = vpop.trf.xlu0
          %v1471 = vpop.trf.xlu0
          %v1472 = vpop.trf.xlu0
          %v1473 = vpop.trf.xlu0
          %v1474 = vpop.trf.xlu0
          %v1475 = vpop.trf.xlu0
          %v1476 = vpop.trf.xlu0
          %v1477 = vpop.trf.xlu0
          %v1478 = vpop.trf.xlu0
          %v1479 = vpop.trf.xlu0
          %v1480 = vpop.trf.xlu0
          %v1481 = vpop.trf.xlu0
          %v1482 = vpop.trf.xlu0
          %1483 = vxpose.xlu0.b32.start [1/16] %v1412, 128
          %1484 = vxpose.xlu0.b32.cont [2/16] 0.0, 128
          %1485 = vxpose.xlu0.b32.cont [3/16] 0.0, 128
          %1486 = vxpose.xlu0.b32.cont [4/16] 0.0, 128
          %1487 = vxpose.xlu0.b32.cont [5/16] 0.0, 128
          %1488 = vxpose.xlu0.b32.cont [6/16] 0.0, 128
          %1489 = vxpose.xlu0.b32.cont [7/16] 0.0, 128
          %1490 = vxpose.xlu0.b32.cont [8/16] 0.0, 128
          %1491 = vxpose.xlu0.b32.cont [9/16] 0.0, 128
          %1492 = vxpose.xlu0.b32.cont [10/16] 0.0, 128
          %1493 = vxpose.xlu0.b32.cont [11/16] 0.0, 128
          %1494 = vxpose.xlu0.b32.cont [12/16] 0.0, 128
          %1495 = vxpose.xlu0.b32.cont [13/16] 0.0, 128
          %1496 = vxpose.xlu0.b32.cont [14/16] 0.0, 128
          %1497 = vxpose.xlu0.b32.cont [15/16] 0.0, 128
          %1498 = vxpose.xlu0.b32.end [16/16] 0.0, 128
          %v1499 = vpop.trf.xlu0
          %v1500 = vpop.trf.xlu0
          %v1501 = vpop.trf.xlu0
          %v1502 = vpop.trf.xlu0
          %v1503 = vpop.trf.xlu0
          %v1504 = vpop.trf.xlu0
          %v1505 = vpop.trf.xlu0
          %v1506 = vpop.trf.xlu0
          %v1507 = vpop.trf.xlu0
          %v1508 = vpop.trf.xlu0
          %v1509 = vpop.trf.xlu0
          %v1510 = vpop.trf.xlu0
          %v1511 = vpop.trf.xlu0
          %v1512 = vpop.trf.xlu0
          %v1513 = vpop.trf.xlu0
          %v1514 = vpop.trf.xlu0
          %1515 = vxpose.xlu0.b32.start [1/16] %v1414, 128
          %1516 = vxpose.xlu0.b32.cont [2/16] 0.0, 128
          %1517 = vxpose.xlu0.b32.cont [3/16] 0.0, 128
          %1518 = vxpose.xlu0.b32.cont [4/16] 0.0, 128
          %1519 = vxpose.xlu0.b32.cont [5/16] 0.0, 128
          %1520 = vxpose.xlu0.b32.cont [6/16] 0.0, 128
          %1521 = vxpose.xlu0.b32.cont [7/16] 0.0, 128
          %1522 = vxpose.xlu0.b32.cont [8/16] 0.0, 128
          %1523 = vxpose.xlu0.b32.cont [9/16] 0.0, 128
          %1524 = vxpose.xlu0.b32.cont [10/16] 0.0, 128
          %1525 = vxpose.xlu0.b32.cont [11/16] 0.0, 128
          %1526 = vxpose.xlu0.b32.cont [12/16] 0.0, 128
          %1527 = vxpose.xlu0.b32.cont [13/16] 0.0, 128
          %1528 = vxpose.xlu0.b32.cont [14/16] 0.0, 128
          %1529 = vxpose.xlu0.b32.cont [15/16] 0.0, 128
          %1530 = vxpose.xlu0.b32.end [16/16] 0.0, 128
          %v1531 = vpop.trf.xlu0
          %v1532 = vpop.trf.xlu0
          %v1533 = vpop.trf.xlu0
          %v1534 = vpop.trf.xlu0
          %v1535 = vpop.trf.xlu0
          %v1536 = vpop.trf.xlu0
          %v1537 = vpop.trf.xlu0
          %v1538 = vpop.trf.xlu0
          %v1539 = vpop.trf.xlu0
          %v1540 = vpop.trf.xlu0
          %v1541 = vpop.trf.xlu0
          %v1542 = vpop.trf.xlu0
          %v1543 = vpop.trf.xlu0
          %v1544 = vpop.trf.xlu0
          %v1545 = vpop.trf.xlu0
          %v1546 = vpop.trf.xlu0
          %v1548 = vsel %vm1264, %v1435, 0
          %v1551 = vsel %vm1264, %v1403, 0
          %1553 = vmatpush.xpose.msra.mxu0 0.0
          %1554 = vmatpush.xpose.msra.mxu0 0.0
          %1555 = vmatpush.xpose.msra.mxu0 0.0
          %1556 = vmatpush.xpose.msra.mxu0 0.0
          %1557 = vmatpush.xpose.msra.mxu0 0.0
          %1558 = vmatpush.xpose.msra.mxu0 0.0
          %1559 = vmatpush.xpose.msra.mxu0 0.0
          %1560 = vmatpush.xpose.msra.mxu0 0.0
          %1561 = vmatpush.xpose.msra.mxu0 0.0
          %1562 = vmatpush.xpose.msra.mxu0 0.0
          %1563 = vmatpush.xpose.msra.mxu0 0.0
          %1564 = vmatpush.xpose.msra.mxu0 0.0
          %1565 = vmatpush.xpose.msra.mxu0 0.0
          %1566 = vmatpush.xpose.msra.mxu0 0.0
          %1567 = vmatpush.xpose.msra.mxu0 0.0
          %1568 = vmatpush.xpose.msra.mxu0 %v1551
          %1569 = vmatmul.f32.gmra.mxu0 %v1548
          %v1570 = vpop.f32.mrf.mxu0
          %v1571 = vadd.f32 0.0, %v1570
          %1572 = vdwg.mxu0
          %v1574 = vsel %vm1264, %v1467, 0
          %v1577 = vsel %vm1264, %v1404, 0
          %1579 = vmatpush.xpose.msra.mxu0 0.0
          %1580 = vmatpush.xpose.msra.mxu0 0.0
          %1581 = vmatpush.xpose.msra.mxu0 0.0
          %1582 = vmatpush.xpose.msra.mxu0 0.0
          %1583 = vmatpush.xpose.msra.mxu0 0.0
          %1584 = vmatpush.xpose.msra.mxu0 0.0
          %1585 = vmatpush.xpose.msra.mxu0 0.0
          %1586 = vmatpush.xpose.msra.mxu0 0.0
          %1587 = vmatpush.xpose.msra.mxu0 0.0
          %1588 = vmatpush.xpose.msra.mxu0 0.0
          %1589 = vmatpush.xpose.msra.mxu0 0.0
          %1590 = vmatpush.xpose.msra.mxu0 0.0
          %1591 = vmatpush.xpose.msra.mxu0 0.0
          %1592 = vmatpush.xpose.msra.mxu0 0.0
          %1593 = vmatpush.xpose.msra.mxu0 0.0
          %1594 = vmatpush.xpose.msra.mxu0 %v1577
          %1595 = vmatmul.f32.gmra.mxu0 %v1574
          %v1596 = vpop.f32.mrf.mxu0
          %v1597 = vadd.f32 0.0, %v1596
          %1598 = vdwg.mxu0
          %v1600 = vsel %vm1264, %v1499, 0
          %v1603 = vsel %vm1264, %v1405, 0
          %1605 = vmatpush.xpose.msra.mxu0 0.0
          %1606 = vmatpush.xpose.msra.mxu0 0.0
          %1607 = vmatpush.xpose.msra.mxu0 0.0
          %1608 = vmatpush.xpose.msra.mxu0 0.0
          %1609 = vmatpush.xpose.msra.mxu0 0.0
          %1610 = vmatpush.xpose.msra.mxu0 0.0
          %1611 = vmatpush.xpose.msra.mxu0 0.0
          %1612 = vmatpush.xpose.msra.mxu0 0.0
          %1613 = vmatpush.xpose.msra.mxu0 0.0
          %1614 = vmatpush.xpose.msra.mxu0 0.0
          %1615 = vmatpush.xpose.msra.mxu0 0.0
          %1616 = vmatpush.xpose.msra.mxu0 0.0
          %1617 = vmatpush.xpose.msra.mxu0 0.0
          %1618 = vmatpush.xpose.msra.mxu0 0.0
          %1619 = vmatpush.xpose.msra.mxu0 0.0
          %1620 = vmatpush.xpose.msra.mxu0 %v1603
          %1621 = vmatmul.f32.gmra.mxu0 %v1600
          %v1622 = vpop.f32.mrf.mxu0
          %v1623 = vadd.f32 0.0, %v1622
          %1624 = vdwg.mxu0
          %v1626 = vsel %vm1264, %v1531, 0
          %v1629 = vsel %vm1264, %v1406, 0
          %1631 = vmatpush.xpose.msra.mxu0 0.0
          %1632 = vmatpush.xpose.msra.mxu0 0.0
          %1633 = vmatpush.xpose.msra.mxu0 0.0
          %1634 = vmatpush.xpose.msra.mxu0 0.0
          %1635 = vmatpush.xpose.msra.mxu0 0.0
          %1636 = vmatpush.xpose.msra.mxu0 0.0
          %1637 = vmatpush.xpose.msra.mxu0 0.0
          %1638 = vmatpush.xpose.msra.mxu0 0.0
          %1639 = vmatpush.xpose.msra.mxu0 0.0
          %1640 = vmatpush.xpose.msra.mxu0 0.0
          %1641 = vmatpush.xpose.msra.mxu0 0.0
          %1642 = vmatpush.xpose.msra.mxu0 0.0
          %1643 = vmatpush.xpose.msra.mxu0 0.0
          %1644 = vmatpush.xpose.msra.mxu0 0.0
          %1645 = vmatpush.xpose.msra.mxu0 0.0
          %1646 = vmatpush.xpose.msra.mxu0 %v1629
          %1647 = vmatmul.f32.gmra.mxu0 %v1626
          %v1648 = vpop.f32.mrf.mxu0
          %v1649 = vadd.f32 0.0, %v1648
          %1650 = vdwg.mxu0
          %1651 = vxpose.xlu0.b32.start [1/16] %v1571, 128
          %1652 = vxpose.xlu0.b32.cont [2/16] 0.0, 128
          %1653 = vxpose.xlu0.b32.cont [3/16] 0.0, 128
          %1654 = vxpose.xlu0.b32.cont [4/16] 0.0, 128
          %1655 = vxpose.xlu0.b32.cont [5/16] 0.0, 128
          %1656 = vxpose.xlu0.b32.cont [6/16] 0.0, 128
          %1657 = vxpose.xlu0.b32.cont [7/16] 0.0, 128
          %1658 = vxpose.xlu0.b32.cont [8/16] 0.0, 128
          %1659 = vxpose.xlu0.b32.cont [9/16] 0.0, 128
          %1660 = vxpose.xlu0.b32.cont [10/16] 0.0, 128
          %1661 = vxpose.xlu0.b32.cont [11/16] 0.0, 128
          %1662 = vxpose.xlu0.b32.cont [12/16] 0.0, 128
          %1663 = vxpose.xlu0.b32.cont [13/16] 0.0, 128
          %1664 = vxpose.xlu0.b32.cont [14/16] 0.0, 128
          %1665 = vxpose.xlu0.b32.cont [15/16] 0.0, 128
          %1666 = vxpose.xlu0.b32.end [16/16] 0.0, 128
          %v1667 = vpop.trf.xlu0
          %v1668 = vpop.trf.xlu0
          %v1669 = vpop.trf.xlu0
          %v1670 = vpop.trf.xlu0
          %v1671 = vpop.trf.xlu0
          %v1672 = vpop.trf.xlu0
          %v1673 = vpop.trf.xlu0
          %v1674 = vpop.trf.xlu0
          %v1675 = vpop.trf.xlu0
          %v1676 = vpop.trf.xlu0
          %v1677 = vpop.trf.xlu0
          %v1678 = vpop.trf.xlu0
          %v1679 = vpop.trf.xlu0
          %v1680 = vpop.trf.xlu0
          %v1681 = vpop.trf.xlu0
          %v1682 = vpop.trf.xlu0
          %1683 = vxpose.xlu0.b32.start [1/16] %v1597, 128
          %1684 = vxpose.xlu0.b32.cont [2/16] 0.0, 128
          %1685 = vxpose.xlu0.b32.cont [3/16] 0.0, 128
          %1686 = vxpose.xlu0.b32.cont [4/16] 0.0, 128
          %1687 = vxpose.xlu0.b32.cont [5/16] 0.0, 128
          %1688 = vxpose.xlu0.b32.cont [6/16] 0.0, 128
          %1689 = vxpose.xlu0.b32.cont [7/16] 0.0, 128
          %1690 = vxpose.xlu0.b32.cont [8/16] 0.0, 128
          %1691 = vxpose.xlu0.b32.cont [9/16] 0.0, 128
          %1692 = vxpose.xlu0.b32.cont [10/16] 0.0, 128
          %1693 = vxpose.xlu0.b32.cont [11/16] 0.0, 128
          %1694 = vxpose.xlu0.b32.cont [12/16] 0.0, 128
          %1695 = vxpose.xlu0.b32.cont [13/16] 0.0, 128
          %1696 = vxpose.xlu0.b32.cont [14/16] 0.0, 128
          %1697 = vxpose.xlu0.b32.cont [15/16] 0.0, 128
          %1698 = vxpose.xlu0.b32.end [16/16] 0.0, 128
          %v1699 = vpop.trf.xlu0
          %v1700 = vpop.trf.xlu0
          %v1701 = vpop.trf.xlu0
          %v1702 = vpop.trf.xlu0
          %v1703 = vpop.trf.xlu0
          %v1704 = vpop.trf.xlu0
          %v1705 = vpop.trf.xlu0
          %v1706 = vpop.trf.xlu0
          %v1707 = vpop.trf.xlu0
          %v1708 = vpop.trf.xlu0
          %v1709 = vpop.trf.xlu0
          %v1710 = vpop.trf.xlu0
          %v1711 = vpop.trf.xlu0
          %v1712 = vpop.trf.xlu0
          %v1713 = vpop.trf.xlu0
          %v1714 = vpop.trf.xlu0
          %1715 = vxpose.xlu0.b32.start [1/16] %v1623, 128
          %1716 = vxpose.xlu0.b32.cont [2/16] 0.0, 128
          %1717 = vxpose.xlu0.b32.cont [3/16] 0.0, 128
          %1718 = vxpose.xlu0.b32.cont [4/16] 0.0, 128
          %1719 = vxpose.xlu0.b32.cont [5/16] 0.0, 128
          %1720 = vxpose.xlu0.b32.cont [6/16] 0.0, 128
          %1721 = vxpose.xlu0.b32.cont [7/16] 0.0, 128
          %1722 = vxpose.xlu0.b32.cont [8/16] 0.0, 128
          %1723 = vxpose.xlu0.b32.cont [9/16] 0.0, 128
          %1724 = vxpose.xlu0.b32.cont [10/16] 0.0, 128
          %1725 = vxpose.xlu0.b32.cont [11/16] 0.0, 128
          %1726 = vxpose.xlu0.b32.cont [12/16] 0.0, 128
          %1727 = vxpose.xlu0.b32.cont [13/16] 0.0, 128
          %1728 = vxpose.xlu0.b32.cont [14/16] 0.0, 128
          %1729 = vxpose.xlu0.b32.cont [15/16] 0.0, 128
          %1730 = vxpose.xlu0.b32.end [16/16] 0.0, 128
          %v1731 = vpop.trf.xlu0
          %v1732 = vpop.trf.xlu0
          %v1733 = vpop.trf.xlu0
          %v1734 = vpop.trf.xlu0
          %v1735 = vpop.trf.xlu0
          %v1736 = vpop.trf.xlu0
          %v1737 = vpop.trf.xlu0
          %v1738 = vpop.trf.xlu0
          %v1739 = vpop.trf.xlu0
          %v1740 = vpop.trf.xlu0
          %v1741 = vpop.trf.xlu0
          %v1742 = vpop.trf.xlu0
          %v1743 = vpop.trf.xlu0
          %v1744 = vpop.trf.xlu0
          %v1745 = vpop.trf.xlu0
          %v1746 = vpop.trf.xlu0
          %1747 = vxpose.xlu0.b32.start [1/16] %v1649, 128
          %1748 = vxpose.xlu0.b32.cont [2/16] 0.0, 128
          %1749 = vxpose.xlu0.b32.cont [3/16] 0.0, 128
          %1750 = vxpose.xlu0.b32.cont [4/16] 0.0, 128
          %1751 = vxpose.xlu0.b32.cont [5/16] 0.0, 128
          %1752 = vxpose.xlu0.b32.cont [6/16] 0.0, 128
          %1753 = vxpose.xlu0.b32.cont [7/16] 0.0, 128
          %1754 = vxpose.xlu0.b32.cont [8/16] 0.0, 128
          %1755 = vxpose.xlu0.b32.cont [9/16] 0.0, 128
          %1756 = vxpose.xlu0.b32.cont [10/16] 0.0, 128
          %1757 = vxpose.xlu0.b32.cont [11/16] 0.0, 128
          %1758 = vxpose.xlu0.b32.cont [12/16] 0.0, 128
          %1759 = vxpose.xlu0.b32.cont [13/16] 0.0, 128
          %1760 = vxpose.xlu0.b32.cont [14/16] 0.0, 128
          %1761 = vxpose.xlu0.b32.cont [15/16] 0.0, 128
          %1762 = vxpose.xlu0.b32.end [16/16] 0.0, 128
          %v1763 = vpop.trf.xlu0
          %v1764 = vpop.trf.xlu0
          %v1765 = vpop.trf.xlu0
          %v1766 = vpop.trf.xlu0
          %v1767 = vpop.trf.xlu0
          %v1768 = vpop.trf.xlu0
          %v1769 = vpop.trf.xlu0
          %v1770 = vpop.trf.xlu0
          %v1771 = vpop.trf.xlu0
          %v1772 = vpop.trf.xlu0
          %v1773 = vpop.trf.xlu0
          %v1774 = vpop.trf.xlu0
          %v1775 = vpop.trf.xlu0
          %v1776 = vpop.trf.xlu0
          %v1777 = vpop.trf.xlu0
          %v1778 = vpop.trf.xlu0
          %v1779 = vrot.slane %v1731, 4
          %vm1780 = vcmask 1047556
          %v1781 = vsel %vm1780, %v1779, %v1667
          %v1782 = vrot.slane %v1667, 4
          %v1783 = vsel %vm1780, %v1731, %v1782
          %v1785 = vunpack.c.l.s4 1983009808
          %v1786 = vunpack.c.0.s8 %v1785
          %v1787 = vperm.slane %v1781, %v1786
          %v1789 = vunpack.c.l.s4 1983009808
          %v1790 = vunpack.c.0.s8 %v1789
          %v1791 = vperm.slane %v1783, %v1790
          %v1792 = vrot.slane %v1763, 4
          %v1793 = vsel %vm1780, %v1792, %v1699
          %v1794 = vrot.slane %v1699, 4
          %v1795 = vsel %vm1780, %v1763, %v1794
          %v1797 = vunpack.c.l.s4 1983009808
          %v1798 = vunpack.c.0.s8 %v1797
          %v1799 = vperm.slane %v1793, %v1798
          %v1801 = vunpack.c.l.s4 1983009808
          %v1802 = vunpack.c.0.s8 %v1801
          %v1803 = vperm.slane %v1795, %v1802
          %v1804 = vrot.slane %v1799, 4
          %v1805 = vsel %vm1780, %v1804, %v1787
          %v1806 = vrot.slane %v1787, 4
          %v1807 = vsel %vm1780, %v1799, %v1806
          %v1809 = vunpack.c.l.s4 1934713408
          %v1810 = vunpack.c.0.s8 %v1809
          %v1811 = vperm.slane %v1805, %v1810
          %v1813 = vunpack.c.l.s4 1934713408
          %v1814 = vunpack.c.0.s8 %v1813
          %v1815 = vperm.slane %v1807, %v1814
          %v1816 = vrot.slane %v1803, 4
          %v1817 = vsel %vm1780, %v1816, %v1791
          %v1818 = vrot.slane %v1791, 4
          %v1819 = vsel %vm1780, %v1803, %v1818
          %v1821 = vunpack.c.l.s4 1934713408
          %v1822 = vunpack.c.0.s8 %v1821
          %v1823 = vperm.slane %v1817, %v1822
          %v1825 = vunpack.c.l.s4 1934713408
          %v1826 = vunpack.c.0.s8 %v1825
          %v1827 = vperm.slane %v1819, %v1826
          %v1828 = vrot.slane %v1811, 4
          %v1829 = vsel %vm1780, 0.0, %v1828
          %v1830 = vrot.slane %v1815, 4
          %v1831 = vsel %vm1780, 0.0, %v1830
          %v1832 = vrot.slane %v1823, 4
          %v1833 = vsel %vm1780, 0.0, %v1832
          %v1834 = vrot.slane %v1827, 4
          %v1835 = vsel %vm1780, 0.0, %v1834
          %v1836 = vsel %vm1780, %v1830, %v1811
          %v1838 = vunpack.c.l.s4 1983009808
          %v1839 = vunpack.c.0.s8 %v1838
          %v1840 = vperm.slane %v1836, %v1839
          %v1841 = vrot.slane %v1831, 4
          %v1842 = vsel %vm1780, %v1841, %v1829
          %v1844 = vunpack.c.l.s4 1983009808
          %v1845 = vunpack.c.0.s8 %v1844
          %v1846 = vperm.slane %v1842, %v1845
          %v1847 = vsel %vm1780, %v1834, %v1823
          %v1849 = vunpack.c.l.s4 1983009808
          %v1850 = vunpack.c.0.s8 %v1849
          %v1851 = vperm.slane %v1847, %v1850
          %v1852 = vrot.slane %v1835, 4
          %v1853 = vsel %vm1780, %v1852, %v1833
          %v1855 = vunpack.c.l.s4 1983009808
          %v1856 = vunpack.c.0.s8 %v1855
          %v1857 = vperm.slane %v1853, %v1856
          %v1858 = vrot.slane %v1846, 4
          %v1859 = vsel %vm1780, %v1858, %v1840
          %v1860 = vrot.slane %v1840, 4
          %v1861 = vsel %vm1780, %v1846, %v1860
          %v1863 = vunpack.c.l.s4 1934713408
          %v1864 = vunpack.c.0.s8 %v1863
          %v1865 = vperm.slane %v1859, %v1864
          %v1867 = vunpack.c.l.s4 1934713408
          %v1868 = vunpack.c.0.s8 %v1867
          %v1869 = vperm.slane %v1861, %v1868
          %v1870 = vrot.slane %v1857, 4
          %v1871 = vsel %vm1780, %v1870, %v1851
          %v1872 = vrot.slane %v1851, 4
          %v1873 = vsel %vm1780, %v1857, %v1872
          %v1875 = vunpack.c.l.s4 1934713408
          %v1876 = vunpack.c.0.s8 %v1875
          %v1877 = vperm.slane %v1871, %v1876
          %v1879 = vunpack.c.l.s4 1934713408
          %v1880 = vunpack.c.0.s8 %v1879
          %v1881 = vperm.slane %v1873, %v1880
          %v1882 = vrot.slane %v1877, 4
          %v1883 = vsel %vm1780, %v1882, %v1865
          %v1884 = vrot.slane %v1865, 4
          %v1885 = vsel %vm1780, %v1877, %v1884
          %v1886 = vrot.slane %v1881, 4
          %v1887 = vsel %vm1780, %v1886, %v1869
          %v1888 = vrot.slane %v1869, 4
          %v1889 = vsel %vm1780, %v1881, %v1888
          %1891 = vrot.lane.b32.xlu0 %v1885, 8
          %v1892 = vpop.permute.xlu0 %1891
          %1895 = vrot.lane.b32.xlu0 %v1887, 16
          %v1896 = vpop.permute.xlu0 %1895
          %1899 = vrot.lane.b32.xlu0 %v1889, 24
          %v1900 = vpop.permute.xlu0 %1899
          %v1902 = vsel %vm1264, %v1883, %v1892
          %vm1903 = vcmask 130048
          %v1904 = vsel %vm1903, %v1902, %v1896
          %vm1905 = vcmask 195584
          %v1906 = vsel %vm1905, %v1904, %v1900
          %v1908 = vsel %vm1000, %v1906, 0
          %1910 = vmatpush.msra.mxu0 0.0
          %1911 = vmatpush.msra.mxu0 0.0
          %1912 = vmatpush.msra.mxu0 0.0
          %1913 = vmatpush.msra.mxu0 0.0
          %1914 = vmatpush.msra.mxu0 0.0
          %1915 = vmatpush.msra.mxu0 0.0
          %1916 = vmatpush.msra.mxu0 0.0
          %1917 = vmatpush.msra.mxu0 0.0
          %1918 = vmatpush.msra.mxu0 0.0
          %1919 = vmatpush.msra.mxu0 0.0
          %1920 = vmatpush.msra.mxu0 0.0
          %1921 = vmatpush.msra.mxu0 0.0
          %1922 = vmatpush.msra.mxu0 %v956
          %1923 = vmatpush.msra.mxu0 %v955
          %1924 = vmatpush.msra.mxu0 %v954
          %1925 = vmatpush.msra.mxu0 %v953
          %1926 = vmatmul.f32.gmra.mxu0 %v1908
          %v1927 = vpop.f32.mrf.mxu0
          %v1928 = vadd.f32 0.0, %v1927
          %1929 = vdwg.mxu0
          %v1930 = vadd.f32 %v1030, %v1928
          %v1932 = vperm.slane %v957, 0
          %v1934 = vadd.f32 %v1930, %v1932
          %v1935 = vsel %vm1000, %v1934, 0.0
          %1936 = vadd.xlane.f32.xlu0 %v1935
          %v1937 = vpop.xlane.xlu0 %1936
          %v1938 = vmul.f32 %v1937, %v1040
          %v1939 = vsub.f32 %v1934, %v1938
          %v1940 = vmul.f32 %v1939, %v1939
          %v1941 = vsel %vm1000, %v1940, 0.0
          %1942 = vadd.xlane.f32.xlu0 %v1941
          %v1943 = vpop.xlane.xlu0 %1942
          %v1944 = vmul.f32 %v1943, %v1053
          %v1945 = vrsqrt.pop %v1944
          %v1946 = vmul.f32 %v1945, %v1944
          %v1947 = vmul.f32 %v1946, %v1945
          %v1948 = vmul.f32 0.5, %v1947
          %v1949 = vsub.f32 1.5, %v1948
          %v1950 = vmul.f32 %v1945, %v1949
          %v1951 = vmul.f32 %v1944, %v1950
          %vm1952 = vcmp.eq.f32.partialorder %v1944, inf
          %v1953 = vsel %vm1952, %v1944, %v1951
          %vm1954 = vcmp.eq.f32.partialorder %v1944, 0.0
          %v1955 = vand.u32 %v1944, 2147483648
          %v1956 = vsel %vm1954, %v1955, %v1953
          %v1958 = vperm.slane %v989, 0
          %v1960 = vmul.f32 %v1958, %v1939
          %v1961 = vadd.f32 %v1956, 1e-06
          %v1962 = vrcp.pop %v1961
          %v1963 = vmul.f32 %v1961, %v1962
          %v1964 = vsub.f32 1.0, %v1963
          %v1965 = vmul.f32 %v1962, %v1964
          %v1966 = vadd.f32 %v1962, %v1965
          %vm1967 = vweird.f32 %v1961
          %vm1968 = vweird.f32 %v1962
          %vm1969 = vmor %vm1967, %vm1968
          %v1970 = vsel %vm1969, %v1962, %v1966
          %v1971 = vand.u32 2147483647, %v1961
          %vm1972 = vcmp.eq.f32.partialorder %v1971, 8.507059e+37
          %v1973 = vand.u32 %v1961, 2147483648
          %v1974 = vor.u32 1.1754944e-38, %v1973
          %v1975 = vsel %vm1972, %v1974, %v1970
          %v1976 = vmul.f32 %v1960, %v1975
          %v1978 = vperm.slane %v990, 0
          %v1980 = vadd.f32 %v1976, %v1978
          %v1982 = vperm.slane %v962, 0
          %v1985 = vsel %vm1000, %v1980, 0
          %1987 = vmatpush.msra.mxu0 0.0
          %1988 = vmatpush.msra.mxu0 0.0
          %1989 = vmatpush.msra.mxu0 0.0
          %1990 = vmatpush.msra.mxu0 0.0
          %1991 = vmatpush.msra.mxu0 0.0
          %1992 = vmatpush.msra.mxu0 0.0
          %1993 = vmatpush.msra.mxu0 0.0
          %1994 = vmatpush.msra.mxu0 0.0
          %1995 = vmatpush.msra.mxu0 0.0
          %1996 = vmatpush.msra.mxu0 0.0
          %1997 = vmatpush.msra.mxu0 0.0
          %1998 = vmatpush.msra.mxu0 0.0
          %1999 = vmatpush.msra.mxu0 %v961
          %2000 = vmatpush.msra.mxu0 %v960
          %2001 = vmatpush.msra.mxu0 %v959
          %2002 = vmatpush.msra.mxu0 %v958
          %2003 = vmatmul.f32.gmra.mxu0 %v1985
          %v2004 = vpop.f32.mrf.mxu0
          %v2005 = vadd.f32 %v1982, %v2004
          %2006 = vdwg.mxu0
          %2008 = vrot.lane.b32.xlu0 %v2005, 120
          %v2009 = vpop.permute.xlu0 %2008
          %2010 = vrot.lane.b32.xlu0 %v2005, 112
          %v2011 = vpop.permute.xlu0 %2010
          %2012 = vrot.lane.b32.xlu0 %v2005, 104
          %v2013 = vpop.permute.xlu0 %2012
          %2015 = vrot.lane.b32.xlu0 %v1022, 120
          %v2016 = vpop.permute.xlu0 %2015
          %2018 = vrot.lane.b32.xlu0 %v1022, 112
          %v2019 = vpop.permute.xlu0 %2018
          %2021 = vrot.lane.b32.xlu0 %v1022, 104
          %v2022 = vpop.permute.xlu0 %2021
          %2024 = vxpose.xlu0.b32.start [1/16] %v1022, 128
          %2025 = vxpose.xlu0.b32.cont [2/16] 0.0, 128
          %2026 = vxpose.xlu0.b32.cont [3/16] 0.0, 128
          %2027 = vxpose.xlu0.b32.cont [4/16] 0.0, 128
          %2028 = vxpose.xlu0.b32.cont [5/16] 0.0, 128
          %2029 = vxpose.xlu0.b32.cont [6/16] 0.0, 128
          %2030 = vxpose.xlu0.b32.cont [7/16] 0.0, 128
          %2031 = vxpose.xlu0.b32.cont [8/16] 0.0, 128
          %2032 = vxpose.xlu0.b32.cont [9/16] 0.0, 128
          %2033 = vxpose.xlu0.b32.cont [10/16] 0.0, 128
          %2034 = vxpose.xlu0.b32.cont [11/16] 0.0, 128
          %2035 = vxpose.xlu0.b32.cont [12/16] 0.0, 128
          %2036 = vxpose.xlu0.b32.cont [13/16] 0.0, 128
          %2037 = vxpose.xlu0.b32.cont [14/16] 0.0, 128
          %2038 = vxpose.xlu0.b32.cont [15/16] 0.0, 128
          %2039 = vxpose.xlu0.b32.end [16/16] 0.0, 128
          %v2040 = vpop.trf.xlu0
          %v2041 = vpop.trf.xlu0
          %v2042 = vpop.trf.xlu0
          %v2043 = vpop.trf.xlu0
          %v2044 = vpop.trf.xlu0
          %v2045 = vpop.trf.xlu0
          %v2046 = vpop.trf.xlu0
          %v2047 = vpop.trf.xlu0
          %v2048 = vpop.trf.xlu0
          %v2049 = vpop.trf.xlu0
          %v2050 = vpop.trf.xlu0
          %v2051 = vpop.trf.xlu0
          %v2052 = vpop.trf.xlu0
          %v2053 = vpop.trf.xlu0
          %v2054 = vpop.trf.xlu0
          %v2055 = vpop.trf.xlu0
          %2056 = vxpose.xlu0.b32.start [1/16] %v2016, 128
          %2057 = vxpose.xlu0.b32.cont [2/16] 0.0, 128
          %2058 = vxpose.xlu0.b32.cont [3/16] 0.0, 128
          %2059 = vxpose.xlu0.b32.cont [4/16] 0.0, 128
          %2060 = vxpose.xlu0.b32.cont [5/16] 0.0, 128
          %2061 = vxpose.xlu0.b32.cont [6/16] 0.0, 128
          %2062 = vxpose.xlu0.b32.cont [7/16] 0.0, 128
          %2063 = vxpose.xlu0.b32.cont [8/16] 0.0, 128
          %2064 = vxpose.xlu0.b32.cont [9/16] 0.0, 128
          %2065 = vxpose.xlu0.b32.cont [10/16] 0.0, 128
          %2066 = vxpose.xlu0.b32.cont [11/16] 0.0, 128
          %2067 = vxpose.xlu0.b32.cont [12/16] 0.0, 128
          %2068 = vxpose.xlu0.b32.cont [13/16] 0.0, 128
          %2069 = vxpose.xlu0.b32.cont [14/16] 0.0, 128
          %2070 = vxpose.xlu0.b32.cont [15/16] 0.0, 128
          %2071 = vxpose.xlu0.b32.end [16/16] 0.0, 128
          %v2072 = vpop.trf.xlu0
          %v2073 = vpop.trf.xlu0
          %v2074 = vpop.trf.xlu0
          %v2075 = vpop.trf.xlu0
          %v2076 = vpop.trf.xlu0
          %v2077 = vpop.trf.xlu0
          %v2078 = vpop.trf.xlu0
          %v2079 = vpop.trf.xlu0
          %v2080 = vpop.trf.xlu0
          %v2081 = vpop.trf.xlu0
          %v2082 = vpop.trf.xlu0
          %v2083 = vpop.trf.xlu0
          %v2084 = vpop.trf.xlu0
          %v2085 = vpop.trf.xlu0
          %v2086 = vpop.trf.xlu0
          %v2087 = vpop.trf.xlu0
          %2088 = vxpose.xlu0.b32.start [1/16] %v2019, 128
          %2089 = vxpose.xlu0.b32.cont [2/16] 0.0, 128
          %2090 = vxpose.xlu0.b32.cont [3/16] 0.0, 128
          %2091 = vxpose.xlu0.b32.cont [4/16] 0.0, 128
          %2092 = vxpose.xlu0.b32.cont [5/16] 0.0, 128
          %2093 = vxpose.xlu0.b32.cont [6/16] 0.0, 128
          %2094 = vxpose.xlu0.b32.cont [7/16] 0.0, 128
          %2095 = vxpose.xlu0.b32.cont [8/16] 0.0, 128
          %2096 = vxpose.xlu0.b32.cont [9/16] 0.0, 128
          %2097 = vxpose.xlu0.b32.cont [10/16] 0.0, 128
          %2098 = vxpose.xlu0.b32.cont [11/16] 0.0, 128
          %2099 = vxpose.xlu0.b32.cont [12/16] 0.0, 128
          %2100 = vxpose.xlu0.b32.cont [13/16] 0.0, 128
          %2101 = vxpose.xlu0.b32.cont [14/16] 0.0, 128
          %2102 = vxpose.xlu0.b32.cont [15/16] 0.0, 128
          %2103 = vxpose.xlu0.b32.end [16/16] 0.0, 128
          %v2104 = vpop.trf.xlu0
          %v2105 = vpop.trf.xlu0
          %v2106 = vpop.trf.xlu0
          %v2107 = vpop.trf.xlu0
          %v2108 = vpop.trf.xlu0
          %v2109 = vpop.trf.xlu0
          %v2110 = vpop.trf.xlu0
          %v2111 = vpop.trf.xlu0
          %v2112 = vpop.trf.xlu0
          %v2113 = vpop.trf.xlu0
          %v2114 = vpop.trf.xlu0
          %v2115 = vpop.trf.xlu0
          %v2116 = vpop.trf.xlu0
          %v2117 = vpop.trf.xlu0
          %v2118 = vpop.trf.xlu0
          %v2119 = vpop.trf.xlu0
          %2120 = vxpose.xlu0.b32.start [1/16] %v2022, 128
          %2121 = vxpose.xlu0.b32.cont [2/16] 0.0, 128
          %2122 = vxpose.xlu0.b32.cont [3/16] 0.0, 128
          %2123 = vxpose.xlu0.b32.cont [4/16] 0.0, 128
          %2124 = vxpose.xlu0.b32.cont [5/16] 0.0, 128
          %2125 = vxpose.xlu0.b32.cont [6/16] 0.0, 128
          %2126 = vxpose.xlu0.b32.cont [7/16] 0.0, 128
          %2127 = vxpose.xlu0.b32.cont [8/16] 0.0, 128
          %2128 = vxpose.xlu0.b32.cont [9/16] 0.0, 128
          %2129 = vxpose.xlu0.b32.cont [10/16] 0.0, 128
          %2130 = vxpose.xlu0.b32.cont [11/16] 0.0, 128
          %2131 = vxpose.xlu0.b32.cont [12/16] 0.0, 128
          %2132 = vxpose.xlu0.b32.cont [13/16] 0.0, 128
          %2133 = vxpose.xlu0.b32.cont [14/16] 0.0, 128
          %2134 = vxpose.xlu0.b32.cont [15/16] 0.0, 128
          %2135 = vxpose.xlu0.b32.end [16/16] 0.0, 128
          %v2136 = vpop.trf.xlu0
          %v2137 = vpop.trf.xlu0
          %v2138 = vpop.trf.xlu0
          %v2139 = vpop.trf.xlu0
          %v2140 = vpop.trf.xlu0
          %v2141 = vpop.trf.xlu0
          %v2142 = vpop.trf.xlu0
          %v2143 = vpop.trf.xlu0
          %v2144 = vpop.trf.xlu0
          %v2145 = vpop.trf.xlu0
          %v2146 = vpop.trf.xlu0
          %v2147 = vpop.trf.xlu0
          %v2148 = vpop.trf.xlu0
          %v2149 = vpop.trf.xlu0
          %v2150 = vpop.trf.xlu0
          %v2151 = vpop.trf.xlu0
          %v2152 = vsel %vm1264, %v2005, 0
          %2154 = vmatpush.msra.mxu0 0.0
          %2155 = vmatpush.msra.mxu0 0.0
          %2156 = vmatpush.msra.mxu0 0.0
          %2157 = vmatpush.msra.mxu0 0.0
          %2158 = vmatpush.msra.mxu0 0.0
          %2159 = vmatpush.msra.mxu0 0.0
          %2160 = vmatpush.msra.mxu0 0.0
          %2161 = vmatpush.msra.mxu0 0.0
          %2162 = vmatpush.msra.mxu0 0.0
          %2163 = vmatpush.msra.mxu0 0.0
          %2164 = vmatpush.msra.mxu0 0.0
          %2165 = vmatpush.msra.mxu0 0.0
          %2166 = vmatpush.msra.mxu0 0.0
          %2167 = vmatpush.msra.mxu0 0.0
          %2168 = vmatpush.msra.mxu0 0.0
          %2169 = vmatpush.msra.mxu0 %v2040
          %2170 = vmatmul.f32.gmra.mxu0 %v2152
          %v2171 = vpop.f32.mrf.mxu0
          %v2172 = vadd.f32 0.0, %v2171
          %2173 = vdwg.mxu0
          %v2174 = vsel %vm1264, %v2009, 0
          %2176 = vmatpush.msra.mxu0 0.0
          %2177 = vmatpush.msra.mxu0 0.0
          %2178 = vmatpush.msra.mxu0 0.0
          %2179 = vmatpush.msra.mxu0 0.0
          %2180 = vmatpush.msra.mxu0 0.0
          %2181 = vmatpush.msra.mxu0 0.0
          %2182 = vmatpush.msra.mxu0 0.0
          %2183 = vmatpush.msra.mxu0 0.0
          %2184 = vmatpush.msra.mxu0 0.0
          %2185 = vmatpush.msra.mxu0 0.0
          %2186 = vmatpush.msra.mxu0 0.0
          %2187 = vmatpush.msra.mxu0 0.0
          %2188 = vmatpush.msra.mxu0 0.0
          %2189 = vmatpush.msra.mxu0 0.0
          %2190 = vmatpush.msra.mxu0 0.0
          %2191 = vmatpush.msra.mxu0 %v2072
          %2192 = vmatmul.f32.gmra.mxu0 %v2174
          %v2193 = vpop.f32.mrf.mxu0
          %v2194 = vadd.f32 0.0, %v2193
          %2195 = vdwg.mxu0
          %v2196 = vsel %vm1264, %v2011, 0
          %2198 = vmatpush.msra.mxu0 0.0
          %2199 = vmatpush.msra.mxu0 0.0
          %2200 = vmatpush.msra.mxu0 0.0
          %2201 = vmatpush.msra.mxu0 0.0
          %2202 = vmatpush.msra.mxu0 0.0
          %2203 = vmatpush.msra.mxu0 0.0
          %2204 = vmatpush.msra.mxu0 0.0
          %2205 = vmatpush.msra.mxu0 0.0
          %2206 = vmatpush.msra.mxu0 0.0
          %2207 = vmatpush.msra.mxu0 0.0
          %2208 = vmatpush.msra.mxu0 0.0
          %2209 = vmatpush.msra.mxu0 0.0
          %2210 = vmatpush.msra.mxu0 0.0
          %2211 = vmatpush.msra.mxu0 0.0
          %2212 = vmatpush.msra.mxu0 0.0
          %2213 = vmatpush.msra.mxu0 %v2104
          %2214 = vmatmul.f32.gmra.mxu0 %v2196
          %v2215 = vpop.f32.mrf.mxu0
          %v2216 = vadd.f32 0.0, %v2215
          %2217 = vdwg.mxu0
          %v2218 = vsel %vm1264, %v2013, 0
          %2220 = vmatpush.msra.mxu0 0.0
          %2221 = vmatpush.msra.mxu0 0.0
          %2222 = vmatpush.msra.mxu0 0.0
          %2223 = vmatpush.msra.mxu0 0.0
          %2224 = vmatpush.msra.mxu0 0.0
          %2225 = vmatpush.msra.mxu0 0.0
          %2226 = vmatpush.msra.mxu0 0.0
          %2227 = vmatpush.msra.mxu0 0.0
          %2228 = vmatpush.msra.mxu0 0.0
          %2229 = vmatpush.msra.mxu0 0.0
          %2230 = vmatpush.msra.mxu0 0.0
          %2231 = vmatpush.msra.mxu0 0.0
          %2232 = vmatpush.msra.mxu0 0.0
          %2233 = vmatpush.msra.mxu0 0.0
          %2234 = vmatpush.msra.mxu0 0.0
          %2235 = vmatpush.msra.mxu0 %v2136
          %2236 = vmatmul.f32.gmra.mxu0 %v2218
          %v2237 = vpop.f32.mrf.mxu0
          %v2238 = vadd.f32 0.0, %v2237
          %2239 = vdwg.mxu0
          %v2240 = vmul.f32 %v2172, 0.35355338
          %v2241 = vmul.f32 %v2194, 0.35355338
          %v2242 = vmul.f32 %v2216, 0.35355338
          %v2243 = vmul.f32 %v2238, 0.35355338
          %v2244 = vsel %vm996, 1, 0
          %v2245 = vperm.slane %v2244, 0
          %vm2246 = vcmp.eq.s32.totalorder %v2245, 1
          %v2247 = vsel %vm2246, -1e+09, %v2240
          %v2248 = vsel %vm2246, -1e+09, %v2241
          %v2249 = vsel %vm2246, -1e+09, %v2242
          %v2250 = vsel %vm2246, -1e+09, %v2243
          %v2251 = vsel %vm1264, %v2247, -inf
          %2252 = vmax.xlane.f32.xlu0 %v2251
          %v2253 = vpop.xlane.xlu0 %2252
          %v2254 = vsel %vm1264, %v2248, -inf
          %2255 = vmax.xlane.f32.xlu0 %v2254
          %v2256 = vpop.xlane.xlu0 %2255
          %v2257 = vsel %vm1264, %v2249, -inf
          %2258 = vmax.xlane.f32.xlu0 %v2257
          %v2259 = vpop.xlane.xlu0 %2258
          %v2260 = vsel %vm1264, %v2250, -inf
          %2261 = vmax.xlane.f32.xlu0 %v2260
          %v2262 = vpop.xlane.xlu0 %2261
          %v2263 = vsub.f32 %v2247, %v2253
          %v2264 = vsub.f32 %v2248, %v2256
          %v2265 = vsub.f32 %v2249, %v2259
          %v2266 = vsub.f32 %v2250, %v2262
          %v2267 = vmul.f32 %v2263, 1.442695
          %v2268 = vpow.pop %v2267
          %v2269 = vmul.f32 %v2264, 1.442695
          %v2270 = vpow.pop %v2269
          %v2271 = vmul.f32 %v2265, 1.442695
          %v2272 = vpow.pop %v2271
          %v2273 = vmul.f32 %v2266, 1.442695
          %v2274 = vpow.pop %v2273
          %v2275 = vsel %vm1264, %v2268, 0.0
          %2276 = vadd.xlane.f32.xlu0 %v2275
          %v2277 = vpop.xlane.xlu0 %2276
          %v2278 = vsel %vm1264, %v2270, 0.0
          %2279 = vadd.xlane.f32.xlu0 %v2278
          %v2280 = vpop.xlane.xlu0 %2279
          %v2281 = vsel %vm1264, %v2272, 0.0
          %2282 = vadd.xlane.f32.xlu0 %v2281
          %v2283 = vpop.xlane.xlu0 %2282
          %v2284 = vsel %vm1264, %v2274, 0.0
          %2285 = vadd.xlane.f32.xlu0 %v2284
          %v2286 = vpop.xlane.xlu0 %2285
          %v2287 = vrcp.pop %v2277
          %v2288 = vrcp.pop %v2280
          %v2289 = vrcp.pop %v2283
          %v2290 = vrcp.pop %v2286
          %v2291 = vmul.f32 %v2268, %v2287
          %v2292 = vmul.f32 %v2270, %v2288
          %v2293 = vmul.f32 %v2272, %v2289
          %v2294 = vmul.f32 %v2274, %v2290
          %2295 = vrot.lane.b32.xlu0 %v1022, 96
          %v2296 = vpop.permute.xlu0 %2295
          %2297 = vrot.lane.b32.xlu0 %v2016, 96
          %v2298 = vpop.permute.xlu0 %2297
          %2299 = vrot.lane.b32.xlu0 %v2019, 96
          %v2300 = vpop.permute.xlu0 %2299
          %2301 = vrot.lane.b32.xlu0 %v2022, 96
          %v2302 = vpop.permute.xlu0 %2301
          %2307 = vxpose.xlu0.b32.start [1/16] %v2296, 128
          %2308 = vxpose.xlu0.b32.cont [2/16] 0.0, 128
          %2309 = vxpose.xlu0.b32.cont [3/16] 0.0, 128
          %2310 = vxpose.xlu0.b32.cont [4/16] 0.0, 128
          %2311 = vxpose.xlu0.b32.cont [5/16] 0.0, 128
          %2312 = vxpose.xlu0.b32.cont [6/16] 0.0, 128
          %2313 = vxpose.xlu0.b32.cont [7/16] 0.0, 128
          %2314 = vxpose.xlu0.b32.cont [8/16] 0.0, 128
          %2315 = vxpose.xlu0.b32.cont [9/16] 0.0, 128
          %2316 = vxpose.xlu0.b32.cont [10/16] 0.0, 128
          %2317 = vxpose.xlu0.b32.cont [11/16] 0.0, 128
          %2318 = vxpose.xlu0.b32.cont [12/16] 0.0, 128
          %2319 = vxpose.xlu0.b32.cont [13/16] 0.0, 128
          %2320 = vxpose.xlu0.b32.cont [14/16] 0.0, 128
          %2321 = vxpose.xlu0.b32.cont [15/16] 0.0, 128
          %2322 = vxpose.xlu0.b32.end [16/16] 0.0, 128
          %v2323 = vpop.trf.xlu0
          %v2324 = vpop.trf.xlu0
          %v2325 = vpop.trf.xlu0
          %v2326 = vpop.trf.xlu0
          %v2327 = vpop.trf.xlu0
          %v2328 = vpop.trf.xlu0
          %v2329 = vpop.trf.xlu0
          %v2330 = vpop.trf.xlu0
          %v2331 = vpop.trf.xlu0
          %v2332 = vpop.trf.xlu0
          %v2333 = vpop.trf.xlu0
          %v2334 = vpop.trf.xlu0
          %v2335 = vpop.trf.xlu0
          %v2336 = vpop.trf.xlu0
          %v2337 = vpop.trf.xlu0
          %v2338 = vpop.trf.xlu0
          %2339 = vxpose.xlu0.b32.start [1/16] %v2298, 128
          %2340 = vxpose.xlu0.b32.cont [2/16] 0.0, 128
          %2341 = vxpose.xlu0.b32.cont [3/16] 0.0, 128
          %2342 = vxpose.xlu0.b32.cont [4/16] 0.0, 128
          %2343 = vxpose.xlu0.b32.cont [5/16] 0.0, 128
          %2344 = vxpose.xlu0.b32.cont [6/16] 0.0, 128
          %2345 = vxpose.xlu0.b32.cont [7/16] 0.0, 128
          %2346 = vxpose.xlu0.b32.cont [8/16] 0.0, 128
          %2347 = vxpose.xlu0.b32.cont [9/16] 0.0, 128
          %2348 = vxpose.xlu0.b32.cont [10/16] 0.0, 128
          %2349 = vxpose.xlu0.b32.cont [11/16] 0.0, 128
          %2350 = vxpose.xlu0.b32.cont [12/16] 0.0, 128
          %2351 = vxpose.xlu0.b32.cont [13/16] 0.0, 128
          %2352 = vxpose.xlu0.b32.cont [14/16] 0.0, 128
          %2353 = vxpose.xlu0.b32.cont [15/16] 0.0, 128
          %2354 = vxpose.xlu0.b32.end [16/16] 0.0, 128
          %v2355 = vpop.trf.xlu0
          %v2356 = vpop.trf.xlu0
          %v2357 = vpop.trf.xlu0
          %v2358 = vpop.trf.xlu0
          %v2359 = vpop.trf.xlu0
          %v2360 = vpop.trf.xlu0
          %v2361 = vpop.trf.xlu0
          %v2362 = vpop.trf.xlu0
          %v2363 = vpop.trf.xlu0
          %v2364 = vpop.trf.xlu0
          %v2365 = vpop.trf.xlu0
          %v2366 = vpop.trf.xlu0
          %v2367 = vpop.trf.xlu0
          %v2368 = vpop.trf.xlu0
          %v2369 = vpop.trf.xlu0
          %v2370 = vpop.trf.xlu0
          %2371 = vxpose.xlu0.b32.start [1/16] %v2300, 128
          %2372 = vxpose.xlu0.b32.cont [2/16] 0.0, 128
          %2373 = vxpose.xlu0.b32.cont [3/16] 0.0, 128
          %2374 = vxpose.xlu0.b32.cont [4/16] 0.0, 128
          %2375 = vxpose.xlu0.b32.cont [5/16] 0.0, 128
          %2376 = vxpose.xlu0.b32.cont [6/16] 0.0, 128
          %2377 = vxpose.xlu0.b32.cont [7/16] 0.0, 128
          %2378 = vxpose.xlu0.b32.cont [8/16] 0.0, 128
          %2379 = vxpose.xlu0.b32.cont [9/16] 0.0, 128
          %2380 = vxpose.xlu0.b32.cont [10/16] 0.0, 128
          %2381 = vxpose.xlu0.b32.cont [11/16] 0.0, 128
          %2382 = vxpose.xlu0.b32.cont [12/16] 0.0, 128
          %2383 = vxpose.xlu0.b32.cont [13/16] 0.0, 128
          %2384 = vxpose.xlu0.b32.cont [14/16] 0.0, 128
          %2385 = vxpose.xlu0.b32.cont [15/16] 0.0, 128
          %2386 = vxpose.xlu0.b32.end [16/16] 0.0, 128
          %v2387 = vpop.trf.xlu0
          %v2388 = vpop.trf.xlu0
          %v2389 = vpop.trf.xlu0
          %v2390 = vpop.trf.xlu0
          %v2391 = vpop.trf.xlu0
          %v2392 = vpop.trf.xlu0
          %v2393 = vpop.trf.xlu0
          %v2394 = vpop.trf.xlu0
          %v2395 = vpop.trf.xlu0
          %v2396 = vpop.trf.xlu0
          %v2397 = vpop.trf.xlu0
          %v2398 = vpop.trf.xlu0
          %v2399 = vpop.trf.xlu0
          %v2400 = vpop.trf.xlu0
          %v2401 = vpop.trf.xlu0
          %v2402 = vpop.trf.xlu0
          %2403 = vxpose.xlu0.b32.start [1/16] %v2302, 128
          %2404 = vxpose.xlu0.b32.cont [2/16] 0.0, 128
          %2405 = vxpose.xlu0.b32.cont [3/16] 0.0, 128
          %2406 = vxpose.xlu0.b32.cont [4/16] 0.0, 128
          %2407 = vxpose.xlu0.b32.cont [5/16] 0.0, 128
          %2408 = vxpose.xlu0.b32.cont [6/16] 0.0, 128
          %2409 = vxpose.xlu0.b32.cont [7/16] 0.0, 128
          %2410 = vxpose.xlu0.b32.cont [8/16] 0.0, 128
          %2411 = vxpose.xlu0.b32.cont [9/16] 0.0, 128
          %2412 = vxpose.xlu0.b32.cont [10/16] 0.0, 128
          %2413 = vxpose.xlu0.b32.cont [11/16] 0.0, 128
          %2414 = vxpose.xlu0.b32.cont [12/16] 0.0, 128
          %2415 = vxpose.xlu0.b32.cont [13/16] 0.0, 128
          %2416 = vxpose.xlu0.b32.cont [14/16] 0.0, 128
          %2417 = vxpose.xlu0.b32.cont [15/16] 0.0, 128
          %2418 = vxpose.xlu0.b32.end [16/16] 0.0, 128
          %v2419 = vpop.trf.xlu0
          %v2420 = vpop.trf.xlu0
          %v2421 = vpop.trf.xlu0
          %v2422 = vpop.trf.xlu0
          %v2423 = vpop.trf.xlu0
          %v2424 = vpop.trf.xlu0
          %v2425 = vpop.trf.xlu0
          %v2426 = vpop.trf.xlu0
          %v2427 = vpop.trf.xlu0
          %v2428 = vpop.trf.xlu0
          %v2429 = vpop.trf.xlu0
          %v2430 = vpop.trf.xlu0
          %v2431 = vpop.trf.xlu0
          %v2432 = vpop.trf.xlu0
          %v2433 = vpop.trf.xlu0
          %v2434 = vpop.trf.xlu0
          %v2436 = vsel %vm1264, %v2323, 0
          %v2439 = vsel %vm1264, %v2291, 0
          %2441 = vmatpush.xpose.msra.mxu0 0.0
          %2442 = vmatpush.xpose.msra.mxu0 0.0
          %2443 = vmatpush.xpose.msra.mxu0 0.0
          %2444 = vmatpush.xpose.msra.mxu0 0.0
          %2445 = vmatpush.xpose.msra.mxu0 0.0
          %2446 = vmatpush.xpose.msra.mxu0 0.0
          %2447 = vmatpush.xpose.msra.mxu0 0.0
          %2448 = vmatpush.xpose.msra.mxu0 0.0
          %2449 = vmatpush.xpose.msra.mxu0 0.0
          %2450 = vmatpush.xpose.msra.mxu0 0.0
          %2451 = vmatpush.xpose.msra.mxu0 0.0
          %2452 = vmatpush.xpose.msra.mxu0 0.0
          %2453 = vmatpush.xpose.msra.mxu0 0.0
          %2454 = vmatpush.xpose.msra.mxu0 0.0
          %2455 = vmatpush.xpose.msra.mxu0 0.0
          %2456 = vmatpush.xpose.msra.mxu0 %v2439
          %2457 = vmatmul.f32.gmra.mxu0 %v2436
          %v2458 = vpop.f32.mrf.mxu0
          %v2459 = vadd.f32 0.0, %v2458
          %2460 = vdwg.mxu0
          %v2462 = vsel %vm1264, %v2355, 0
          %v2465 = vsel %vm1264, %v2292, 0
          %2467 = vmatpush.xpose.msra.mxu0 0.0
          %2468 = vmatpush.xpose.msra.mxu0 0.0
          %2469 = vmatpush.xpose.msra.mxu0 0.0
          %2470 = vmatpush.xpose.msra.mxu0 0.0
          %2471 = vmatpush.xpose.msra.mxu0 0.0
          %2472 = vmatpush.xpose.msra.mxu0 0.0
          %2473 = vmatpush.xpose.msra.mxu0 0.0
          %2474 = vmatpush.xpose.msra.mxu0 0.0
          %2475 = vmatpush.xpose.msra.mxu0 0.0
          %2476 = vmatpush.xpose.msra.mxu0 0.0
          %2477 = vmatpush.xpose.msra.mxu0 0.0
          %2478 = vmatpush.xpose.msra.mxu0 0.0
          %2479 = vmatpush.xpose.msra.mxu0 0.0
          %2480 = vmatpush.xpose.msra.mxu0 0.0
          %2481 = vmatpush.xpose.msra.mxu0 0.0
          %2482 = vmatpush.xpose.msra.mxu0 %v2465
          %2483 = vmatmul.f32.gmra.mxu0 %v2462
          %v2484 = vpop.f32.mrf.mxu0
          %v2485 = vadd.f32 0.0, %v2484
          %2486 = vdwg.mxu0
          %v2488 = vsel %vm1264, %v2387, 0
          %v2491 = vsel %vm1264, %v2293, 0
          %2493 = vmatpush.xpose.msra.mxu0 0.0
          %2494 = vmatpush.xpose.msra.mxu0 0.0
          %2495 = vmatpush.xpose.msra.mxu0 0.0
          %2496 = vmatpush.xpose.msra.mxu0 0.0
          %2497 = vmatpush.xpose.msra.mxu0 0.0
          %2498 = vmatpush.xpose.msra.mxu0 0.0
          %2499 = vmatpush.xpose.msra.mxu0 0.0
          %2500 = vmatpush.xpose.msra.mxu0 0.0
          %2501 = vmatpush.xpose.msra.mxu0 0.0
          %2502 = vmatpush.xpose.msra.mxu0 0.0
          %2503 = vmatpush.xpose.msra.mxu0 0.0
          %2504 = vmatpush.xpose.msra.mxu0 0.0
          %2505 = vmatpush.xpose.msra.mxu0 0.0
          %2506 = vmatpush.xpose.msra.mxu0 0.0
          %2507 = vmatpush.xpose.msra.mxu0 0.0
          %2508 = vmatpush.xpose.msra.mxu0 %v2491
          %2509 = vmatmul.f32.gmra.mxu0 %v2488
          %v2510 = vpop.f32.mrf.mxu0
          %v2511 = vadd.f32 0.0, %v2510
          %2512 = vdwg.mxu0
          %v2514 = vsel %vm1264, %v2419, 0
          %v2517 = vsel %vm1264, %v2294, 0
          %2519 = vmatpush.xpose.msra.mxu0 0.0
          %2520 = vmatpush.xpose.msra.mxu0 0.0
          %2521 = vmatpush.xpose.msra.mxu0 0.0
          %2522 = vmatpush.xpose.msra.mxu0 0.0
          %2523 = vmatpush.xpose.msra.mxu0 0.0
          %2524 = vmatpush.xpose.msra.mxu0 0.0
          %2525 = vmatpush.xpose.msra.mxu0 0.0
          %2526 = vmatpush.xpose.msra.mxu0 0.0
          %2527 = vmatpush.xpose.msra.mxu0 0.0
          %2528 = vmatpush.xpose.msra.mxu0 0.0
          %2529 = vmatpush.xpose.msra.mxu0 0.0
          %2530 = vmatpush.xpose.msra.mxu0 0.0
          %2531 = vmatpush.xpose.msra.mxu0 0.0
          %2532 = vmatpush.xpose.msra.mxu0 0.0
          %2533 = vmatpush.xpose.msra.mxu0 0.0
          %2534 = vmatpush.xpose.msra.mxu0 %v2517
          %2535 = vmatmul.f32.gmra.mxu0 %v2514
          %v2536 = vpop.f32.mrf.mxu0
          %v2537 = vadd.f32 0.0, %v2536
          %2538 = vdwg.mxu0
          %2539 = vxpose.xlu0.b32.start [1/16] %v2459, 128
          %2540 = vxpose.xlu0.b32.cont [2/16] 0.0, 128
          %2541 = vxpose.xlu0.b32.cont [3/16] 0.0, 128
          %2542 = vxpose.xlu0.b32.cont [4/16] 0.0, 128
          %2543 = vxpose.xlu0.b32.cont [5/16] 0.0, 128
          %2544 = vxpose.xlu0.b32.cont [6/16] 0.0, 128
          %2545 = vxpose.xlu0.b32.cont [7/16] 0.0, 128
          %2546 = vxpose.xlu0.b32.cont [8/16] 0.0, 128
          %2547 = vxpose.xlu0.b32.cont [9/16] 0.0, 128
          %2548 = vxpose.xlu0.b32.cont [10/16] 0.0, 128
          %2549 = vxpose.xlu0.b32.cont [11/16] 0.0, 128
          %2550 = vxpose.xlu0.b32.cont [12/16] 0.0, 128
          %2551 = vxpose.xlu0.b32.cont [13/16] 0.0, 128
          %2552 = vxpose.xlu0.b32.cont [14/16] 0.0, 128
          %2553 = vxpose.xlu0.b32.cont [15/16] 0.0, 128
          %2554 = vxpose.xlu0.b32.end [16/16] 0.0, 128
          %v2555 = vpop.trf.xlu0
          %v2556 = vpop.trf.xlu0
          %v2557 = vpop.trf.xlu0
          %v2558 = vpop.trf.xlu0
          %v2559 = vpop.trf.xlu0
          %v2560 = vpop.trf.xlu0
          %v2561 = vpop.trf.xlu0
          %v2562 = vpop.trf.xlu0
          %v2563 = vpop.trf.xlu0
          %v2564 = vpop.trf.xlu0
          %v2565 = vpop.trf.xlu0
          %v2566 = vpop.trf.xlu0
          %v2567 = vpop.trf.xlu0
          %v2568 = vpop.trf.xlu0
          %v2569 = vpop.trf.xlu0
          %v2570 = vpop.trf.xlu0
          %2571 = vxpose.xlu0.b32.start [1/16] %v2485, 128
          %2572 = vxpose.xlu0.b32.cont [2/16] 0.0, 128
          %2573 = vxpose.xlu0.b32.cont [3/16] 0.0, 128
          %2574 = vxpose.xlu0.b32.cont [4/16] 0.0, 128
          %2575 = vxpose.xlu0.b32.cont [5/16] 0.0, 128
          %2576 = vxpose.xlu0.b32.cont [6/16] 0.0, 128
          %2577 = vxpose.xlu0.b32.cont [7/16] 0.0, 128
          %2578 = vxpose.xlu0.b32.cont [8/16] 0.0, 128
          %2579 = vxpose.xlu0.b32.cont [9/16] 0.0, 128
          %2580 = vxpose.xlu0.b32.cont [10/16] 0.0, 128
          %2581 = vxpose.xlu0.b32.cont [11/16] 0.0, 128
          %2582 = vxpose.xlu0.b32.cont [12/16] 0.0, 128
          %2583 = vxpose.xlu0.b32.cont [13/16] 0.0, 128
          %2584 = vxpose.xlu0.b32.cont [14/16] 0.0, 128
          %2585 = vxpose.xlu0.b32.cont [15/16] 0.0, 128
          %2586 = vxpose.xlu0.b32.end [16/16] 0.0, 128
          %v2587 = vpop.trf.xlu0
          %v2588 = vpop.trf.xlu0
          %v2589 = vpop.trf.xlu0
          %v2590 = vpop.trf.xlu0
          %v2591 = vpop.trf.xlu0
          %v2592 = vpop.trf.xlu0
          %v2593 = vpop.trf.xlu0
          %v2594 = vpop.trf.xlu0
          %v2595 = vpop.trf.xlu0
          %v2596 = vpop.trf.xlu0
          %v2597 = vpop.trf.xlu0
          %v2598 = vpop.trf.xlu0
          %v2599 = vpop.trf.xlu0
          %v2600 = vpop.trf.xlu0
          %v2601 = vpop.trf.xlu0
          %v2602 = vpop.trf.xlu0
          %2603 = vxpose.xlu0.b32.start [1/16] %v2511, 128
          %2604 = vxpose.xlu0.b32.cont [2/16] 0.0, 128
          %2605 = vxpose.xlu0.b32.cont [3/16] 0.0, 128
          %2606 = vxpose.xlu0.b32.cont [4/16] 0.0, 128
          %2607 = vxpose.xlu0.b32.cont [5/16] 0.0, 128
          %2608 = vxpose.xlu0.b32.cont [6/16] 0.0, 128
          %2609 = vxpose.xlu0.b32.cont [7/16] 0.0, 128
          %2610 = vxpose.xlu0.b32.cont [8/16] 0.0, 128
          %2611 = vxpose.xlu0.b32.cont [9/16] 0.0, 128
          %2612 = vxpose.xlu0.b32.cont [10/16] 0.0, 128
          %2613 = vxpose.xlu0.b32.cont [11/16] 0.0, 128
          %2614 = vxpose.xlu0.b32.cont [12/16] 0.0, 128
          %2615 = vxpose.xlu0.b32.cont [13/16] 0.0, 128
          %2616 = vxpose.xlu0.b32.cont [14/16] 0.0, 128
          %2617 = vxpose.xlu0.b32.cont [15/16] 0.0, 128
          %2618 = vxpose.xlu0.b32.end [16/16] 0.0, 128
          %v2619 = vpop.trf.xlu0
          %v2620 = vpop.trf.xlu0
          %v2621 = vpop.trf.xlu0
          %v2622 = vpop.trf.xlu0
          %v2623 = vpop.trf.xlu0
          %v2624 = vpop.trf.xlu0
          %v2625 = vpop.trf.xlu0
          %v2626 = vpop.trf.xlu0
          %v2627 = vpop.trf.xlu0
          %v2628 = vpop.trf.xlu0
          %v2629 = vpop.trf.xlu0
          %v2630 = vpop.trf.xlu0
          %v2631 = vpop.trf.xlu0
          %v2632 = vpop.trf.xlu0
          %v2633 = vpop.trf.xlu0
          %v2634 = vpop.trf.xlu0
          %2635 = vxpose.xlu0.b32.start [1/16] %v2537, 128
          %2636 = vxpose.xlu0.b32.cont [2/16] 0.0, 128
          %2637 = vxpose.xlu0.b32.cont [3/16] 0.0, 128
          %2638 = vxpose.xlu0.b32.cont [4/16] 0.0, 128
          %2639 = vxpose.xlu0.b32.cont [5/16] 0.0, 128
          %2640 = vxpose.xlu0.b32.cont [6/16] 0.0, 128
          %2641 = vxpose.xlu0.b32.cont [7/16] 0.0, 128
          %2642 = vxpose.xlu0.b32.cont [8/16] 0.0, 128
          %2643 = vxpose.xlu0.b32.cont [9/16] 0.0, 128
          %2644 = vxpose.xlu0.b32.cont [10/16] 0.0, 128
          %2645 = vxpose.xlu0.b32.cont [11/16] 0.0, 128
          %2646 = vxpose.xlu0.b32.cont [12/16] 0.0, 128
          %2647 = vxpose.xlu0.b32.cont [13/16] 0.0, 128
          %2648 = vxpose.xlu0.b32.cont [14/16] 0.0, 128
          %2649 = vxpose.xlu0.b32.cont [15/16] 0.0, 128
          %2650 = vxpose.xlu0.b32.end [16/16] 0.0, 128
          %v2651 = vpop.trf.xlu0
          %v2652 = vpop.trf.xlu0
          %v2653 = vpop.trf.xlu0
          %v2654 = vpop.trf.xlu0
          %v2655 = vpop.trf.xlu0
          %v2656 = vpop.trf.xlu0
          %v2657 = vpop.trf.xlu0
          %v2658 = vpop.trf.xlu0
          %v2659 = vpop.trf.xlu0
          %v2660 = vpop.trf.xlu0
          %v2661 = vpop.trf.xlu0
          %v2662 = vpop.trf.xlu0
          %v2663 = vpop.trf.xlu0
          %v2664 = vpop.trf.xlu0
          %v2665 = vpop.trf.xlu0
          %v2666 = vpop.trf.xlu0
          %v2667 = vrot.slane %v2619, 4
          %v2668 = vsel %vm1780, %v2667, %v2555
          %v2669 = vrot.slane %v2555, 4
          %v2670 = vsel %vm1780, %v2619, %v2669
          %v2672 = vunpack.c.l.s4 1983009808
          %v2673 = vunpack.c.0.s8 %v2672
          %v2674 = vperm.slane %v2668, %v2673
          %v2676 = vunpack.c.l.s4 1983009808
          %v2677 = vunpack.c.0.s8 %v2676
          %v2678 = vperm.slane %v2670, %v2677
          %v2679 = vrot.slane %v2651, 4
          %v2680 = vsel %vm1780, %v2679, %v2587
          %v2681 = vrot.slane %v2587, 4
          %v2682 = vsel %vm1780, %v2651, %v2681
          %v2684 = vunpack.c.l.s4 1983009808
          %v2685 = vunpack.c.0.s8 %v2684
          %v2686 = vperm.slane %v2680, %v2685
          %v2688 = vunpack.c.l.s4 1983009808
          %v2689 = vunpack.c.0.s8 %v2688
          %v2690 = vperm.slane %v2682, %v2689
          %v2691 = vrot.slane %v2686, 4
          %v2692 = vsel %vm1780, %v2691, %v2674
          %v2693 = vrot.slane %v2674, 4
          %v2694 = vsel %vm1780, %v2686, %v2693
          %v2696 = vunpack.c.l.s4 1934713408
          %v2697 = vunpack.c.0.s8 %v2696
          %v2698 = vperm.slane %v2692, %v2697
          %v2700 = vunpack.c.l.s4 1934713408
          %v2701 = vunpack.c.0.s8 %v2700
          %v2702 = vperm.slane %v2694, %v2701
          %v2703 = vrot.slane %v2690, 4
          %v2704 = vsel %vm1780, %v2703, %v2678
          %v2705 = vrot.slane %v2678, 4
          %v2706 = vsel %vm1780, %v2690, %v2705
          %v2708 = vunpack.c.l.s4 1934713408
          %v2709 = vunpack.c.0.s8 %v2708
          %v2710 = vperm.slane %v2704, %v2709
          %v2712 = vunpack.c.l.s4 1934713408
          %v2713 = vunpack.c.0.s8 %v2712
          %v2714 = vperm.slane %v2706, %v2713
          %v2715 = vrot.slane %v2698, 4
          %v2716 = vsel %vm1780, 0.0, %v2715
          %v2717 = vrot.slane %v2702, 4
          %v2718 = vsel %vm1780, 0.0, %v2717
          %v2719 = vrot.slane %v2710, 4
          %v2720 = vsel %vm1780, 0.0, %v2719
          %v2721 = vrot.slane %v2714, 4
          %v2722 = vsel %vm1780, 0.0, %v2721
          %v2723 = vsel %vm1780, %v2717, %v2698
          %v2725 = vunpack.c.l.s4 1983009808
          %v2726 = vunpack.c.0.s8 %v2725
          %v2727 = vperm.slane %v2723, %v2726
          %v2728 = vrot.slane %v2718, 4
          %v2729 = vsel %vm1780, %v2728, %v2716
          %v2731 = vunpack.c.l.s4 1983009808
          %v2732 = vunpack.c.0.s8 %v2731
          %v2733 = vperm.slane %v2729, %v2732
          %v2734 = vsel %vm1780, %v2721, %v2710
          %v2736 = vunpack.c.l.s4 1983009808
          %v2737 = vunpack.c.0.s8 %v2736
          %v2738 = vperm.slane %v2734, %v2737
          %v2739 = vrot.slane %v2722, 4
          %v2740 = vsel %vm1780, %v2739, %v2720
          %v2742 = vunpack.c.l.s4 1983009808
          %v2743 = vunpack.c.0.s8 %v2742
          %v2744 = vperm.slane %v2740, %v2743
          %v2745 = vrot.slane %v2733, 4
          %v2746 = vsel %vm1780, %v2745, %v2727
          %v2747 = vrot.slane %v2727, 4
          %v2748 = vsel %vm1780, %v2733, %v2747
          %v2750 = vunpack.c.l.s4 1934713408
          %v2751 = vunpack.c.0.s8 %v2750
          %v2752 = vperm.slane %v2746, %v2751
          %v2754 = vunpack.c.l.s4 1934713408
          %v2755 = vunpack.c.0.s8 %v2754
          %v2756 = vperm.slane %v2748, %v2755
          %v2757 = vrot.slane %v2744, 4
          %v2758 = vsel %vm1780, %v2757, %v2738
          %v2759 = vrot.slane %v2738, 4
          %v2760 = vsel %vm1780, %v2744, %v2759
          %v2762 = vunpack.c.l.s4 1934713408
          %v2763 = vunpack.c.0.s8 %v2762
          %v2764 = vperm.slane %v2758, %v2763
          %v2766 = vunpack.c.l.s4 1934713408
          %v2767 = vunpack.c.0.s8 %v2766
          %v2768 = vperm.slane %v2760, %v2767
          %v2769 = vrot.slane %v2764, 4
          %v2770 = vsel %vm1780, %v2769, %v2752
          %v2771 = vrot.slane %v2752, 4
          %v2772 = vsel %vm1780, %v2764, %v2771
          %v2773 = vrot.slane %v2768, 4
          %v2774 = vsel %vm1780, %v2773, %v2756
          %v2775 = vrot.slane %v2756, 4
          %v2776 = vsel %vm1780, %v2768, %v2775
          %2778 = vrot.lane.b32.xlu0 %v2772, 8
          %v2779 = vpop.permute.xlu0 %2778
          %2782 = vrot.lane.b32.xlu0 %v2774, 16
          %v2783 = vpop.permute.xlu0 %2782
          %2786 = vrot.lane.b32.xlu0 %v2776, 24
          %v2787 = vpop.permute.xlu0 %2786
          %v2789 = vsel %vm1264, %v2770, %v2779
          %v2790 = vsel %vm1903, %v2789, %v2783
          %v2791 = vsel %vm1905, %v2790, %v2787
          %v2793 = vsel %vm1000, %v2791, 0
          %2795 = vmatpush.msra.mxu0 0.0
          %2796 = vmatpush.msra.mxu0 0.0
          %2797 = vmatpush.msra.mxu0 0.0
          %2798 = vmatpush.msra.mxu0 0.0
          %2799 = vmatpush.msra.mxu0 0.0
          %2800 = vmatpush.msra.mxu0 0.0
          %2801 = vmatpush.msra.mxu0 0.0
          %2802 = vmatpush.msra.mxu0 0.0
          %2803 = vmatpush.msra.mxu0 0.0
          %2804 = vmatpush.msra.mxu0 0.0
          %2805 = vmatpush.msra.mxu0 0.0
          %2806 = vmatpush.msra.mxu0 0.0
          %2807 = vmatpush.msra.mxu0 %v971
          %2808 = vmatpush.msra.mxu0 %v970
          %2809 = vmatpush.msra.mxu0 %v969
          %2810 = vmatpush.msra.mxu0 %v968
          %2811 = vmatmul.f32.gmra.mxu0 %v2793
          %v2812 = vpop.f32.mrf.mxu0
          %v2813 = vadd.f32 0.0, %v2812
          %2814 = vdwg.mxu0
          %v2815 = vadd.f32 %v1934, %v2813
          %v2817 = vperm.slane %v972, 0
          %v2819 = vadd.f32 %v2815, %v2817
          %v2820 = vsel %vm1000, %v2819, 0.0
          %2821 = vadd.xlane.f32.xlu0 %v2820
          %v2822 = vpop.xlane.xlu0 %2821
          %v2823 = vmul.f32 %v2822, %v1040
          %v2824 = vsub.f32 %v2819, %v2823
          %v2825 = vmul.f32 %v2824, %v2824
          %v2826 = vsel %vm1000, %v2825, 0.0
          %2827 = vadd.xlane.f32.xlu0 %v2826
          %v2828 = vpop.xlane.xlu0 %2827
          %v2829 = vmul.f32 %v2828, %v1053
          %v2830 = vrsqrt.pop %v2829
          %v2831 = vmul.f32 %v2830, %v2829
          %v2832 = vmul.f32 %v2831, %v2830
          %v2833 = vmul.f32 0.5, %v2832
          %v2834 = vsub.f32 1.5, %v2833
          %v2835 = vmul.f32 %v2830, %v2834
          %v2836 = vmul.f32 %v2829, %v2835
          %vm2837 = vcmp.eq.f32.partialorder %v2829, inf
          %v2838 = vsel %vm2837, %v2829, %v2836
          %vm2839 = vcmp.eq.f32.partialorder %v2829, 0.0
          %v2840 = vand.u32 %v2829, 2147483648
          %v2841 = vsel %vm2839, %v2840, %v2838
          %v2843 = vperm.slane %v991, 0
          %v2845 = vmul.f32 %v2843, %v2824
          %v2846 = vadd.f32 %v2841, 1e-06
          %v2847 = vrcp.pop %v2846
          %v2848 = vmul.f32 %v2846, %v2847
          %v2849 = vsub.f32 1.0, %v2848
          %v2850 = vmul.f32 %v2847, %v2849
          %v2851 = vadd.f32 %v2847, %v2850
          %vm2852 = vweird.f32 %v2846
          %vm2853 = vweird.f32 %v2847
          %vm2854 = vmor %vm2852, %vm2853
          %v2855 = vsel %vm2854, %v2847, %v2851
          %v2856 = vand.u32 2147483647, %v2846
          %vm2857 = vcmp.eq.f32.partialorder %v2856, 8.507059e+37
          %v2858 = vand.u32 %v2846, 2147483648
          %v2859 = vor.u32 1.1754944e-38, %v2858
          %v2860 = vsel %vm2857, %v2859, %v2855
          %v2861 = vmul.f32 %v2845, %v2860
          %v2863 = vperm.slane %v992, 0
          %v2865 = vadd.f32 %v2861, %v2863
          %v2867 = vperm.slane %v977, 0
          %v2870 = vsel %vm1000, %v2865, 0
          %2872 = vmatpush.msra.mxu0 0.0
          %2873 = vmatpush.msra.mxu0 0.0
          %2874 = vmatpush.msra.mxu0 0.0
          %2875 = vmatpush.msra.mxu0 0.0
          %2876 = vmatpush.msra.mxu0 0.0
          %2877 = vmatpush.msra.mxu0 0.0
          %2878 = vmatpush.msra.mxu0 0.0
          %2879 = vmatpush.msra.mxu0 0.0
          %2880 = vmatpush.msra.mxu0 0.0
          %2881 = vmatpush.msra.mxu0 0.0
          %2882 = vmatpush.msra.mxu0 0.0
          %2883 = vmatpush.msra.mxu0 0.0
          %2884 = vmatpush.msra.mxu0 %v976
          %2885 = vmatpush.msra.mxu0 %v975
          %2886 = vmatpush.msra.mxu0 %v974
          %2887 = vmatpush.msra.mxu0 %v973
          %2888 = vmatmul.f32.gmra.mxu0 %v2870
          %v2889 = vpop.f32.mrf.mxu0
          %v2890 = vadd.f32 %v2867, %v2889
          %2891 = vdwg.mxu0
          %v2892 = vmax.f32 %v2890, 0.0
          %vm2893 = vcmask 523264
          %v2895 = vsel %vm2893, %v2892, 0
          %2897 = vmatpush.msra.mxu0 0.0
          %2898 = vmatpush.msra.mxu0 0.0
          %2899 = vmatpush.msra.mxu0 0.0
          %2900 = vmatpush.msra.mxu0 0.0
          %2901 = vmatpush.msra.mxu0 0.0
          %2902 = vmatpush.msra.mxu0 0.0
          %2903 = vmatpush.msra.mxu0 0.0
          %2904 = vmatpush.msra.mxu0 0.0
          %2905 = vmatpush.msra.mxu0 %v985
          %2906 = vmatpush.msra.mxu0 %v984
          %2907 = vmatpush.msra.mxu0 %v983
          %2908 = vmatpush.msra.mxu0 %v982
          %2909 = vmatpush.msra.mxu0 %v981
          %2910 = vmatpush.msra.mxu0 %v980
          %2911 = vmatpush.msra.mxu0 %v979
          %2912 = vmatpush.msra.mxu0 %v978
          %2913 = vmatmul.f32.gmra.mxu0 %v2895
          %v2914 = vpop.f32.mrf.mxu0
          %v2915 = vadd.f32 0.0, %v2914
          %2916 = vdwg.mxu0
          %v2917 = vadd.f32 %v2819, %v2915
          %v2919 = vperm.slane %v986, 0
          %v2921 = vadd.f32 %v2917, %v2919
        $region157: #{tpu_custom_call.1} parent=123 // loop_footer
          %s1029 = sadd.s32 1, %s1025
        $region158: #{tpu_custom_call.1} parent=123 // loop_footer_branch
          %1024 = sbr.rel target = $region154
        $region159: #{tpu_custom_call.1} parent=123 // loop_exit
          _
        %v2922 = vsel %vm1000, %v1030, 0.0
        %2923 = vadd.xlane.f32.xlu0 %v2922
        %v2924 = vpop.xlane.xlu0 %2923
        %v2925 = vrcp.pop 32.0
        %v2926 = vmul.f32 32.0, %v2925
        %v2927 = vsub.f32 1.0, %v2926
        %v2928 = vmul.f32 %v2925, %v2927
        %v2929 = vadd.f32 %v2925, %v2928
        %vm2930 = vweird.f32 %v2925
        %v2931 = vsel %vm2930, %v2925, %v2929
        %v2932 = vmul.f32 %v2924, %v2931
        %v2933 = vsub.f32 %v1030, %v2932
        %v2934 = vmul.f32 %v2933, %v2933
        %v2935 = vsel %vm1000, %v2934, 0.0
        %2936 = vadd.xlane.f32.xlu0 %v2935
        %v2937 = vpop.xlane.xlu0 %2936
        %v2938 = vrcp.pop 31.0
        %v2939 = vmul.f32 31.0, %v2938
        %v2940 = vsub.f32 1.0, %v2939
        %v2941 = vmul.f32 %v2938, %v2940
        %v2942 = vadd.f32 %v2938, %v2941
        %vm2943 = vweird.f32 %v2938
        %v2944 = vsel %vm2943, %v2938, %v2942
        %v2945 = vmul.f32 %v2937, %v2944
        %v2946 = vrsqrt.pop %v2945
        %v2947 = vmul.f32 %v2946, %v2945
        %v2948 = vmul.f32 %v2947, %v2946
        %v2949 = vmul.f32 0.5, %v2948
        %v2950 = vsub.f32 1.5, %v2949
        %v2951 = vmul.f32 %v2946, %v2950
        %v2952 = vmul.f32 %v2945, %v2951
        %vm2953 = vcmp.eq.f32.partialorder %v2945, inf
        %v2954 = vsel %vm2953, %v2945, %v2952
        %vm2955 = vcmp.eq.f32.partialorder %v2945, 0.0
        %v2956 = vand.u32 %v2945, 2147483648
        %v2957 = vsel %vm2955, %v2956, %v2954
        %v2959 = vperm.slane %v993, 0
        %v2961 = vmul.f32 %v2959, %v2933
        %v2962 = vadd.f32 %v2957, 1e-06
        %v2963 = vrcp.pop %v2962
        %v2964 = vmul.f32 %v2962, %v2963
        %v2965 = vsub.f32 1.0, %v2964
        %v2966 = vmul.f32 %v2963, %v2965
        %v2967 = vadd.f32 %v2963, %v2966
        %vm2968 = vweird.f32 %v2962
        %vm2969 = vweird.f32 %v2963
        %vm2970 = vmor %vm2968, %vm2969
        %v2971 = vsel %vm2970, %v2963, %v2967
        %v2972 = vand.u32 2147483647, %v2962
        %vm2973 = vcmp.eq.f32.partialorder %v2972, 8.507059e+37
        %v2974 = vand.u32 %v2962, 2147483648
        %v2975 = vor.u32 1.1754944e-38, %v2974
        %v2976 = vsel %vm2973, %v2975, %v2971
        %v2977 = vmul.f32 %v2961, %v2976
        %v2979 = vperm.slane %v994, 0
        %v2981 = vadd.f32 %v2977, %v2979
        %2982 = vst.msk [vmem:[%s943] sm:$0xff] %vm1000, %v2981
        %s2983 = sand.u32 %s617, 1
        %s2984 = scalar_lea.sflag [#allocation4], %s2983
        %s2985 = sand.u32 %s617, 1
        %s2986 = smul.addr %s2985, 8
        %s2987 = scalar_lea.vmem [#allocation14], %s2986
        // Predicated region
        $region160: #{tpu_custom_call.1} parent=123 // pred_check
          %p2988 = pneg %p627
        $region161: #{tpu_custom_call.1} parent=123 // pred_check_branch
          %2990 = sbr.rel (%p2988) target = $region163
        $region162: #{tpu_custom_call.1} parent=123 // pred_region
          %2992 = vsyncadd %s2984, 0
          %s2993 = smul.addr %s48, 8
          %s2994 = scalar_lea.hbm %s26, %s2993
          %s2996 = sshll.u32 %s2987, 4
          %s2997 = int_to_ptr.vmem [resolvable:$true] %s2996
          %s2998 = sshll.u32 %s2994, 4
          %s2999 = int_to_ptr.hbm [resolvable:$true] %s2998
          %3001 = dma.vmem_to_hbm [thread:$0]  %s2997, 128, %s2999, %s2984
        $region163: #{tpu_custom_call.1} parent=123 // pred_fallthru
          _
      $region124: #{tpu_custom_call.1} parent=5 // pred_fallthru
        _
      %p3002 = scmp.le.s32.totalorder 2, %s43
      // Predicated region
      $region164: #{tpu_custom_call.1} parent=5 // pred_check
        %p3003 = pneg %p3002
      $region165: #{tpu_custom_call.1} parent=5 // pred_check_branch
        %3005 = sbr.rel (%p3003) target = $region167
      $region166: #{tpu_custom_call.1} parent=5 // pred_region
        %s3006 = ssub.s32 %s43, 2
        // Predicated region
        $region168: #{tpu_custom_call.1} parent=166 // pred_check
          %p3007 = pneg %p633
        $region169: #{tpu_custom_call.1} parent=166 // pred_check_branch
          %3009 = sbr.rel (%p3007) target = $region171
        $region170: #{tpu_custom_call.1} parent=166 // pred_region
          %s3010 = sand.u32 %s618, 1
          %s3011 = scalar_lea.sflag [#allocation4], %s3010
          %s3012 = sand.u32 %s618, 1
          %s3013 = smul.addr %s3012, 8
          %s3014 = scalar_lea.vmem [#allocation14], %s3013
          %3016 = dma.done %s3011, 128
        $region171: #{tpu_custom_call.1} parent=166 // pred_fallthru
          _
      $region167: #{tpu_custom_call.1} parent=5 // pred_fallthru
        _
    $region6: #{tpu_custom_call.1} parent=1 // loop_footer
      %s47 = sadd.s32 1, %s43
    $region7: #{tpu_custom_call.1} parent=1 // loop_footer_branch
      %42 = sbr.rel target = $region3
    $region8: #{tpu_custom_call.1} parent=1 // loop_exit
      _
    %3017 = vsyncpa [#allocation3], 1
    %s3018 = scalar_lea.sflag [#allocation3], 1
    %3019 = vsyncpa %s3018, 1
    %3020 = vsyncpa [#allocation6], 1
    %s3021 = scalar_lea.sflag [#allocation6], 1
    %3022 = vsyncpa %s3021, 1
    %3023 = vsyncpa [#allocation9], 1
    %3024 = vsyncpa [#allocation12], 1
    %3025 = vsyncpa [#allocation4], 1
    %s3026 = scalar_lea.sflag [#allocation4], 1
    %3027 = vsyncpa %s3026, 1

</llo_original>
